<compile_context>
chip_gen: v7x
topology: tpu7x:2x2x1
jax: 0.10.0
libtpu: 0.0.40
codegen_flags: <defaults>
</compile_context>

<pallas_src>
import math

import jax
import jax.numpy as jnp
from jax.experimental import pallas as pl
from jax.experimental.pallas import tpu as pltpu


# Flat-layout padding.  Max conv padding in this module is 2 (the 5x5 layer).
_MAX_CONV_PAD = 2
_PAD_R = 3            # pad rows top & bottom   (must be >= max_pad + 1)
_PAD_CL = 2           # pad cols on the left    (must be >= max_pad)
_MIN_PAD_CR = 2       # minimum pad cols right  (must be >= max_pad)

assert _PAD_R >= _MAX_CONV_PAD + 1
assert _PAD_CL >= _MAX_CONV_PAD and _MIN_PAD_CR >= _MAX_CONV_PAD


# ----------------------------------------------------------------------------
# Wrapper-side layout / weight helpers (tiny XLA ops, constant-folded weights)
# ----------------------------------------------------------------------------
def _choose_wp(h, w):
    """Smallest padded width >= w + left/right pads with (h * Wp) % 128 == 0."""
    wp_min = w + _PAD_CL + _MIN_PAD_CR
    step = 128 // math.gcd(h, 128)
    return ((wp_min + step - 1) // step) * step


def _flat_pad(x_nchw, wp, dtype=jnp.bfloat16):
    """(N, C, H, W) -> (N, C, (H+2*_PAD_R)*Wp), zero padded + cast."""
    n, c, h, w = x_nchw.shape
    pad_cr = wp - w - _PAD_CL
    xp = jnp.pad(x_nchw.astype(dtype),
                 ((0, 0), (0, 0), (_PAD_R, _PAD_R), (_PAD_CL, pad_cr)))
    return xp.reshape(n, c, (h + 2 * _PAD_R) * wp)


def _valid_col_mask(h, w, wp):
    """(1, H*Wp) f32 mask: 1 on real image columns, 0 on pad columns."""
    col = jnp.arange(h * wp, dtype=jnp.int32) % wp
    valid = (col >= _PAD_CL) & (col < _PAD_CL + w)
    return valid.astype(jnp.float32).reshape(1, h * wp)


def _stack_taps(weight):
    """PyTorch (Cout, Cin, kh, kw) -> (Cout, kh*kw*Cin) bf16, tap-major columns."""
    co, ci, kh, kw = weight.shape
    return (jnp.transpose(weight, (0, 2, 3, 1))
            .reshape(co, kh * kw * ci).astype(jnp.bfloat16))


def _bias_col(bias):
    return bias.reshape(-1, 1).astype(jnp.float32)


def _phase_stacked_w4(w4, r):
    """PixelShuffle(r) + 3x3 conv  ==  r^2 phase convolutions on the
    un-shuffled (Cin*r^2)-channel tensor.  Returns the concatenated phase
    weight (r^2*Cout, 9*Cin*r^2) bf16; row = (a*r+b)*Cout + co,
    column = tap*(Cin*r^2) + ci*r^2 + a2*r + b2 with tap = (si+1)*3 + (sj+1).
    """
    co, cin, kh, kw = w4.shape
    assert kh == 3 and kw == 3
    blocks = []
    for a in range(r):
        for b in range(r):
            pw = jnp.zeros((co, 3, 3, cin, r, r), jnp.float32)
            for dy in (-1, 0, 1):
                si, a2 = (a + dy) // r, (a + dy) % r
                for dx in (-1, 0, 1):
                    sj, b2 = (b + dx) // r, (b + dx) % r
                    pw = pw.at[:, si + 1, sj + 1, :, a2, b2].add(
                        w4[:, :, dy + 1, dx + 1])
            blocks.append(pw.reshape(co, 9 * cin * r * r))
    return jnp.concatenate(blocks, axis=0).astype(jnp.bfloat16)


# ----------------------------------------------------------------------------
# One fused pallas_call: conv5x5 -> conv3x3 -> conv3x3 -> phase-conv3x3
# (every layer = stacked-RHS build + a single MXU matmul + bias + ReLU)
# ----------------------------------------------------------------------------
def _fused_call(xp, w1, b1, w2, b2, w3, b3, w4p, b4p, mask, h, wp):
    n, cin, tflat = xp.shape
    hwp = h * wp                       # conv output window, multiple of 128
    q0 = _PAD_R * wp                   # flat offset of the first interior row
    assert hwp % 128 == 0
    c1, c2, c3, c4 = w1.shape[0], w2.shape[0], w3.shape[0], w4p.shape[0]
    k1, k2, k3, k4 = w1.shape[1], w2.shape[1], w3.shape[1], w4p.shape[1]
    assert k1 == 25 * cin and k2 == 9 * c1 and k3 == 9 * c2 and k4 == 9 * c3

    def kernel(xp_ref, w1_ref, b1_ref, w2_ref, b2_ref, w3_ref, b3_ref,
               w4_ref, b4_ref, mask_ref, y_ref,
               r1, r2, r3, r4, a1, a2, a3):
        mask_v = mask_ref[...]                                   # (1, hwp) f32

        # Zero only the top/bottom pad-row slabs of the persistent activation
        # scratches (interior is fully overwritten, masked, every step).
        for a_ref, c_rows in ((a1, c1), (a2, c2), (a3, c3)):
            a_ref[:, :q0] = jnp.zeros((c_rows, q0), jnp.bfloat16)
            a_ref[:, q0 + hwp:tflat] = jnp.zeros((c_rows, q0), jnp.bfloat16)

        def conv(src_ref, rhs_ref, w_ref, b_ref, k, c_in):
            """Build stacked RHS (k*k*c_in, hwp) from shifted slices, then one
            MXU matmul (Cout, k*k*c_in) @ (k*k*c_in, hwp) with f32 acc."""
            pad = (k - 1) // 2
            for t in range(k * k):
                di, dj = t // k, t % k
                start = q0 + (di - pad) * wp + (dj - pad)        # static offset
                rhs_ref[t * c_in:(t + 1) * c_in, :] = src_ref[:, start:start + hwp]
            acc = jnp.dot(w_ref[...], rhs_ref[...],
                          preferred_element_type=jnp.float32)
            return jnp.maximum(acc + b_ref[...], 0.0)            # (C, hwp) f32

        # feature_maps[0]: 5x5, Cin -> 2*Cin, pad 2, ReLU
        act = conv(xp_ref, r1, w1_ref, b1_ref, 5, cin)
        a1[:, q0:q0 + hwp] = (act * mask_v).astype(jnp.bfloat16)

        # feature_maps[1]: 3x3, 2*Cin -> Cin, pad 1, ReLU
        act = conv(a1, r2, w2_ref, b2_ref, 3, c1)
        a2[:, q0:q0 + hwp] = (act * mask_v).astype(jnp.bfloat16)

        # sub_pixel conv: 3x3, Cin -> Cin*r^2, pad 1, ReLU
        act = conv(a2, r3, w3_ref, b3_ref, 3, c2)
        a3[:, q0:q0 + hwp] = (act * mask_v).astype(jnp.bfloat16)

        # PixelShuffle + conv_subpix_out fused as r^2 phase convolutions.
        # Pad columns of y_ref carry unmasked garbage; cropped wrapper-side.
        act = conv(a3, r4, w4_ref, b4_ref, 3, c3)
        y_ref[...] = act.astype(y_ref.dtype)

    return pl.pallas_call(
        kernel,
        out_shape=jax.ShapeDtypeStruct((n, c4, hwp), jnp.float32),
        grid=(n,),
        in_specs=[
            pl.BlockSpec((None, cin, tflat), lambda b: (b, 0, 0)),
            pl.BlockSpec((c1, k1), lambda b: (0, 0)),
            pl.BlockSpec((c1, 1), lambda b: (0, 0)),
            pl.BlockSpec((c2, k2), lambda b: (0, 0)),
            pl.BlockSpec((c2, 1), lambda b: (0, 0)),
            pl.BlockSpec((c3, k3), lambda b: (0, 0)),
            pl.BlockSpec((c3, 1), lambda b: (0, 0)),
            pl.BlockSpec((c4, k4), lambda b: (0, 0)),
            pl.BlockSpec((c4, 1), lambda b: (0, 0)),
            pl.BlockSpec((1, hwp), lambda b: (0, 0)),
        ],
        out_specs=pl.BlockSpec((None, c4, hwp), lambda b: (b, 0, 0)),
        scratch_shapes=[
            pltpu.VMEM((k1, hwp), jnp.bfloat16),     # stacked RHS, conv1
            pltpu.VMEM((k2, hwp), jnp.bfloat16),     # stacked RHS, conv2
            pltpu.VMEM((k3, hwp), jnp.bfloat16),     # stacked RHS, conv3
            pltpu.VMEM((k4, hwp), jnp.bfloat16),     # stacked RHS, conv4
            pltpu.VMEM((c1, tflat), jnp.bfloat16),   # act1 (padded flat)
            pltpu.VMEM((c2, tflat), jnp.bfloat16),   # act2 (padded flat)
            pltpu.VMEM((c3, tflat), jnp.bfloat16),   # act3 (padded flat)
        ],
        compiler_params=pltpu.CompilerParams(
            dimension_semantics=("parallel",)),
    )(xp, w1, b1, w2, b2, w3, b3, w4p, b4p, mask)


# ----------------------------------------------------------------------------
# Sub_Pixel_Conv forward (NCHW in, NCHW out -- PyTorch semantics)
# ----------------------------------------------------------------------------
def sub_pixel_conv_forward(x_nchw, params, scale_factor, skip=None):
    n, cin, h, w = x_nchw.shape
    r = scale_factor
    cout = params["out_w"].shape[0]

    wp = _choose_wp(h, w)                               # H*Wp % 128 == 0
    xp = _flat_pad(x_nchw, wp)                          # (N, Cin, (H+6)*Wp) bf16
    mask = _valid_col_mask(h, w, wp)

    y = _fused_call(
        xp,
        _stack_taps(params["fm0_w"]), _bias_col(params["fm0_b"]),
        _stack_taps(params["fm1_w"]), _bias_col(params["fm1_b"]),
        _stack_taps(params["sp_w"]), _bias_col(params["sp_b"]),
        _phase_stacked_w4(params["out_w"], r),
        _bias_col(jnp.tile(params["out_b"], (r * r,))),
        mask, h, wp)                                    # (N, r^2*Cout, H*Wp) f32

    # Crop pad columns and interleave the r^2 phases (inverse pixel shuffle of
    # the OUTPUT): (n, a, b, co, i, j) -> (n, co, i*r+a, j*r+b)
    y = y.reshape(n, r, r, cout, h, wp)[:, :, :, :, :, _PAD_CL:_PAD_CL + w]
    out = jnp.transpose(y, (0, 3, 4, 1, 5, 2)).reshape(n, cout, h * r, w * r)

    if skip is not None:
        out = jnp.concatenate([out, skip], axis=1)      # torch.cat(dim=1)
    return out


# ----------------------------------------------------------------------------
# Pure-JAX reference (same bf16-operand / f32-accumulation quantisation)
# ----------------------------------------------------------------------------
def _pixel_shuffle_nchw(x, r):
    n, crr, h, w = x.shape
    c = crr // (r * r)
    x = x.reshape(n, c, r, r, h, w)
    x = jnp.transpose(x, (0, 1, 4, 2, 5, 3))
    return x.reshape(n, c, h * r, w * r)


def _conv_relu_ref(x_bf16, weight, bias, pad):
    y = jax.lax.conv_general_dilated(
        x_bf16, weight.astype(jnp.bfloat16), window_strides=(1, 1),
        padding=((pad, pad), (pad, pad)),
        dimension_numbers=("NCHW", "OIHW", "NCHW"),
        preferred_element_type=jnp.float32)
    return jnp.maximum(y + bias.reshape(1, -1, 1, 1), 0.0)


def sub_pixel_conv_reference(x_nchw, params, scale_factor):
    a = _conv_relu_ref(x_nchw.astype(jnp.bfloat16), params["fm0_w"], params["fm0_b"], 2)
    a = _conv_relu_ref(a.astype(jnp.bfloat16), params["fm1_w"], params["fm1_b"], 1)
    a = _conv_relu_ref(a.astype(jnp.bfloat16), params["sp_w"], params["sp_b"], 1)
    a = _pixel_shuffle_nchw(a.astype(jnp.bfloat16), scale_factor)
    return _conv_relu_ref(a, params["out_w"], params["out_b"], 1)


# ----------------------------------------------------------------------------
# Synthetic parameters (deterministic, PyTorch-shaped)
# ----------------------------------------------------------------------------
def init_params(key, in_channels, out_channels, scale_factor):
    ks = jax.random.split(key, 8)

    def conv_params(kw_key, kb_key, cout, cin, k):
        fan_in = cin * k * k
        std = 1.0 / jnp.sqrt(fan_in)
        w = jax.random.normal(kw_key, (cout, cin, k, k), jnp.float32) * std
        b = jax.random.normal(kb_key, (cout,), jnp.float32) * std
        return w, b

    c, r = in_channels, scale_factor
    params = {}
    params["fm0_w"], params["fm0_b"] = conv_params(ks[0], ks[1], 2 * c, c, 5)
    params["fm1_w"], params["fm1_b"] = conv_params(ks[2], ks[3], c, 2 * c, 3)
    params["sp_w"], params["sp_b"] = conv_params(ks[4], ks[5], c * r * r, c, 3)
    params["out_w"], params["out_b"] = conv_params(ks[6], ks[7], out_channels, c, 3)
    return params


if __name__ == "__main__":
    key = jax.random.PRNGKey(0)
    k_x, k_p = jax.random.split(key)

    batch, in_channels, out_channels, spatial, scale = 2, 4, 4, 16, 2
    x = jax.random.normal(k_x, (batch, in_channels, spatial, spatial), jnp.float32)
    params = init_params(k_p, in_channels, out_channels, scale)

    fwd = jax.jit(lambda xx: sub_pixel_conv_forward(xx, params, scale))
    out = jax.block_until_ready(fwd(x))

    expected_shape = (batch, out_channels, spatial * scale, spatial * scale)
    assert out.shape == expected_shape, (out.shape, expected_shape)
    assert bool(jnp.all(jnp.isfinite(out)))

    ref = jax.block_until_ready(sub_pixel_conv_reference(x, params, scale))
    max_err = float(jnp.max(jnp.abs(out - ref)))
    assert max_err < 2e-2, max_err

    print("KERNEL_OK")
</pallas_src>

<mosaic_0001>
module attributes {stable_mosaic.version = 11 : i64} {
  func.func @kernel(%arg0: i32, %arg1: memref<1x4x528xbf16, #tpu.memory_space<vmem>>, %arg2: memref<8x100xbf16, #tpu.memory_space<vmem>>, %arg3: memref<8x1xf32, #tpu.memory_space<vmem>>, %arg4: memref<4x72xbf16, #tpu.memory_space<vmem>>, %arg5: memref<4x1xf32, #tpu.memory_space<vmem>>, %arg6: memref<16x36xbf16, #tpu.memory_space<vmem>>, %arg7: memref<16x1xf32, #tpu.memory_space<vmem>>, %arg8: memref<16x144xbf16, #tpu.memory_space<vmem>>, %arg9: memref<16x1xf32, #tpu.memory_space<vmem>>, %arg10: memref<1x384xf32, #tpu.memory_space<vmem>>, %arg11: memref<1x16x384xf32, #tpu.memory_space<vmem>>, %arg12: memref<100x384xbf16, #tpu.memory_space<vmem>>, %arg13: memref<72x384xbf16, #tpu.memory_space<vmem>>, %arg14: memref<36x384xbf16, #tpu.memory_space<vmem>>, %arg15: memref<144x384xbf16, #tpu.memory_space<vmem>>, %arg16: memref<8x528xbf16, #tpu.memory_space<vmem>>, %arg17: memref<4x528xbf16, #tpu.memory_space<vmem>>, %arg18: memref<16x528xbf16, #tpu.memory_space<vmem>>) attributes {dimension_semantics = [#tpu.dimension_semantics<parallel>], iteration_bounds = array<i64: 2>, scalar_prefetch = 0 : i64, scratch_operands = 7 : i64, tpu.core_type = #tpu.core_type<tc>, window_params = [{transform_indices = @transform_0, window_bounds = array<i64: 1, 4, 528>}, {pipeline_mode = #tpu.pipeline_mode<synchronous>, transform_indices = @transform_1, window_bounds = array<i64: 8, 100>}, {pipeline_mode = #tpu.pipeline_mode<synchronous>, transform_indices = @transform_2, window_bounds = array<i64: 8, 1>}, {pipeline_mode = #tpu.pipeline_mode<synchronous>, transform_indices = @transform_3, window_bounds = array<i64: 4, 72>}, {pipeline_mode = #tpu.pipeline_mode<synchronous>, transform_indices = @transform_4, window_bounds = array<i64: 4, 1>}, {pipeline_mode = #tpu.pipeline_mode<synchronous>, transform_indices = @transform_5, window_bounds = array<i64: 16, 36>}, {pipeline_mode = #tpu.pipeline_mode<synchronous>, transform_indices = @transform_6, window_bounds = array<i64: 16, 1>}, {pipeline_mode = #tpu.pipeline_mode<synchronous>, transform_indices = @transform_7, window_bounds = array<i64: 16, 144>}, {pipeline_mode = #tpu.pipeline_mode<synchronous>, transform_indices = @transform_8, window_bounds = array<i64: 16, 1>}, {pipeline_mode = #tpu.pipeline_mode<synchronous>, transform_indices = @transform_9, window_bounds = array<i64: 1, 384>}, {transform_indices = @transform_10, window_bounds = array<i64: 1, 16, 384>}]} {
    %c0 = arith.constant 0 : index
    %c0_0 = arith.constant 0 : index
    %0 = vector.load %arg10[%c0, %c0_0] : memref<1x384xf32, #tpu.memory_space<vmem>>, vector<1x384xf32>
    %cst = arith.constant 0.000000e+00 : bf16
    %1 = vector.broadcast %cst : bf16 to vector<8x72xbf16>
    %c0_1 = arith.constant 0 : index
    %c0_2 = arith.constant 0 : index
    %2 = vector.load %arg16[%c0_1, %c0_2] : memref<8x528xbf16, #tpu.memory_space<vmem>>, vector<8x72xbf16>
    tpu.vector_store %arg16[%c0_1, %c0_2], %1 {strides = array<i32>} : memref<8x528xbf16, #tpu.memory_space<vmem>>, vector<8x72xbf16>,
    %cst_3 = arith.constant 0.000000e+00 : bf16
    %3 = vector.broadcast %cst_3 : bf16 to vector<8x72xbf16>
    %c0_4 = arith.constant 0 : index
    %c456 = arith.constant 456 : index
    %4 = vector.load %arg16[%c0_4, %c456] : memref<8x528xbf16, #tpu.memory_space<vmem>>, vector<8x72xbf16>
    tpu.vector_store %arg16[%c0_4, %c456], %3 {strides = array<i32>} : memref<8x528xbf16, #tpu.memory_space<vmem>>, vector<8x72xbf16>,
    %cst_5 = arith.constant 0.000000e+00 : bf16
    %5 = vector.broadcast %cst_5 : bf16 to vector<4x72xbf16>
    %c0_6 = arith.constant 0 : index
    %c0_7 = arith.constant 0 : index
    %6 = vector.load %arg17[%c0_6, %c0_7] : memref<4x528xbf16, #tpu.memory_space<vmem>>, vector<4x72xbf16>
    tpu.vector_store %arg17[%c0_6, %c0_7], %5 {strides = array<i32>} : memref<4x528xbf16, #tpu.memory_space<vmem>>, vector<4x72xbf16>,
    %cst_8 = arith.constant 0.000000e+00 : bf16
    %7 = vector.broadcast %cst_8 : bf16 to vector<4x72xbf16>
    %c0_9 = arith.constant 0 : index
    %c456_10 = arith.constant 456 : index
    %8 = vector.load %arg17[%c0_9, %c456_10] : memref<4x528xbf16, #tpu.memory_space<vmem>>, vector<4x72xbf16>
    tpu.vector_store %arg17[%c0_9, %c456_10], %7 {strides = array<i32>} : memref<4x528xbf16, #tpu.memory_space<vmem>>, vector<4x72xbf16>,
    %cst_11 = arith.constant 0.000000e+00 : bf16
    %9 = vector.broadcast %cst_11 : bf16 to vector<16x72xbf16>
    %c0_12 = arith.constant 0 : index
    %c0_13 = arith.constant 0 : index
    %10 = vector.load %arg18[%c0_12, %c0_13] : memref<16x528xbf16, #tpu.memory_space<vmem>>, vector<16x72xbf16>
    tpu.vector_store %arg18[%c0_12, %c0_13], %9 {strides = array<i32>} : memref<16x528xbf16, #tpu.memory_space<vmem>>, vector<16x72xbf16>,
    %cst_14 = arith.constant 0.000000e+00 : bf16
    %11 = vector.broadcast %cst_14 : bf16 to vector<16x72xbf16>
    %c0_15 = arith.constant 0 : index
    %c456_16 = arith.constant 456 : index
    %12 = vector.load %arg18[%c0_15, %c456_16] : memref<16x528xbf16, #tpu.memory_space<vmem>>, vector<16x72xbf16>
    tpu.vector_store %arg18[%c0_15, %c456_16], %11 {strides = array<i32>} : memref<16x528xbf16, #tpu.memory_space<vmem>>, vector<16x72xbf16>,
    %c0_17 = arith.constant 0 : index
    %c0_18 = arith.constant 0 : index
    %c22 = arith.constant 22 : index
    %13 = vector.load %arg1[%c0_17, %c0_18, %c22] : memref<1x4x528xbf16, #tpu.memory_space<vmem>>, vector<1x4x384xbf16>
    %14 = vector.shape_cast %13 : vector<1x4x384xbf16> to vector<4x384xbf16>
    %c0_19 = arith.constant 0 : index
    %c0_20 = arith.constant 0 : index
    %15 = vector.load %arg12[%c0_19, %c0_20] : memref<100x384xbf16, #tpu.memory_space<vmem>>, vector<4x384xbf16>
    tpu.vector_store %arg12[%c0_19, %c0_20], %14 {strides = array<i32>} : memref<100x384xbf16, #tpu.memory_space<vmem>>, vector<4x384xbf16>,
    %c0_21 = arith.constant 0 : index
    %c0_22 = arith.constant 0 : index
    %c23 = arith.constant 23 : index
    %16 = vector.load %arg1[%c0_21, %c0_22, %c23] : memref<1x4x528xbf16, #tpu.memory_space<vmem>>, vector<1x4x384xbf16>
    %17 = vector.shape_cast %16 : vector<1x4x384xbf16> to vector<4x384xbf16>
    %c4 = arith.constant 4 : index
    %c0_23 = arith.constant 0 : index
    %18 = vector.load %arg12[%c4, %c0_23] : memref<100x384xbf16, #tpu.memory_space<vmem>>, vector<4x384xbf16>
    tpu.vector_store %arg12[%c4, %c0_23], %17 {strides = array<i32>} : memref<100x384xbf16, #tpu.memory_space<vmem>>, vector<4x384xbf16>,
    %c0_24 = arith.constant 0 : index
    %c0_25 = arith.constant 0 : index
    %c24 = arith.constant 24 : index
    %19 = vector.load %arg1[%c0_24, %c0_25, %c24] : memref<1x4x528xbf16, #tpu.memory_space<vmem>>, vector<1x4x384xbf16>
    %20 = vector.shape_cast %19 : vector<1x4x384xbf16> to vector<4x384xbf16>
    %c8 = arith.constant 8 : index
    %c0_26 = arith.constant 0 : index
    %21 = vector.load %arg12[%c8, %c0_26] : memref<100x384xbf16, #tpu.memory_space<vmem>>, vector<4x384xbf16>
    tpu.vector_store %arg12[%c8, %c0_26], %20 {strides = array<i32>} : memref<100x384xbf16, #tpu.memory_space<vmem>>, vector<4x384xbf16>,
    %c0_27 = arith.constant 0 : index
    %c0_28 = arith.constant 0 : index
    %c25 = arith.constant 25 : index
    %22 = vector.load %arg1[%c0_27, %c0_28, %c25] : memref<1x4x528xbf16, #tpu.memory_space<vmem>>, vector<1x4x384xbf16>
    %23 = vector.shape_cast %22 : vector<1x4x384xbf16> to vector<4x384xbf16>
    %c12 = arith.constant 12 : index
    %c0_29 = arith.constant 0 : index
    %24 = vector.load %arg12[%c12, %c0_29] : memref<100x384xbf16, #tpu.memory_space<vmem>>, vector<4x384xbf16>
    tpu.vector_store %arg12[%c12, %c0_29], %23 {strides = array<i32>} : memref<100x384xbf16, #tpu.memory_space<vmem>>, vector<4x384xbf16>,
    %c0_30 = arith.constant 0 : index
    %c0_31 = arith.constant 0 : index
    %c26 = arith.constant 26 : index
    %25 = vector.load %arg1[%c0_30, %c0_31, %c26] : memref<1x4x528xbf16, #tpu.memory_space<vmem>>, vector<1x4x384xbf16>
    %26 = vector.shape_cast %25 : vector<1x4x384xbf16> to vector<4x384xbf16>
    %c16 = arith.constant 16 : index
    %c0_32 = arith.constant 0 : index
    %27 = vector.load %arg12[%c16, %c0_32] : memref<100x384xbf16, #tpu.memory_space<vmem>>, vector<4x384xbf16>
    tpu.vector_store %arg12[%c16, %c0_32], %26 {strides = array<i32>} : memref<100x384xbf16, #tpu.memory_space<vmem>>, vector<4x384xbf16>,
    %c0_33 = arith.constant 0 : index
    %c0_34 = arith.constant 0 : index
    %c46 = arith.constant 46 : index
    %28 = vector.load %arg1[%c0_33, %c0_34, %c46] : memref<1x4x528xbf16, #tpu.memory_space<vmem>>, vector<1x4x384xbf16>
    %29 = vector.shape_cast %28 : vector<1x4x384xbf16> to vector<4x384xbf16>
    %c20 = arith.constant 20 : index
    %c0_35 = arith.constant 0 : index
    %30 = vector.load %arg12[%c20, %c0_35] : memref<100x384xbf16, #tpu.memory_space<vmem>>, vector<4x384xbf16>
    tpu.vector_store %arg12[%c20, %c0_35], %29 {strides = array<i32>} : memref<100x384xbf16, #tpu.memory_space<vmem>>, vector<4x384xbf16>,
    %c0_36 = arith.constant 0 : index
    %c0_37 = arith.constant 0 : index
    %c47 = arith.constant 47 : index
    %31 = vector.load %arg1[%c0_36, %c0_37, %c47] : memref<1x4x528xbf16, #tpu.memory_space<vmem>>, vector<1x4x384xbf16>
    %32 = vector.shape_cast %31 : vector<1x4x384xbf16> to vector<4x384xbf16>
    %c24_38 = arith.constant 24 : index
    %c0_39 = arith.constant 0 : index
    %33 = vector.load %arg12[%c24_38, %c0_39] : memref<100x384xbf16, #tpu.memory_space<vmem>>, vector<4x384xbf16>
    tpu.vector_store %arg12[%c24_38, %c0_39], %32 {strides = array<i32>} : memref<100x384xbf16, #tpu.memory_space<vmem>>, vector<4x384xbf16>,
    %c0_40 = arith.constant 0 : index
    %c0_41 = arith.constant 0 : index
    %c48 = arith.constant 48 : index
    %34 = vector.load %arg1[%c0_40, %c0_41, %c48] : memref<1x4x528xbf16, #tpu.memory_space<vmem>>, vector<1x4x384xbf16>
    %35 = vector.shape_cast %34 : vector<1x4x384xbf16> to vector<4x384xbf16>
    %c28 = arith.constant 28 : index
    %c0_42 = arith.constant 0 : index
    %36 = vector.load %arg12[%c28, %c0_42] : memref<100x384xbf16, #tpu.memory_space<vmem>>, vector<4x384xbf16>
    tpu.vector_store %arg12[%c28, %c0_42], %35 {strides = array<i32>} : memref<100x384xbf16, #tpu.memory_space<vmem>>, vector<4x384xbf16>,
    %c0_43 = arith.constant 0 : index
    %c0_44 = arith.constant 0 : index
    %c49 = arith.constant 49 : index
    %37 = vector.load %arg1[%c0_43, %c0_44, %c49] : memref<1x4x528xbf16, #tpu.memory_space<vmem>>, vector<1x4x384xbf16>
    %38 = vector.shape_cast %37 : vector<1x4x384xbf16> to vector<4x384xbf16>
    %c32 = arith.constant 32 : index
    %c0_45 = arith.constant 0 : index
    %39 = vector.load %arg12[%c32, %c0_45] : memref<100x384xbf16, #tpu.memory_space<vmem>>, vector<4x384xbf16>
    tpu.vector_store %arg12[%c32, %c0_45], %38 {strides = array<i32>} : memref<100x384xbf16, #tpu.memory_space<vmem>>, vector<4x384xbf16>,
    %c0_46 = arith.constant 0 : index
    %c0_47 = arith.constant 0 : index
    %c50 = arith.constant 50 : index
    %40 = vector.load %arg1[%c0_46, %c0_47, %c50] : memref<1x4x528xbf16, #tpu.memory_space<vmem>>, vector<1x4x384xbf16>
    %41 = vector.shape_cast %40 : vector<1x4x384xbf16> to vector<4x384xbf16>
    %c36 = arith.constant 36 : index
    %c0_48 = arith.constant 0 : index
    %42 = vector.load %arg12[%c36, %c0_48] : memref<100x384xbf16, #tpu.memory_space<vmem>>, vector<4x384xbf16>
    tpu.vector_store %arg12[%c36, %c0_48], %41 {strides = array<i32>} : memref<100x384xbf16, #tpu.memory_space<vmem>>, vector<4x384xbf16>,
    %c0_49 = arith.constant 0 : index
    %c0_50 = arith.constant 0 : index
    %c70 = arith.constant 70 : index
    %43 = vector.load %arg1[%c0_49, %c0_50, %c70] : memref<1x4x528xbf16, #tpu.memory_space<vmem>>, vector<1x4x384xbf16>
    %44 = vector.shape_cast %43 : vector<1x4x384xbf16> to vector<4x384xbf16>
    %c40 = arith.constant 40 : index
    %c0_51 = arith.constant 0 : index
    %45 = vector.load %arg12[%c40, %c0_51] : memref<100x384xbf16, #tpu.memory_space<vmem>>, vector<4x384xbf16>
    tpu.vector_store %arg12[%c40, %c0_51], %44 {strides = array<i32>} : memref<100x384xbf16, #tpu.memory_space<vmem>>, vector<4x384xbf16>,
    %c0_52 = arith.constant 0 : index
    %c0_53 = arith.constant 0 : index
    %c71 = arith.constant 71 : index
    %46 = vector.load %arg1[%c0_52, %c0_53, %c71] : memref<1x4x528xbf16, #tpu.memory_space<vmem>>, vector<1x4x384xbf16>
    %47 = vector.shape_cast %46 : vector<1x4x384xbf16> to vector<4x384xbf16>
    %c44 = arith.constant 44 : index
    %c0_54 = arith.constant 0 : index
    %48 = vector.load %arg12[%c44, %c0_54] : memref<100x384xbf16, #tpu.memory_space<vmem>>, vector<4x384xbf16>
    tpu.vector_store %arg12[%c44, %c0_54], %47 {strides = array<i32>} : memref<100x384xbf16, #tpu.memory_space<vmem>>, vector<4x384xbf16>,
    %c0_55 = arith.constant 0 : index
    %c0_56 = arith.constant 0 : index
    %c72 = arith.constant 72 : index
    %49 = vector.load %arg1[%c0_55, %c0_56, %c72] : memref<1x4x528xbf16, #tpu.memory_space<vmem>>, vector<1x4x384xbf16>
    %50 = vector.shape_cast %49 : vector<1x4x384xbf16> to vector<4x384xbf16>
    %c48_57 = arith.constant 48 : index
    %c0_58 = arith.constant 0 : index
    %51 = vector.load %arg12[%c48_57, %c0_58] : memref<100x384xbf16, #tpu.memory_space<vmem>>, vector<4x384xbf16>
    tpu.vector_store %arg12[%c48_57, %c0_58], %50 {strides = array<i32>} : memref<100x384xbf16, #tpu.memory_space<vmem>>, vector<4x384xbf16>,
    %c0_59 = arith.constant 0 : index
    %c0_60 = arith.constant 0 : index
    %c73 = arith.constant 73 : index
    %52 = vector.load %arg1[%c0_59, %c0_60, %c73] : memref<1x4x528xbf16, #tpu.memory_space<vmem>>, vector<1x4x384xbf16>
    %53 = vector.shape_cast %52 : vector<1x4x384xbf16> to vector<4x384xbf16>
    %c52 = arith.constant 52 : index
    %c0_61 = arith.constant 0 : index
    %54 = vector.load %arg12[%c52, %c0_61] : memref<100x384xbf16, #tpu.memory_space<vmem>>, vector<4x384xbf16>
    tpu.vector_store %arg12[%c52, %c0_61], %53 {strides = array<i32>} : memref<100x384xbf16, #tpu.memory_space<vmem>>, vector<4x384xbf16>,
    %c0_62 = arith.constant 0 : index
    %c0_63 = arith.constant 0 : index
    %c74 = arith.constant 74 : index
    %55 = vector.load %arg1[%c0_62, %c0_63, %c74] : memref<1x4x528xbf16, #tpu.memory_space<vmem>>, vector<1x4x384xbf16>
    %56 = vector.shape_cast %55 : vector<1x4x384xbf16> to vector<4x384xbf16>
    %c56 = arith.constant 56 : index
    %c0_64 = arith.constant 0 : index
    %57 = vector.load %arg12[%c56, %c0_64] : memref<100x384xbf16, #tpu.memory_space<vmem>>, vector<4x384xbf16>
    tpu.vector_store %arg12[%c56, %c0_64], %56 {strides = array<i32>} : memref<100x384xbf16, #tpu.memory_space<vmem>>, vector<4x384xbf16>,
    %c0_65 = arith.constant 0 : index
    %c0_66 = arith.constant 0 : index
    %c94 = arith.constant 94 : index
    %58 = vector.load %arg1[%c0_65, %c0_66, %c94] : memref<1x4x528xbf16, #tpu.memory_space<vmem>>, vector<1x4x384xbf16>
    %59 = vector.shape_cast %58 : vector<1x4x384xbf16> to vector<4x384xbf16>
    %c60 = arith.constant 60 : index
    %c0_67 = arith.constant 0 : index
    %60 = vector.load %arg12[%c60, %c0_67] : memref<100x384xbf16, #tpu.memory_space<vmem>>, vector<4x384xbf16>
    tpu.vector_store %arg12[%c60, %c0_67], %59 {strides = array<i32>} : memref<100x384xbf16, #tpu.memory_space<vmem>>, vector<4x384xbf16>,
    %c0_68 = arith.constant 0 : index
    %c0_69 = arith.constant 0 : index
    %c95 = arith.constant 95 : index
    %61 = vector.load %arg1[%c0_68, %c0_69, %c95] : memref<1x4x528xbf16, #tpu.memory_space<vmem>>, vector<1x4x384xbf16>
    %62 = vector.shape_cast %61 : vector<1x4x384xbf16> to vector<4x384xbf16>
    %c64 = arith.constant 64 : index
    %c0_70 = arith.constant 0 : index
    %63 = vector.load %arg12[%c64, %c0_70] : memref<100x384xbf16, #tpu.memory_space<vmem>>, vector<4x384xbf16>
    tpu.vector_store %arg12[%c64, %c0_70], %62 {strides = array<i32>} : memref<100x384xbf16, #tpu.memory_space<vmem>>, vector<4x384xbf16>,
    %c0_71 = arith.constant 0 : index
    %c0_72 = arith.constant 0 : index
    %c96 = arith.constant 96 : index
    %64 = vector.load %arg1[%c0_71, %c0_72, %c96] : memref<1x4x528xbf16, #tpu.memory_space<vmem>>, vector<1x4x384xbf16>
    %65 = vector.shape_cast %64 : vector<1x4x384xbf16> to vector<4x384xbf16>
    %c68 = arith.constant 68 : index
    %c0_73 = arith.constant 0 : index
    %66 = vector.load %arg12[%c68, %c0_73] : memref<100x384xbf16, #tpu.memory_space<vmem>>, vector<4x384xbf16>
    tpu.vector_store %arg12[%c68, %c0_73], %65 {strides = array<i32>} : memref<100x384xbf16, #tpu.memory_space<vmem>>, vector<4x384xbf16>,
    %c0_74 = arith.constant 0 : index
    %c0_75 = arith.constant 0 : index
    %c97 = arith.constant 97 : index
    %67 = vector.load %arg1[%c0_74, %c0_75, %c97] : memref<1x4x528xbf16, #tpu.memory_space<vmem>>, vector<1x4x384xbf16>
    %68 = vector.shape_cast %67 : vector<1x4x384xbf16> to vector<4x384xbf16>
    %c72_76 = arith.constant 72 : index
    %c0_77 = arith.constant 0 : index
    %69 = vector.load %arg12[%c72_76, %c0_77] : memref<100x384xbf16, #tpu.memory_space<vmem>>, vector<4x384xbf16>
    tpu.vector_store %arg12[%c72_76, %c0_77], %68 {strides = array<i32>} : memref<100x384xbf16, #tpu.memory_space<vmem>>, vector<4x384xbf16>,
    %c0_78 = arith.constant 0 : index
    %c0_79 = arith.constant 0 : index
    %c98 = arith.constant 98 : index
    %70 = vector.load %arg1[%c0_78, %c0_79, %c98] : memref<1x4x528xbf16, #tpu.memory_space<vmem>>, vector<1x4x384xbf16>
    %71 = vector.shape_cast %70 : vector<1x4x384xbf16> to vector<4x384xbf16>
    %c76 = arith.constant 76 : index
    %c0_80 = arith.constant 0 : index
    %72 = vector.load %arg12[%c76, %c0_80] : memref<100x384xbf16, #tpu.memory_space<vmem>>, vector<4x384xbf16>
    tpu.vector_store %arg12[%c76, %c0_80], %71 {strides = array<i32>} : memref<100x384xbf16, #tpu.memory_space<vmem>>, vector<4x384xbf16>,
    %c0_81 = arith.constant 0 : index
    %c0_82 = arith.constant 0 : index
    %c118 = arith.constant 118 : index
    %73 = vector.load %arg1[%c0_81, %c0_82, %c118] : memref<1x4x528xbf16, #tpu.memory_space<vmem>>, vector<1x4x384xbf16>
    %74 = vector.shape_cast %73 : vector<1x4x384xbf16> to vector<4x384xbf16>
    %c80 = arith.constant 80 : index
    %c0_83 = arith.constant 0 : index
    %75 = vector.load %arg12[%c80, %c0_83] : memref<100x384xbf16, #tpu.memory_space<vmem>>, vector<4x384xbf16>
    tpu.vector_store %arg12[%c80, %c0_83], %74 {strides = array<i32>} : memref<100x384xbf16, #tpu.memory_space<vmem>>, vector<4x384xbf16>,
    %c0_84 = arith.constant 0 : index
    %c0_85 = arith.constant 0 : index
    %c119 = arith.constant 119 : index
    %76 = vector.load %arg1[%c0_84, %c0_85, %c119] : memref<1x4x528xbf16, #tpu.memory_space<vmem>>, vector<1x4x384xbf16>
    %77 = vector.shape_cast %76 : vector<1x4x384xbf16> to vector<4x384xbf16>
    %c84 = arith.constant 84 : index
    %c0_86 = arith.constant 0 : index
    %78 = vector.load %arg12[%c84, %c0_86] : memref<100x384xbf16, #tpu.memory_space<vmem>>, vector<4x384xbf16>
    tpu.vector_store %arg12[%c84, %c0_86], %77 {strides = array<i32>} : memref<100x384xbf16, #tpu.memory_space<vmem>>, vector<4x384xbf16>,
    %c0_87 = arith.constant 0 : index
    %c0_88 = arith.constant 0 : index
    %c120 = arith.constant 120 : index
    %79 = vector.load %arg1[%c0_87, %c0_88, %c120] : memref<1x4x528xbf16, #tpu.memory_space<vmem>>, vector<1x4x384xbf16>
    %80 = vector.shape_cast %79 : vector<1x4x384xbf16> to vector<4x384xbf16>
    %c88 = arith.constant 88 : index
    %c0_89 = arith.constant 0 : index
    %81 = vector.load %arg12[%c88, %c0_89] : memref<100x384xbf16, #tpu.memory_space<vmem>>, vector<4x384xbf16>
    tpu.vector_store %arg12[%c88, %c0_89], %80 {strides = array<i32>} : memref<100x384xbf16, #tpu.memory_space<vmem>>, vector<4x384xbf16>,
    %c0_90 = arith.constant 0 : index
    %c0_91 = arith.constant 0 : index
    %c121 = arith.constant 121 : index
    %82 = vector.load %arg1[%c0_90, %c0_91, %c121] : memref<1x4x528xbf16, #tpu.memory_space<vmem>>, vector<1x4x384xbf16>
    %83 = vector.shape_cast %82 : vector<1x4x384xbf16> to vector<4x384xbf16>
    %c92 = arith.constant 92 : index
    %c0_92 = arith.constant 0 : index
    %84 = vector.load %arg12[%c92, %c0_92] : memref<100x384xbf16, #tpu.memory_space<vmem>>, vector<4x384xbf16>
    tpu.vector_store %arg12[%c92, %c0_92], %83 {strides = array<i32>} : memref<100x384xbf16, #tpu.memory_space<vmem>>, vector<4x384xbf16>,
    %c0_93 = arith.constant 0 : index
    %c0_94 = arith.constant 0 : index
    %c122 = arith.constant 122 : index
    %85 = vector.load %arg1[%c0_93, %c0_94, %c122] : memref<1x4x528xbf16, #tpu.memory_space<vmem>>, vector<1x4x384xbf16>
    %86 = vector.shape_cast %85 : vector<1x4x384xbf16> to vector<4x384xbf16>
    %c96_95 = arith.constant 96 : index
    %c0_96 = arith.constant 0 : index
    %87 = vector.load %arg12[%c96_95, %c0_96] : memref<100x384xbf16, #tpu.memory_space<vmem>>, vector<4x384xbf16>
    tpu.vector_store %arg12[%c96_95, %c0_96], %86 {strides = array<i32>} : memref<100x384xbf16, #tpu.memory_space<vmem>>, vector<4x384xbf16>,
    %c0_97 = arith.constant 0 : index
    %c0_98 = arith.constant 0 : index
    %88 = vector.load %arg2[%c0_97, %c0_98] : memref<8x100xbf16, #tpu.memory_space<vmem>>, vector<8x100xbf16>
    %c0_99 = arith.constant 0 : index
    %c0_100 = arith.constant 0 : index
    %89 = vector.load %arg12[%c0_99, %c0_100] : memref<100x384xbf16, #tpu.memory_space<vmem>>, vector<100x384xbf16>
    %cst_101 = arith.constant dense<0.000000e+00> : vector<8x384xf32>
    %90 = tpu.matmul %88, %89, %cst_101 {dimension_numbers = #tpu.dot_dimension_numbers<[1], [0], [0], [1], [0, 0, 1, 1], [], []>} : vector<8x100xbf16>, vector<100x384xbf16>, vector<8x384xf32> -> vector<8x384xf32>
    %c0_102 = arith.constant 0 : index
    %c0_103 = arith.constant 0 : index
    %91 = vector.load %arg3[%c0_102, %c0_103] : memref<8x1xf32, #tpu.memory_space<vmem>>, vector<8x1xf32>
    %92 = vector.broadcast %91 : vector<8x1xf32> to vector<8x384xf32>
    %93 = arith.addf %90, %92 : vector<8x384xf32>
    %cst_104 = arith.constant 0.000000e+00 : f32
    %94 = vector.broadcast %cst_104 : f32 to vector<8x384xf32>
    %95 = arith.maximumf %93, %94 : vector<8x384xf32>
    %96 = vector.broadcast %0 : vector<1x384xf32> to vector<8x384xf32>
    %97 = arith.mulf %95, %96 : vector<8x384xf32>
    %98 = arith.truncf %97 : vector<8x384xf32> to vector<8x384xbf16>
    %c0_105 = arith.constant 0 : index
    %c72_106 = arith.constant 72 : index
    %99 = vector.load %arg16[%c0_105, %c72_106] : memref<8x528xbf16, #tpu.memory_space<vmem>>, vector<8x384xbf16>
    tpu.vector_store %arg16[%c0_105, %c72_106], %98 {strides = array<i32>} : memref<8x528xbf16, #tpu.memory_space<vmem>>, vector<8x384xbf16>,
    %c0_107 = arith.constant 0 : index
    %c47_108 = arith.constant 47 : index
    %100 = vector.load %arg16[%c0_107, %c47_108] : memref<8x528xbf16, #tpu.memory_space<vmem>>, vector<8x384xbf16>
    %c0_109 = arith.constant 0 : index
    %c0_110 = arith.constant 0 : index
    %101 = vector.load %arg13[%c0_109, %c0_110] : memref<72x384xbf16, #tpu.memory_space<vmem>>, vector<8x384xbf16>
    tpu.vector_store %arg13[%c0_109, %c0_110], %100 {strides = array<i32>} : memref<72x384xbf16, #tpu.memory_space<vmem>>, vector<8x384xbf16>,
    %c0_111 = arith.constant 0 : index
    %c48_112 = arith.constant 48 : index
    %102 = vector.load %arg16[%c0_111, %c48_112] : memref<8x528xbf16, #tpu.memory_space<vmem>>, vector<8x384xbf16>
    %c8_113 = arith.constant 8 : index
    %c0_114 = arith.constant 0 : index
    %103 = vector.load %arg13[%c8_113, %c0_114] : memref<72x384xbf16, #tpu.memory_space<vmem>>, vector<8x384xbf16>
    tpu.vector_store %arg13[%c8_113, %c0_114], %102 {strides = array<i32>} : memref<72x384xbf16, #tpu.memory_space<vmem>>, vector<8x384xbf16>,
    %c0_115 = arith.constant 0 : index
    %c49_116 = arith.constant 49 : index
    %104 = vector.load %arg16[%c0_115, %c49_116] : memref<8x528xbf16, #tpu.memory_space<vmem>>, vector<8x384xbf16>
    %c16_117 = arith.constant 16 : index
    %c0_118 = arith.constant 0 : index
    %105 = vector.load %arg13[%c16_117, %c0_118] : memref<72x384xbf16, #tpu.memory_space<vmem>>, vector<8x384xbf16>
    tpu.vector_store %arg13[%c16_117, %c0_118], %104 {strides = array<i32>} : memref<72x384xbf16, #tpu.memory_space<vmem>>, vector<8x384xbf16>,
    %c0_119 = arith.constant 0 : index
    %c71_120 = arith.constant 71 : index
    %106 = vector.load %arg16[%c0_119, %c71_120] : memref<8x528xbf16, #tpu.memory_space<vmem>>, vector<8x384xbf16>
    %c24_121 = arith.constant 24 : index
    %c0_122 = arith.constant 0 : index
    %107 = vector.load %arg13[%c24_121, %c0_122] : memref<72x384xbf16, #tpu.memory_space<vmem>>, vector<8x384xbf16>
    tpu.vector_store %arg13[%c24_121, %c0_122], %106 {strides = array<i32>} : memref<72x384xbf16, #tpu.memory_space<vmem>>, vector<8x384xbf16>,
    %c0_123 = arith.constant 0 : index
    %c72_124 = arith.constant 72 : index
    %108 = vector.load %arg16[%c0_123, %c72_124] : memref<8x528xbf16, #tpu.memory_space<vmem>>, vector<8x384xbf16>
    %c32_125 = arith.constant 32 : index
    %c0_126 = arith.constant 0 : index
    %109 = vector.load %arg13[%c32_125, %c0_126] : memref<72x384xbf16, #tpu.memory_space<vmem>>, vector<8x384xbf16>
    tpu.vector_store %arg13[%c32_125, %c0_126], %108 {strides = array<i32>} : memref<72x384xbf16, #tpu.memory_space<vmem>>, vector<8x384xbf16>,
    %c0_127 = arith.constant 0 : index
    %c73_128 = arith.constant 73 : index
    %110 = vector.load %arg16[%c0_127, %c73_128] : memref<8x528xbf16, #tpu.memory_space<vmem>>, vector<8x384xbf16>
    %c40_129 = arith.constant 40 : index
    %c0_130 = arith.constant 0 : index
    %111 = vector.load %arg13[%c40_129, %c0_130] : memref<72x384xbf16, #tpu.memory_space<vmem>>, vector<8x384xbf16>
    tpu.vector_store %arg13[%c40_129, %c0_130], %110 {strides = array<i32>} : memref<72x384xbf16, #tpu.memory_space<vmem>>, vector<8x384xbf16>,
    %c0_131 = arith.constant 0 : index
    %c95_132 = arith.constant 95 : index
    %112 = vector.load %arg16[%c0_131, %c95_132] : memref<8x528xbf16, #tpu.memory_space<vmem>>, vector<8x384xbf16>
    %c48_133 = arith.constant 48 : index
    %c0_134 = arith.constant 0 : index
    %113 = vector.load %arg13[%c48_133, %c0_134] : memref<72x384xbf16, #tpu.memory_space<vmem>>, vector<8x384xbf16>
    tpu.vector_store %arg13[%c48_133, %c0_134], %112 {strides = array<i32>} : memref<72x384xbf16, #tpu.memory_space<vmem>>, vector<8x384xbf16>,
    %c0_135 = arith.constant 0 : index
    %c96_136 = arith.constant 96 : index
    %114 = vector.load %arg16[%c0_135, %c96_136] : memref<8x528xbf16, #tpu.memory_space<vmem>>, vector<8x384xbf16>
    %c56_137 = arith.constant 56 : index
    %c0_138 = arith.constant 0 : index
    %115 = vector.load %arg13[%c56_137, %c0_138] : memref<72x384xbf16, #tpu.memory_space<vmem>>, vector<8x384xbf16>
    tpu.vector_store %arg13[%c56_137, %c0_138], %114 {strides = array<i32>} : memref<72x384xbf16, #tpu.memory_space<vmem>>, vector<8x384xbf16>,
    %c0_139 = arith.constant 0 : index
    %c97_140 = arith.constant 97 : index
    %116 = vector.load %arg16[%c0_139, %c97_140] : memref<8x528xbf16, #tpu.memory_space<vmem>>, vector<8x384xbf16>
    %c64_141 = arith.constant 64 : index
    %c0_142 = arith.constant 0 : index
    %117 = vector.load %arg13[%c64_141, %c0_142] : memref<72x384xbf16, #tpu.memory_space<vmem>>, vector<8x384xbf16>
    tpu.vector_store %arg13[%c64_141, %c0_142], %116 {strides = array<i32>} : memref<72x384xbf16, #tpu.memory_space<vmem>>, vector<8x384xbf16>,
    %c0_143 = arith.constant 0 : index
    %c0_144 = arith.constant 0 : index
    %118 = vector.load %arg4[%c0_143, %c0_144] : memref<4x72xbf16, #tpu.memory_space<vmem>>, vector<4x72xbf16>
    %c0_145 = arith.constant 0 : index
    %c0_146 = arith.constant 0 : index
    %119 = vector.load %arg13[%c0_145, %c0_146] : memref<72x384xbf16, #tpu.memory_space<vmem>>, vector<72x384xbf16>
    %cst_147 = arith.constant dense<0.000000e+00> : vector<4x384xf32>
    %120 = tpu.matmul %118, %119, %cst_147 {dimension_numbers = #tpu.dot_dimension_numbers<[1], [0], [0], [1], [0, 0, 1, 1], [], []>} : vector<4x72xbf16>, vector<72x384xbf16>, vector<4x384xf32> -> vector<4x384xf32>
    %c0_148 = arith.constant 0 : index
    %c0_149 = arith.constant 0 : index
    %121 = vector.load %arg5[%c0_148, %c0_149] : memref<4x1xf32, #tpu.memory_space<vmem>>, vector<4x1xf32>
    %122 = vector.broadcast %121 : vector<4x1xf32> to vector<4x384xf32>
    %123 = arith.addf %120, %122 : vector<4x384xf32>
    %cst_150 = arith.constant 0.000000e+00 : f32
    %124 = vector.broadcast %cst_150 : f32 to vector<4x384xf32>
    %125 = arith.maximumf %123, %124 : vector<4x384xf32>
    %126 = vector.broadcast %0 : vector<1x384xf32> to vector<4x384xf32>
    %127 = arith.mulf %125, %126 : vector<4x384xf32>
    %128 = arith.truncf %127 : vector<4x384xf32> to vector<4x384xbf16>
    %c0_151 = arith.constant 0 : index
    %c72_152 = arith.constant 72 : index
    %129 = vector.load %arg17[%c0_151, %c72_152] : memref<4x528xbf16, #tpu.memory_space<vmem>>, vector<4x384xbf16>
    tpu.vector_store %arg17[%c0_151, %c72_152], %128 {strides = array<i32>} : memref<4x528xbf16, #tpu.memory_space<vmem>>, vector<4x384xbf16>,
    %c0_153 = arith.constant 0 : index
    %c47_154 = arith.constant 47 : index
    %130 = vector.load %arg17[%c0_153, %c47_154] : memref<4x528xbf16, #tpu.memory_space<vmem>>, vector<4x384xbf16>
    %c0_155 = arith.constant 0 : index
    %c0_156 = arith.constant 0 : index
    %131 = vector.load %arg14[%c0_155, %c0_156] : memref<36x384xbf16, #tpu.memory_space<vmem>>, vector<4x384xbf16>
    tpu.vector_store %arg14[%c0_155, %c0_156], %130 {strides = array<i32>} : memref<36x384xbf16, #tpu.memory_space<vmem>>, vector<4x384xbf16>,
    %c0_157 = arith.constant 0 : index
    %c48_158 = arith.constant 48 : index
    %132 = vector.load %arg17[%c0_157, %c48_158] : memref<4x528xbf16, #tpu.memory_space<vmem>>, vector<4x384xbf16>
    %c4_159 = arith.constant 4 : index
    %c0_160 = arith.constant 0 : index
    %133 = vector.load %arg14[%c4_159, %c0_160] : memref<36x384xbf16, #tpu.memory_space<vmem>>, vector<4x384xbf16>
    tpu.vector_store %arg14[%c4_159, %c0_160], %132 {strides = array<i32>} : memref<36x384xbf16, #tpu.memory_space<vmem>>, vector<4x384xbf16>,
    %c0_161 = arith.constant 0 : index
    %c49_162 = arith.constant 49 : index
    %134 = vector.load %arg17[%c0_161, %c49_162] : memref<4x528xbf16, #tpu.memory_space<vmem>>, vector<4x384xbf16>
    %c8_163 = arith.constant 8 : index
    %c0_164 = arith.constant 0 : index
    %135 = vector.load %arg14[%c8_163, %c0_164] : memref<36x384xbf16, #tpu.memory_space<vmem>>, vector<4x384xbf16>
    tpu.vector_store %arg14[%c8_163, %c0_164], %134 {strides = array<i32>} : memref<36x384xbf16, #tpu.memory_space<vmem>>, vector<4x384xbf16>,
    %c0_165 = arith.constant 0 : index
    %c71_166 = arith.constant 71 : index
    %136 = vector.load %arg17[%c0_165, %c71_166] : memref<4x528xbf16, #tpu.memory_space<vmem>>, vector<4x384xbf16>
    %c12_167 = arith.constant 12 : index
    %c0_168 = arith.constant 0 : index
    %137 = vector.load %arg14[%c12_167, %c0_168] : memref<36x384xbf16, #tpu.memory_space<vmem>>, vector<4x384xbf16>
    tpu.vector_store %arg14[%c12_167, %c0_168], %136 {strides = array<i32>} : memref<36x384xbf16, #tpu.memory_space<vmem>>, vector<4x384xbf16>,
    %c0_169 = arith.constant 0 : index
    %c72_170 = arith.constant 72 : index
    %138 = vector.load %arg17[%c0_169, %c72_170] : memref<4x528xbf16, #tpu.memory_space<vmem>>, vector<4x384xbf16>
    %c16_171 = arith.constant 16 : index
    %c0_172 = arith.constant 0 : index
    %139 = vector.load %arg14[%c16_171, %c0_172] : memref<36x384xbf16, #tpu.memory_space<vmem>>, vector<4x384xbf16>
    tpu.vector_store %arg14[%c16_171, %c0_172], %138 {strides = array<i32>} : memref<36x384xbf16, #tpu.memory_space<vmem>>, vector<4x384xbf16>,
    %c0_173 = arith.constant 0 : index
    %c73_174 = arith.constant 73 : index
    %140 = vector.load %arg17[%c0_173, %c73_174] : memref<4x528xbf16, #tpu.memory_space<vmem>>, vector<4x384xbf16>
    %c20_175 = arith.constant 20 : index
    %c0_176 = arith.constant 0 : index
    %141 = vector.load %arg14[%c20_175, %c0_176] : memref<36x384xbf16, #tpu.memory_space<vmem>>, vector<4x384xbf16>
    tpu.vector_store %arg14[%c20_175, %c0_176], %140 {strides = array<i32>} : memref<36x384xbf16, #tpu.memory_space<vmem>>, vector<4x384xbf16>,
    %c0_177 = arith.constant 0 : index
    %c95_178 = arith.constant 95 : index
    %142 = vector.load %arg17[%c0_177, %c95_178] : memref<4x528xbf16, #tpu.memory_space<vmem>>, vector<4x384xbf16>
    %c24_179 = arith.constant 24 : index
    %c0_180 = arith.constant 0 : index
    %143 = vector.load %arg14[%c24_179, %c0_180] : memref<36x384xbf16, #tpu.memory_space<vmem>>, vector<4x384xbf16>
    tpu.vector_store %arg14[%c24_179, %c0_180], %142 {strides = array<i32>} : memref<36x384xbf16, #tpu.memory_space<vmem>>, vector<4x384xbf16>,
    %c0_181 = arith.constant 0 : index
    %c96_182 = arith.constant 96 : index
    %144 = vector.load %arg17[%c0_181, %c96_182] : memref<4x528xbf16, #tpu.memory_space<vmem>>, vector<4x384xbf16>
    %c28_183 = arith.constant 28 : index
    %c0_184 = arith.constant 0 : index
    %145 = vector.load %arg14[%c28_183, %c0_184] : memref<36x384xbf16, #tpu.memory_space<vmem>>, vector<4x384xbf16>
    tpu.vector_store %arg14[%c28_183, %c0_184], %144 {strides = array<i32>} : memref<36x384xbf16, #tpu.memory_space<vmem>>, vector<4x384xbf16>,
    %c0_185 = arith.constant 0 : index
    %c97_186 = arith.constant 97 : index
    %146 = vector.load %arg17[%c0_185, %c97_186] : memref<4x528xbf16, #tpu.memory_space<vmem>>, vector<4x384xbf16>
    %c32_187 = arith.constant 32 : index
    %c0_188 = arith.constant 0 : index
    %147 = vector.load %arg14[%c32_187, %c0_188] : memref<36x384xbf16, #tpu.memory_space<vmem>>, vector<4x384xbf16>
    tpu.vector_store %arg14[%c32_187, %c0_188], %146 {strides = array<i32>} : memref<36x384xbf16, #tpu.memory_space<vmem>>, vector<4x384xbf16>,
    %c0_189 = arith.constant 0 : index
    %c0_190 = arith.constant 0 : index
    %148 = vector.load %arg6[%c0_189, %c0_190] : memref<16x36xbf16, #tpu.memory_space<vmem>>, vector<16x36xbf16>
    %c0_191 = arith.constant 0 : index
    %c0_192 = arith.constant 0 : index
    %149 = vector.load %arg14[%c0_191, %c0_192] : memref<36x384xbf16, #tpu.memory_space<vmem>>, vector<36x384xbf16>
    %cst_193 = arith.constant dense<0.000000e+00> : vector<16x384xf32>
    %150 = tpu.matmul %148, %149, %cst_193 {dimension_numbers = #tpu.dot_dimension_numbers<[1], [0], [0], [1], [0, 0, 1, 1], [], []>} : vector<16x36xbf16>, vector<36x384xbf16>, vector<16x384xf32> -> vector<16x384xf32>
    %c0_194 = arith.constant 0 : index
    %c0_195 = arith.constant 0 : index
    %151 = vector.load %arg7[%c0_194, %c0_195] : memref<16x1xf32, #tpu.memory_space<vmem>>, vector<16x1xf32>
    %152 = vector.broadcast %151 : vector<16x1xf32> to vector<16x384xf32>
    %153 = arith.addf %150, %152 : vector<16x384xf32>
    %cst_196 = arith.constant 0.000000e+00 : f32
    %154 = vector.broadcast %cst_196 : f32 to vector<16x384xf32>
    %155 = arith.maximumf %153, %154 : vector<16x384xf32>
    %156 = vector.broadcast %0 : vector<1x384xf32> to vector<16x384xf32>
    %157 = arith.mulf %155, %156 : vector<16x384xf32>
    %158 = arith.truncf %157 : vector<16x384xf32> to vector<16x384xbf16>
    %c0_197 = arith.constant 0 : index
    %c72_198 = arith.constant 72 : index
    %159 = vector.load %arg18[%c0_197, %c72_198] : memref<16x528xbf16, #tpu.memory_space<vmem>>, vector<16x384xbf16>
    tpu.vector_store %arg18[%c0_197, %c72_198], %158 {strides = array<i32>} : memref<16x528xbf16, #tpu.memory_space<vmem>>, vector<16x384xbf16>,
    %c0_199 = arith.constant 0 : index
    %c47_200 = arith.constant 47 : index
    %160 = vector.load %arg18[%c0_199, %c47_200] : memref<16x528xbf16, #tpu.memory_space<vmem>>, vector<16x384xbf16>
    %c0_201 = arith.constant 0 : index
    %c0_202 = arith.constant 0 : index
    %161 = vector.load %arg15[%c0_201, %c0_202] : memref<144x384xbf16, #tpu.memory_space<vmem>>, vector<16x384xbf16>
    tpu.vector_store %arg15[%c0_201, %c0_202], %160 {strides = array<i32>} : memref<144x384xbf16, #tpu.memory_space<vmem>>, vector<16x384xbf16>,
    %c0_203 = arith.constant 0 : index
    %c48_204 = arith.constant 48 : index
    %162 = vector.load %arg18[%c0_203, %c48_204] : memref<16x528xbf16, #tpu.memory_space<vmem>>, vector<16x384xbf16>
    %c16_205 = arith.constant 16 : index
    %c0_206 = arith.constant 0 : index
    %163 = vector.load %arg15[%c16_205, %c0_206] : memref<144x384xbf16, #tpu.memory_space<vmem>>, vector<16x384xbf16>
    tpu.vector_store %arg15[%c16_205, %c0_206], %162 {strides = array<i32>} : memref<144x384xbf16, #tpu.memory_space<vmem>>, vector<16x384xbf16>,
    %c0_207 = arith.constant 0 : index
    %c49_208 = arith.constant 49 : index
    %164 = vector.load %arg18[%c0_207, %c49_208] : memref<16x528xbf16, #tpu.memory_space<vmem>>, vector<16x384xbf16>
    %c32_209 = arith.constant 32 : index
    %c0_210 = arith.constant 0 : index
    %165 = vector.load %arg15[%c32_209, %c0_210] : memref<144x384xbf16, #tpu.memory_space<vmem>>, vector<16x384xbf16>
    tpu.vector_store %arg15[%c32_209, %c0_210], %164 {strides = array<i32>} : memref<144x384xbf16, #tpu.memory_space<vmem>>, vector<16x384xbf16>,
    %c0_211 = arith.constant 0 : index
    %c71_212 = arith.constant 71 : index
    %166 = vector.load %arg18[%c0_211, %c71_212] : memref<16x528xbf16, #tpu.memory_space<vmem>>, vector<16x384xbf16>
    %c48_213 = arith.constant 48 : index
    %c0_214 = arith.constant 0 : index
    %167 = vector.load %arg15[%c48_213, %c0_214] : memref<144x384xbf16, #tpu.memory_space<vmem>>, vector<16x384xbf16>
    tpu.vector_store %arg15[%c48_213, %c0_214], %166 {strides = array<i32>} : memref<144x384xbf16, #tpu.memory_space<vmem>>, vector<16x384xbf16>,
    %c0_215 = arith.constant 0 : index
    %c72_216 = arith.constant 72 : index
    %168 = vector.load %arg18[%c0_215, %c72_216] : memref<16x528xbf16, #tpu.memory_space<vmem>>, vector<16x384xbf16>
    %c64_217 = arith.constant 64 : index
    %c0_218 = arith.constant 0 : index
    %169 = vector.load %arg15[%c64_217, %c0_218] : memref<144x384xbf16, #tpu.memory_space<vmem>>, vector<16x384xbf16>
    tpu.vector_store %arg15[%c64_217, %c0_218], %168 {strides = array<i32>} : memref<144x384xbf16, #tpu.memory_space<vmem>>, vector<16x384xbf16>,
    %c0_219 = arith.constant 0 : index
    %c73_220 = arith.constant 73 : index
    %170 = vector.load %arg18[%c0_219, %c73_220] : memref<16x528xbf16, #tpu.memory_space<vmem>>, vector<16x384xbf16>
    %c80_221 = arith.constant 80 : index
    %c0_222 = arith.constant 0 : index
    %171 = vector.load %arg15[%c80_221, %c0_222] : memref<144x384xbf16, #tpu.memory_space<vmem>>, vector<16x384xbf16>
    tpu.vector_store %arg15[%c80_221, %c0_222], %170 {strides = array<i32>} : memref<144x384xbf16, #tpu.memory_space<vmem>>, vector<16x384xbf16>,
    %c0_223 = arith.constant 0 : index
    %c95_224 = arith.constant 95 : index
    %172 = vector.load %arg18[%c0_223, %c95_224] : memref<16x528xbf16, #tpu.memory_space<vmem>>, vector<16x384xbf16>
    %c96_225 = arith.constant 96 : index
    %c0_226 = arith.constant 0 : index
    %173 = vector.load %arg15[%c96_225, %c0_226] : memref<144x384xbf16, #tpu.memory_space<vmem>>, vector<16x384xbf16>
    tpu.vector_store %arg15[%c96_225, %c0_226], %172 {strides = array<i32>} : memref<144x384xbf16, #tpu.memory_space<vmem>>, vector<16x384xbf16>,
    %c0_227 = arith.constant 0 : index
    %c96_228 = arith.constant 96 : index
    %174 = vector.load %arg18[%c0_227, %c96_228] : memref<16x528xbf16, #tpu.memory_space<vmem>>, vector<16x384xbf16>
    %c112 = arith.constant 112 : index
    %c0_229 = arith.constant 0 : index
    %175 = vector.load %arg15[%c112, %c0_229] : memref<144x384xbf16, #tpu.memory_space<vmem>>, vector<16x384xbf16>
    tpu.vector_store %arg15[%c112, %c0_229], %174 {strides = array<i32>} : memref<144x384xbf16, #tpu.memory_space<vmem>>, vector<16x384xbf16>,
    %c0_230 = arith.constant 0 : index
    %c97_231 = arith.constant 97 : index
    %176 = vector.load %arg18[%c0_230, %c97_231] : memref<16x528xbf16, #tpu.memory_space<vmem>>, vector<16x384xbf16>
    %c128 = arith.constant 128 : index
    %c0_232 = arith.constant 0 : index
    %177 = vector.load %arg15[%c128, %c0_232] : memref<144x384xbf16, #tpu.memory_space<vmem>>, vector<16x384xbf16>
    tpu.vector_store %arg15[%c128, %c0_232], %176 {strides = array<i32>} : memref<144x384xbf16, #tpu.memory_space<vmem>>, vector<16x384xbf16>,
    %c0_233 = arith.constant 0 : index
    %c0_234 = arith.constant 0 : index
    %178 = vector.load %arg8[%c0_233, %c0_234] : memref<16x144xbf16, #tpu.memory_space<vmem>>, vector<16x144xbf16>
    %c0_235 = arith.constant 0 : index
    %c0_236 = arith.constant 0 : index
    %179 = vector.load %arg15[%c0_235, %c0_236] : memref<144x384xbf16, #tpu.memory_space<vmem>>, vector<144x384xbf16>
    %cst_237 = arith.constant dense<0.000000e+00> : vector<16x384xf32>
    %180 = tpu.matmul %178, %179, %cst_237 {dimension_numbers = #tpu.dot_dimension_numbers<[1], [0], [0], [1], [0, 0, 1, 1], [], []>} : vector<16x144xbf16>, vector<144x384xbf16>, vector<16x384xf32> -> vector<16x384xf32>
    %c0_238 = arith.constant 0 : index
    %c0_239 = arith.constant 0 : index
    %181 = vector.load %arg9[%c0_238, %c0_239] : memref<16x1xf32, #tpu.memory_space<vmem>>, vector<16x1xf32>
    %182 = vector.broadcast %181 : vector<16x1xf32> to vector<16x384xf32>
    %183 = arith.addf %180, %182 : vector<16x384xf32>
    %cst_240 = arith.constant 0.000000e+00 : f32
    %184 = vector.broadcast %cst_240 : f32 to vector<16x384xf32>
    %185 = arith.maximumf %183, %184 : vector<16x384xf32>
    %c0_241 = arith.constant 0 : index
    %c0_242 = arith.constant 0 : index
    %c0_243 = arith.constant 0 : index
    %186 = vector.load %arg11[%c0_241, %c0_242, %c0_243] : memref<1x16x384xf32, #tpu.memory_space<vmem>>, vector<1x16x384xf32>
    %187 = vector.shape_cast %186 : vector<1x16x384xf32> to vector<16x384xf32>
    %188 = vector.shape_cast %185 : vector<16x384xf32> to vector<1x16x384xf32>
    tpu.vector_store %arg11[%c0_241, %c0_242, %c0_243], %188 {strides = array<i32>} : memref<1x16x384xf32, #tpu.memory_space<vmem>>, vector<1x16x384xf32>,
    return
  }
  func.func @transform_0(%arg0: i32) -> (i32, i32, i32) {
    %c0_i32 = arith.constant 0 : i32
    %c0_i32_0 = arith.constant 0 : i32
    %c0_i32_1 = arith.constant 0 : i32
    return %arg0, %c0_i32, %c0_i32_0 : i32, i32, i32
  }
  func.func @transform_1(%arg0: i32) -> (i32, i32) {
    %c0_i32 = arith.constant 0 : i32
    %c0_i32_0 = arith.constant 0 : i32
    %c0_i32_1 = arith.constant 0 : i32
    return %c0_i32, %c0_i32_0 : i32, i32
  }
  func.func @transform_2(%arg0: i32) -> (i32, i32) {
    %c0_i32 = arith.constant 0 : i32
    %c0_i32_0 = arith.constant 0 : i32
    %c0_i32_1 = arith.constant 0 : i32
    return %c0_i32, %c0_i32_0 : i32, i32
  }
  func.func @transform_3(%arg0: i32) -> (i32, i32) {
    %c0_i32 = arith.constant 0 : i32
    %c0_i32_0 = arith.constant 0 : i32
    %c0_i32_1 = arith.constant 0 : i32
    return %c0_i32, %c0_i32_0 : i32, i32
  }
  func.func @transform_4(%arg0: i32) -> (i32, i32) {
    %c0_i32 = arith.constant 0 : i32
    %c0_i32_0 = arith.constant 0 : i32
    %c0_i32_1 = arith.constant 0 : i32
    return %c0_i32, %c0_i32_0 : i32, i32
  }
  func.func @transform_5(%arg0: i32) -> (i32, i32) {
    %c0_i32 = arith.constant 0 : i32
    %c0_i32_0 = arith.constant 0 : i32
    %c0_i32_1 = arith.constant 0 : i32
    return %c0_i32, %c0_i32_0 : i32, i32
  }
  func.func @transform_6(%arg0: i32) -> (i32, i32) {
    %c0_i32 = arith.constant 0 : i32
    %c0_i32_0 = arith.constant 0 : i32
    %c0_i32_1 = arith.constant 0 : i32
    return %c0_i32, %c0_i32_0 : i32, i32
  }
  func.func @transform_7(%arg0: i32) -> (i32, i32) {
    %c0_i32 = arith.constant 0 : i32
    %c0_i32_0 = arith.constant 0 : i32
    %c0_i32_1 = arith.constant 0 : i32
    return %c0_i32, %c0_i32_0 : i32, i32
  }
  func.func @transform_8(%arg0: i32) -> (i32, i32) {
    %c0_i32 = arith.constant 0 : i32
    %c0_i32_0 = arith.constant 0 : i32
    %c0_i32_1 = arith.constant 0 : i32
    return %c0_i32, %c0_i32_0 : i32, i32
  }
  func.func @transform_9(%arg0: i32) -> (i32, i32) {
    %c0_i32 = arith.constant 0 : i32
    %c0_i32_0 = arith.constant 0 : i32
    %c0_i32_1 = arith.constant 0 : i32
    return %c0_i32, %c0_i32_0 : i32, i32
  }
  func.func @transform_10(%arg0: i32) -> (i32, i32, i32) {
    %c0_i32 = arith.constant 0 : i32
    %c0_i32_0 = arith.constant 0 : i32
    %c0_i32_1 = arith.constant 0 : i32
    return %arg0, %c0_i32, %c0_i32_0 : i32, i32, i32
  }
}

</mosaic_0001>

<llo_original>
// kernel: tile.6
$region0: #{tile.6}
  #allocation0 [shape = 's32[1]{0}', space=sflag, size = 0x4, scoped, tag = 'scoped memory for tile.6']
  %s0 = inlined_call_operand.vmem [shape: f32[4], index: 0, kind: input, shape index: {}]
  %s1 = inlined_call_operand.vmem [shape: f32[4,4], index: 1, kind: output, shape index: {}]
  // Predicated region
  $region2: #{tile.6} parent=0 // pred_check
    _
  $region3: #{tile.6} parent=0 // pred_check_branch
    %3 = sbr.rel (0) target = $region5
  $region4: #{tile.6} parent=0 // pred_region
    _
  $region5: #{tile.6} parent=0 // pred_fallthru
    _
  %v4 = vld [vmem:[%s0] ss:$0 sm:$0xff]
  %5 = vst [vmem:[%s1] sm:$0xf] %v4

// kernel: tile.0
$region0: #{tile.0}
  %s0 = inlined_call_operand.vmem [shape: f32[4,4], index: 0, kind: input, shape index: {}]
  %s1 = inlined_call_operand.vmem [shape: f32[16,1], index: 1, kind: output, shape index: {}]
  $region1: #{tile.0} parent=0
    #allocation0 [shape = 'u8[4096]{0}', space=vmem, size = 0x1000, scoped, tag = 'scoped mem for input reshape']
    %s3 = sshllo.u32 0, 4
    %v4 = vld [vmem:[%s0] sm:%s3]
    %5 = vst [vmem:[#allocation0] sm:%s3] %v4
    %v6 = vld [vmem:[#allocation0] sm:$0xf]
    %vm7 = vcmask 7168
    %8 = vst.msk [vmem:[%s1] ss:$4 sm:$0xf] %vm7, %v6
    %v9 = vld [vmem:[#allocation0] sm:$0xf]
    %10 = vrot.lane.b32.xlu0 %v9, 127
    %v11 = vpop.permute.xlu0 %10
    %vm12 = vcmask 7168
    %s13 = scalar_lea.vmem %s1, 1
    %14 = vst.msk [vmem:[%s13] ss:$4 sm:$0xf] %vm12, %v11
    %v15 = vld [vmem:[#allocation0] sm:$0xf]
    %16 = vrot.lane.b32.xlu0 %v15, 126
    %v17 = vpop.permute.xlu0 %16
    %vm18 = vcmask 7168
    %s19 = scalar_lea.vmem %s1, 2
    %20 = vst.msk [vmem:[%s19] ss:$4 sm:$0xf] %vm18, %v17
    %v21 = vld [vmem:[#allocation0] sm:$0xf]
    %22 = vrot.lane.b32.xlu0 %v21, 125
    %v23 = vpop.permute.xlu0 %22
    %vm24 = vcmask 7168
    %s25 = scalar_lea.vmem %s1, 3
    %26 = vst.msk [vmem:[%s25] ss:$4 sm:$0xf] %vm24, %v23

// kernel: _lambda_.1
$region0: #{_lambda_.1}
  #allocation0 [shape = 'u32[]', space=smem, size = 0x4, offset = 0x4, fixed_abs, tag = 'smem constant byte address 0x4 - core index']
  #allocation1 [shape = 'u32[144,128]{1,0:T(1,128)}', space=vmem, size = 0x12000, scoped, tag = 'internal scratch']
  #allocation2 [shape = 'bf16[100,384]{1,0:T(8,128)(2,1)}', space=vmem, size = 0x13800, scoped, tag = 'scratch operand']
  #allocation3 [shape = 'bf16[72,384]{1,0:T(8,128)(2,1)}', space=vmem, size = 0xd800, scoped, tag = 'scratch operand']
  #allocation4 [shape = 'bf16[36,384]{1,0:T(8,128)(2,1)}', space=vmem, size = 0x7800, scoped, tag = 'scratch operand']
  #allocation5 [shape = 'bf16[144,384]{1,0:T(16,128)(2,1)}', space=vmem, size = 0x1b000, scoped, tag = 'scratch operand']
  #allocation6 [shape = 'bf16[8,528]{1,0:T(8,128)(2,1)}', space=vmem, size = 0x2800, scoped, tag = 'scratch operand']
  #allocation7 [shape = 'bf16[4,528]{1,0:T(4,128)(2,1)}', space=vmem, size = 0x1400, scoped, tag = 'scratch operand']
  #allocation8 [shape = 'bf16[16,528]{1,0:T(16,128)(2,1)}', space=vmem, size = 0x5000, scoped, tag = 'scratch operand']
  %s0 = inlined_call_operand.vmem [shape: bf16[2,4,528], index: 0, kind: input, shape index: {}]
  %s1 = inlined_call_operand.vmem [shape: bf16[8,100], index: 1, kind: input, shape index: {}]
  %s2 = inlined_call_operand.vmem [shape: f32[8,1], index: 2, kind: input, shape index: {}]
  %s3 = inlined_call_operand.vmem [shape: bf16[4,72], index: 3, kind: input, shape index: {}]
  %s4 = inlined_call_operand.vmem [shape: f32[4,1], index: 4, kind: input, shape index: {}]
  %s5 = inlined_call_operand.vmem [shape: bf16[16,36], index: 5, kind: input, shape index: {}]
  %s6 = inlined_call_operand.vmem [shape: f32[16,1], index: 6, kind: input, shape index: {}]
  %s7 = inlined_call_operand.vmem [shape: bf16[16,144], index: 7, kind: input, shape index: {}]
  %s8 = inlined_call_operand.vmem [shape: f32[16,1], index: 8, kind: input, shape index: {}]
  %s9 = inlined_call_operand.vmem [shape: f32[1,384], index: 9, kind: input, shape index: {}]
  %s10 = inlined_call_operand.vmem [shape: f32[2,16,384], index: 10, kind: output, shape index: {}]
  %s11 = sld [smem:[#allocation0]]
  $region73: #{_lambda_.1} parent=0
    _
  %s13 = ssub.s32 1, %s11
  %s14 = scalar_select 0, %s13, %s11
  loop: start=0, step=1, limit=4
  $region2: #{_lambda_.1} parent=0 // loop_pre_header
    _
  $region3: #{_lambda_.1} parent=0 // loop_header
    %s16 = sphi 0, %s20
    %p17 = scmp.ge.s32.totalorder %s16, 4
    %s26 = sphi 0, %s28
    %s29 = sphi 0, %s26
    %s30 = sphi 0, %s29
    %s46 = sphi 0, %s30
    %s50 = sphi 0, %s50
    %s52 = sphi 0, %s50
    %s53 = sphi 0, %s52
    %s67 = sphi 0, %s53
    %s71 = sphi 0, %s71
    %s73 = sphi 0, %s71
    %s74 = sphi 0, %s73
    %s88 = sphi 0, %s74
    %s92 = sphi 0, %s92
    %s94 = sphi 0, %s92
    %s95 = sphi 0, %s94
    %s109 = sphi 0, %s95
    %s113 = sphi 0, %s113
    %s115 = sphi 0, %s113
    %s116 = sphi 0, %s115
    %s130 = sphi 0, %s116
    %s134 = sphi 0, %s134
    %s136 = sphi 0, %s134
    %s137 = sphi 0, %s136
    %s151 = sphi 0, %s137
    %s155 = sphi 0, %s155
    %s157 = sphi 0, %s155
    %s158 = sphi 0, %s157
    %s172 = sphi 0, %s158
    %s176 = sphi 0, %s176
    %s178 = sphi 0, %s176
    %s179 = sphi 0, %s178
    %s193 = sphi 0, %s179
    %s197 = sphi 0, %s197
    %s199 = sphi 0, %s197
    %s200 = sphi 0, %s199
    %s214 = sphi 0, %s200
    %s218 = sphi 0, %s218
    %s220 = sphi 0, %s218
    %s221 = sphi 0, %s220
    %s235 = sphi 0, %s221
    %s241 = sphi 0, %s243
    %s244 = sphi 0, %s241
    %s245 = sphi 0, %s244
    %s261 = sphi 0, %s245
  $region4: #{_lambda_.1} parent=0 // loop_header_branch
    %19 = sbr.rel (%p17) target = $region8
  $region5: #{_lambda_.1} parent=0 // loop_body
    %s21 = ssub.s32 %s16, 1
    %s22 = ssub.s32 %s16, 2
    %s23 = sadd.s32 %s16, 1
    %s24 = ssub.s32 %s16, %s23
    %p25 = scmp.eq.s32.totalorder %s24, 0
    %s27 = sadd.s32 %s26, 1
    %s28 = scalar_select %p25, %s26, %s27
    %p31 = pneg %p25
    %p32 = scmp.eq.s32.totalorder %s16, 1
    %p33 = por %p31, %p32
    %p34 = scmp.ne.s32.totalorder %s26, %s29
    %p35 = scmp.eq.s32.totalorder %s16, 0
    %p36 = por %p34, %p35
    %p37 = scmp.ne.s32.totalorder %s26, %s29
    %p38 = scmp.eq.s32.totalorder %s21, 1
    %p39 = por %p37, %p38
    %p40 = scmp.ne.s32.totalorder %s29, %s30
    %p41 = scmp.eq.s32.totalorder %s21, 0
    %p42 = por %p40, %p41
    %p43 = scmp.ne.s32.totalorder %s29, %s30
    %p44 = scmp.eq.s32.totalorder %s22, 1
    %p45 = por %p43, %p44
    %p47 = scmp.ne.s32.totalorder %s30, %s46
    %p48 = scmp.eq.s32.totalorder %s22, 0
    %p49 = por %p47, %p48
    %s51 = sadd.s32 %s50, 1
    %p54 = scmp.eq.s32.totalorder %s16, 1
    %p55 = scmp.ne.s32.totalorder %s50, %s52
    %p56 = scmp.eq.s32.totalorder %s16, 0
    %p57 = por %p55, %p56
    %p58 = scmp.ne.s32.totalorder %s50, %s52
    %p59 = scmp.eq.s32.totalorder %s21, 1
    %p60 = por %p58, %p59
    %p61 = scmp.ne.s32.totalorder %s52, %s53
    %p62 = scmp.eq.s32.totalorder %s21, 0
    %p63 = por %p61, %p62
    %p64 = scmp.ne.s32.totalorder %s52, %s53
    %p65 = scmp.eq.s32.totalorder %s22, 1
    %p66 = por %p64, %p65
    %p68 = scmp.ne.s32.totalorder %s53, %s67
    %p69 = scmp.eq.s32.totalorder %s22, 0
    %p70 = por %p68, %p69
    %s72 = sadd.s32 %s71, 1
    %p75 = scmp.eq.s32.totalorder %s16, 1
    %p76 = scmp.ne.s32.totalorder %s71, %s73
    %p77 = scmp.eq.s32.totalorder %s16, 0
    %p78 = por %p76, %p77
    %p79 = scmp.ne.s32.totalorder %s71, %s73
    %p80 = scmp.eq.s32.totalorder %s21, 1
    %p81 = por %p79, %p80
    %p82 = scmp.ne.s32.totalorder %s73, %s74
    %p83 = scmp.eq.s32.totalorder %s21, 0
    %p84 = por %p82, %p83
    %p85 = scmp.ne.s32.totalorder %s73, %s74
    %p86 = scmp.eq.s32.totalorder %s22, 1
    %p87 = por %p85, %p86
    %p89 = scmp.ne.s32.totalorder %s74, %s88
    %p90 = scmp.eq.s32.totalorder %s22, 0
    %p91 = por %p89, %p90
    %s93 = sadd.s32 %s92, 1
    %p96 = scmp.eq.s32.totalorder %s16, 1
    %p97 = scmp.ne.s32.totalorder %s92, %s94
    %p98 = scmp.eq.s32.totalorder %s16, 0
    %p99 = por %p97, %p98
    %p100 = scmp.ne.s32.totalorder %s92, %s94
    %p101 = scmp.eq.s32.totalorder %s21, 1
    %p102 = por %p100, %p101
    %p103 = scmp.ne.s32.totalorder %s94, %s95
    %p104 = scmp.eq.s32.totalorder %s21, 0
    %p105 = por %p103, %p104
    %p106 = scmp.ne.s32.totalorder %s94, %s95
    %p107 = scmp.eq.s32.totalorder %s22, 1
    %p108 = por %p106, %p107
    %p110 = scmp.ne.s32.totalorder %s95, %s109
    %p111 = scmp.eq.s32.totalorder %s22, 0
    %p112 = por %p110, %p111
    %s114 = sadd.s32 %s113, 1
    %p117 = scmp.eq.s32.totalorder %s16, 1
    %p118 = scmp.ne.s32.totalorder %s113, %s115
    %p119 = scmp.eq.s32.totalorder %s16, 0
    %p120 = por %p118, %p119
    %p121 = scmp.ne.s32.totalorder %s113, %s115
    %p122 = scmp.eq.s32.totalorder %s21, 1
    %p123 = por %p121, %p122
    %p124 = scmp.ne.s32.totalorder %s115, %s116
    %p125 = scmp.eq.s32.totalorder %s21, 0
    %p126 = por %p124, %p125
    %p127 = scmp.ne.s32.totalorder %s115, %s116
    %p128 = scmp.eq.s32.totalorder %s22, 1
    %p129 = por %p127, %p128
    %p131 = scmp.ne.s32.totalorder %s116, %s130
    %p132 = scmp.eq.s32.totalorder %s22, 0
    %p133 = por %p131, %p132
    %s135 = sadd.s32 %s134, 1
    %p138 = scmp.eq.s32.totalorder %s16, 1
    %p139 = scmp.ne.s32.totalorder %s134, %s136
    %p140 = scmp.eq.s32.totalorder %s16, 0
    %p141 = por %p139, %p140
    %p142 = scmp.ne.s32.totalorder %s134, %s136
    %p143 = scmp.eq.s32.totalorder %s21, 1
    %p144 = por %p142, %p143
    %p145 = scmp.ne.s32.totalorder %s136, %s137
    %p146 = scmp.eq.s32.totalorder %s21, 0
    %p147 = por %p145, %p146
    %p148 = scmp.ne.s32.totalorder %s136, %s137
    %p149 = scmp.eq.s32.totalorder %s22, 1
    %p150 = por %p148, %p149
    %p152 = scmp.ne.s32.totalorder %s137, %s151
    %p153 = scmp.eq.s32.totalorder %s22, 0
    %p154 = por %p152, %p153
    %s156 = sadd.s32 %s155, 1
    %p159 = scmp.eq.s32.totalorder %s16, 1
    %p160 = scmp.ne.s32.totalorder %s155, %s157
    %p161 = scmp.eq.s32.totalorder %s16, 0
    %p162 = por %p160, %p161
    %p163 = scmp.ne.s32.totalorder %s155, %s157
    %p164 = scmp.eq.s32.totalorder %s21, 1
    %p165 = por %p163, %p164
    %p166 = scmp.ne.s32.totalorder %s157, %s158
    %p167 = scmp.eq.s32.totalorder %s21, 0
    %p168 = por %p166, %p167
    %p169 = scmp.ne.s32.totalorder %s157, %s158
    %p170 = scmp.eq.s32.totalorder %s22, 1
    %p171 = por %p169, %p170
    %p173 = scmp.ne.s32.totalorder %s158, %s172
    %p174 = scmp.eq.s32.totalorder %s22, 0
    %p175 = por %p173, %p174
    %s177 = sadd.s32 %s176, 1
    %p180 = scmp.eq.s32.totalorder %s16, 1
    %p181 = scmp.ne.s32.totalorder %s176, %s178
    %p182 = scmp.eq.s32.totalorder %s16, 0
    %p183 = por %p181, %p182
    %p184 = scmp.ne.s32.totalorder %s176, %s178
    %p185 = scmp.eq.s32.totalorder %s21, 1
    %p186 = por %p184, %p185
    %p187 = scmp.ne.s32.totalorder %s178, %s179
    %p188 = scmp.eq.s32.totalorder %s21, 0
    %p189 = por %p187, %p188
    %p190 = scmp.ne.s32.totalorder %s178, %s179
    %p191 = scmp.eq.s32.totalorder %s22, 1
    %p192 = por %p190, %p191
    %p194 = scmp.ne.s32.totalorder %s179, %s193
    %p195 = scmp.eq.s32.totalorder %s22, 0
    %p196 = por %p194, %p195
    %s198 = sadd.s32 %s197, 1
    %p201 = scmp.eq.s32.totalorder %s16, 1
    %p202 = scmp.ne.s32.totalorder %s197, %s199
    %p203 = scmp.eq.s32.totalorder %s16, 0
    %p204 = por %p202, %p203
    %p205 = scmp.ne.s32.totalorder %s197, %s199
    %p206 = scmp.eq.s32.totalorder %s21, 1
    %p207 = por %p205, %p206
    %p208 = scmp.ne.s32.totalorder %s199, %s200
    %p209 = scmp.eq.s32.totalorder %s21, 0
    %p210 = por %p208, %p209
    %p211 = scmp.ne.s32.totalorder %s199, %s200
    %p212 = scmp.eq.s32.totalorder %s22, 1
    %p213 = por %p211, %p212
    %p215 = scmp.ne.s32.totalorder %s200, %s214
    %p216 = scmp.eq.s32.totalorder %s22, 0
    %p217 = por %p215, %p216
    %s219 = sadd.s32 %s218, 1
    %p222 = scmp.eq.s32.totalorder %s16, 1
    %p223 = scmp.ne.s32.totalorder %s218, %s220
    %p224 = scmp.eq.s32.totalorder %s16, 0
    %p225 = por %p223, %p224
    %p226 = scmp.ne.s32.totalorder %s218, %s220
    %p227 = scmp.eq.s32.totalorder %s21, 1
    %p228 = por %p226, %p227
    %p229 = scmp.ne.s32.totalorder %s220, %s221
    %p230 = scmp.eq.s32.totalorder %s21, 0
    %p231 = por %p229, %p230
    %p232 = scmp.ne.s32.totalorder %s220, %s221
    %p233 = scmp.eq.s32.totalorder %s22, 1
    %p234 = por %p232, %p233
    %p236 = scmp.ne.s32.totalorder %s221, %s235
    %p237 = scmp.eq.s32.totalorder %s22, 0
    %p238 = por %p236, %p237
    %s239 = ssub.s32 %s16, %s23
    %p240 = scmp.eq.s32.totalorder %s239, 0
    %s242 = sadd.s32 %s241, 1
    %s243 = scalar_select %p240, %s241, %s242
    %p246 = pneg %p240
    %p247 = scmp.eq.s32.totalorder %s16, 1
    %p248 = por %p246, %p247
    %p249 = scmp.ne.s32.totalorder %s241, %s244
    %p250 = scmp.eq.s32.totalorder %s16, 0
    %p251 = por %p249, %p250
    %p252 = scmp.ne.s32.totalorder %s241, %s244
    %p253 = scmp.eq.s32.totalorder %s21, 1
    %p254 = por %p252, %p253
    %p255 = scmp.ne.s32.totalorder %s244, %s245
    %p256 = scmp.eq.s32.totalorder %s21, 0
    %p257 = por %p255, %p256
    %p258 = scmp.ne.s32.totalorder %s244, %s245
    %p259 = scmp.eq.s32.totalorder %s22, 1
    %p260 = por %p258, %p259
    %p262 = scmp.ne.s32.totalorder %s245, %s261
    %p263 = scmp.eq.s32.totalorder %s22, 0
    %p264 = por %p262, %p263
    %p265 = scmp.le.s32.totalorder 1, %s16
    %p266 = scmp.lt.s32.totalorder %s16, 3
    %p267 = pnand %p265, %p266
    %p268 = pneg %p267
    // Predicated region
    $region9: #{_lambda_.1} parent=5 // pred_check
      _
    $region10: #{_lambda_.1} parent=5 // pred_check_branch
      %270 = sbr.rel (%p267) target = $region12
    $region11: #{_lambda_.1} parent=5 // pred_region
      %s271 = ssub.s32 %s16, 1
      // Predicated region
      $region13: #{_lambda_.1} parent=11 // pred_check
        %p272 = pneg %p63
      $region14: #{_lambda_.1} parent=11 // pred_check_branch
        %274 = sbr.rel (%p272) target = $region16
      $region15: #{_lambda_.1} parent=11 // pred_region
        _
      $region16: #{_lambda_.1} parent=11 // pred_fallthru
        _
      // Predicated region
      $region17: #{_lambda_.1} parent=11 // pred_check
        %p275 = pneg %p84
      $region18: #{_lambda_.1} parent=11 // pred_check_branch
        %277 = sbr.rel (%p275) target = $region20
      $region19: #{_lambda_.1} parent=11 // pred_region
        _
      $region20: #{_lambda_.1} parent=11 // pred_fallthru
        _
      // Predicated region
      $region21: #{_lambda_.1} parent=11 // pred_check
        %p278 = pneg %p105
      $region22: #{_lambda_.1} parent=11 // pred_check_branch
        %280 = sbr.rel (%p278) target = $region24
      $region23: #{_lambda_.1} parent=11 // pred_region
        _
      $region24: #{_lambda_.1} parent=11 // pred_fallthru
        _
      // Predicated region
      $region25: #{_lambda_.1} parent=11 // pred_check
        %p281 = pneg %p126
      $region26: #{_lambda_.1} parent=11 // pred_check_branch
        %283 = sbr.rel (%p281) target = $region28
      $region27: #{_lambda_.1} parent=11 // pred_region
        _
      $region28: #{_lambda_.1} parent=11 // pred_fallthru
        _
      // Predicated region
      $region29: #{_lambda_.1} parent=11 // pred_check
        %p284 = pneg %p147
      $region30: #{_lambda_.1} parent=11 // pred_check_branch
        %286 = sbr.rel (%p284) target = $region32
      $region31: #{_lambda_.1} parent=11 // pred_region
        _
      $region32: #{_lambda_.1} parent=11 // pred_fallthru
        _
      // Predicated region
      $region33: #{_lambda_.1} parent=11 // pred_check
        %p287 = pneg %p168
      $region34: #{_lambda_.1} parent=11 // pred_check_branch
        %289 = sbr.rel (%p287) target = $region36
      $region35: #{_lambda_.1} parent=11 // pred_region
        _
      $region36: #{_lambda_.1} parent=11 // pred_fallthru
        _
      // Predicated region
      $region37: #{_lambda_.1} parent=11 // pred_check
        %p290 = pneg %p189
      $region38: #{_lambda_.1} parent=11 // pred_check_branch
        %292 = sbr.rel (%p290) target = $region40
      $region39: #{_lambda_.1} parent=11 // pred_region
        _
      $region40: #{_lambda_.1} parent=11 // pred_fallthru
        _
      // Predicated region
      $region41: #{_lambda_.1} parent=11 // pred_check
        %p293 = pneg %p210
      $region42: #{_lambda_.1} parent=11 // pred_check_branch
        %295 = sbr.rel (%p293) target = $region44
      $region43: #{_lambda_.1} parent=11 // pred_region
        _
      $region44: #{_lambda_.1} parent=11 // pred_fallthru
        _
      // Predicated region
      $region45: #{_lambda_.1} parent=11 // pred_check
        %p296 = pneg %p231
      $region46: #{_lambda_.1} parent=11 // pred_check_branch
        %298 = sbr.rel (%p296) target = $region48
      $region47: #{_lambda_.1} parent=11 // pred_region
        _
      $region48: #{_lambda_.1} parent=11 // pred_fallthru
        _
    $region12: #{_lambda_.1} parent=5 // pred_fallthru
      _
    %p299 = scmp.lt.s32.totalorder %s16, 2
    // Predicated region
    $region49: #{_lambda_.1} parent=5 // pred_check
      %p300 = pneg %p299
    $region50: #{_lambda_.1} parent=5 // pred_check_branch
      %302 = sbr.rel (%p300) target = $region52
    $region51: #{_lambda_.1} parent=5 // pred_region
      // Predicated region
      $region53: #{_lambda_.1} parent=51 // pred_check
        %p303 = pneg %p36
      $region54: #{_lambda_.1} parent=51 // pred_check_branch
        %305 = sbr.rel (%p303) target = $region56
      $region55: #{_lambda_.1} parent=51 // pred_region
        %p306 = scmp.lt.s32.totalorder %s16, 1
        %s307 = scalar_select %p306, %s16, 1
        %s308 = smul.addr %s307, 5
        %s309 = smul.addr %s308, 2
        %s310 = scalar_lea.vmem %s0, %s309
      $region56: #{_lambda_.1} parent=51 // pred_fallthru
        _
    $region52: #{_lambda_.1} parent=5 // pred_fallthru
      _
    %p311 = scmp.le.s32.totalorder 1, %s16
    %p312 = scmp.lt.s32.totalorder %s16, 3
    %p313 = pnand %p311, %p312
    %p314 = pneg %p313
    // Predicated region
    $region57: #{_lambda_.1} parent=5 // pred_check
      _
    $region58: #{_lambda_.1} parent=5 // pred_check_branch
      %316 = sbr.rel (%p313) target = $region60
    $region59: #{_lambda_.1} parent=5 // pred_region
      %s317 = ssub.s32 %s16, 1
      %p318 = scmp.lt.s32.totalorder %s21, 1
      %s319 = scalar_select %p318, %s21, 1
      %s320 = smul.addr %s319, 5
      %s321 = smul.addr %s320, 2
      %s322 = scalar_lea.vmem %s0, %s321
      %p323 = pneg %p42
      %p324 = pneg %p39
      %p325 = pneg %p63
      %p326 = pneg %p60
      %p327 = pneg %p84
      %p328 = pneg %p81
      %p329 = pneg %p105
      %p330 = pneg %p102
      %p331 = pneg %p126
      %p332 = pneg %p123
      %p333 = pneg %p147
      %p334 = pneg %p144
      %p335 = pneg %p168
      %p336 = pneg %p165
      %p337 = pneg %p189
      %p338 = pneg %p186
      %p339 = pneg %p210
      %p340 = pneg %p207
      %p341 = pneg %p231
      %p342 = pneg %p228
      %p343 = pneg %p257
      %p344 = pneg %p254
      %p345 = scmp.lt.s32.totalorder %s21, 1
      %s346 = scalar_select %p345, %s21, 1
      %s347 = smul.addr %s346, 6
      %s348 = smul.addr %s347, 8
      %s349 = scalar_lea.vmem %s10, %s348
      %p350 = scmp.lt.s32.totalorder %s21, 1
      %s351 = scalar_select %p350, %s21, 1
      %s352 = smul.addr %s351, 5
      %s353 = smul.addr %s352, 2
      %s354 = scalar_lea.vmem %s0, %s353
      %p355 = scmp.lt.s32.totalorder %s21, 1
      %s356 = scalar_select %p355, %s21, 1
      %s357 = smul.addr %s356, 6
      %s358 = smul.addr %s357, 8
      %s359 = scalar_lea.vmem %s10, %s358
      %v361 = vld [vmem:[%s9] sm:$0x7]
      %vm362 = vcmask 584704
      %363 = vst.msk [vmem:[#allocation6] sm:$0xf] %vm362, 0
      %vm364 = vcmask 1044032
      %vm365 = vcmask 130052
      %vm366 = vmor %vm365, %vm364
      %367 = vst.msk [vmem:[#allocation6 + $0xc] sm:$0xff] %vm366, 0
      %vm368 = vcmask 582656
      %369 = vst.msk [vmem:[#allocation7] sm:$0x3] %vm368, 0
      %vm370 = vcmask 1041984
      %vm371 = vcmask 125954
      %vm372 = vmor %vm371, %vm370
      %373 = vst.msk [vmem:[#allocation7 + $0x6] sm:$0xf] %vm372, 0
      %vm374 = vcmask 588800
      %375 = vst.msk [vmem:[#allocation8] sm:$0xff] %vm374, 0
      %vm376 = vcmask 1048128
      %377 = vst.msk [vmem:[#allocation8 + $0x18] sm:$0xff] %vm376, 0
      %vm378 = vcmask 130048
      %379 = vst.msk [vmem:[#allocation8 + $0x20] sm:$0xff] %vm378, 0
      %v380 = vld [vmem:[%s354] sm:$0xff]
      %v382 = vcombine.high %v380, %v380
      %v384 = vunpack.c.l.s4 1983009808
      %v385 = vunpack.c.0.s8 %v384
      %v386 = vlaneseq
      %v387 = vshrl.u32 %v386, 7
      %v388 = vsub.s32 %v385, %v387
      %v389 = vrot.slane %v380, %v388
      %v391 = vunpack.c.l.s4 1983009808
      %v392 = vunpack.c.0.s8 %v391
      %v393 = vlaneseq
      %v394 = vshrl.u32 %v393, 7
      %v395 = vsub.s32 %v392, %v394
      %v396 = vrot.slane %v382, %v395
      %397 = vrot.lane.b32.xlu0 %v389, 106
      %v398 = vpop.permute.xlu0 %397
      %399 = vrot.lane.b32.xlu0 %v396, 106
      %v400 = vpop.permute.xlu0 %399
      %v401 = vrot.slane %v398, 4
      %v402 = vrot.slane %v400, 4
      %vm403 = vcmask 1043456
      %v404 = vsel %vm403, %v401, %v402
      %vm405 = vcmask 867328
      %v406 = vsel %vm405, %v398, %v404
      %v407 = vsel %vm405, %v400, %v402
      %410 = vst [vmem:[#allocation2] sm:$0x33] %v406
      %411 = vst [vmem:[#allocation2 + $0x8] sm:$0x3] %v407
      %v412 = vld [vmem:[%s354] sm:$0xff]
      %v414 = vcombine.low %v412, %v412
      %v416 = vunpack.c.l.s4 1983009808
      %v417 = vunpack.c.0.s8 %v416
      %v418 = vlaneseq
      %v419 = vshrl.u32 %v418, 7
      %v420 = vsub.s32 %v417, %v419
      %v421 = vrot.slane %v414, %v420
      %v423 = vunpack.c.l.s4 1983009808
      %v424 = vunpack.c.0.s8 %v423
      %v425 = vlaneseq
      %v426 = vshrl.u32 %v425, 7
      %v427 = vsub.s32 %v424, %v426
      %v428 = vrot.slane %v412, %v427
      %429 = vrot.lane.b32.xlu0 %v421, 105
      %v430 = vpop.permute.xlu0 %429
      %431 = vrot.lane.b32.xlu0 %v428, 105
      %v432 = vpop.permute.xlu0 %431
      %v433 = vrot.slane %v430, 4
      %v434 = vrot.slane %v432, 4
      %v435 = vsel %vm403, %v433, %v434
      %vm436 = vcmask 859136
      %v437 = vsel %vm436, %v430, %v435
      %v438 = vsel %vm436, %v432, %v434
      %441 = vst [vmem:[#allocation2] sm:$0xcc] %v437
      %442 = vst [vmem:[#allocation2 + $0x8] sm:$0xc] %v438
      %v443 = vld [vmem:[%s354] sm:$0xff]
      %v445 = vcombine.high %v443, %v443
      %v447 = vunpack.c.l.s4 1983009808
      %v448 = vunpack.c.0.s8 %v447
      %v449 = vlaneseq
      %v450 = vshrl.u32 %v449, 7
      %v451 = vsub.s32 %v448, %v450
      %v452 = vrot.slane %v443, %v451
      %v454 = vunpack.c.l.s4 1983009808
      %v455 = vunpack.c.0.s8 %v454
      %v456 = vlaneseq
      %v457 = vshrl.u32 %v456, 7
      %v458 = vsub.s32 %v455, %v457
      %v459 = vrot.slane %v445, %v458
      %460 = vrot.lane.b32.xlu0 %v452, 104
      %v461 = vpop.permute.xlu0 %460
      %462 = vrot.lane.b32.xlu0 %v459, 104
      %v463 = vpop.permute.xlu0 %462
      %v464 = vrot.slane %v461, 4
      %v465 = vrot.slane %v463, 4
      %v466 = vsel %vm403, %v464, %v465
      %vm467 = vcmask 850944
      %v468 = vsel %vm467, %v461, %v466
      %v469 = vsel %vm467, %v463, %v465
      %472 = vst [vmem:[#allocation2 + $0xc] sm:$0x33] %v468
      %473 = vst [vmem:[#allocation2 + $0x14] sm:$0x3] %v469
      %v474 = vld [vmem:[%s354] sm:$0xff]
      %v476 = vcombine.low %v474, %v474
      %v478 = vunpack.c.l.s4 1983009808
      %v479 = vunpack.c.0.s8 %v478
      %v480 = vlaneseq
      %v481 = vshrl.u32 %v480, 7
      %v482 = vsub.s32 %v479, %v481
      %v483 = vrot.slane %v476, %v482
      %v485 = vunpack.c.l.s4 1983009808
      %v486 = vunpack.c.0.s8 %v485
      %v487 = vlaneseq
      %v488 = vshrl.u32 %v487, 7
      %v489 = vsub.s32 %v486, %v488
      %v490 = vrot.slane %v474, %v489
      %491 = vrot.lane.b32.xlu0 %v483, 103
      %v492 = vpop.permute.xlu0 %491
      %493 = vrot.lane.b32.xlu0 %v490, 103
      %v494 = vpop.permute.xlu0 %493
      %v495 = vrot.slane %v492, 4
      %v496 = vrot.slane %v494, 4
      %v497 = vsel %vm403, %v495, %v496
      %vm498 = vcmask 842752
      %v499 = vsel %vm498, %v492, %v497
      %v500 = vsel %vm498, %v494, %v496
      %503 = vst [vmem:[#allocation2 + $0xc] sm:$0xcc] %v499
      %504 = vst [vmem:[#allocation2 + $0x14] sm:$0xc] %v500
      %v505 = vld [vmem:[%s354] sm:$0xff]
      %v507 = vcombine.high %v505, %v505
      %v509 = vunpack.c.l.s4 1983009808
      %v510 = vunpack.c.0.s8 %v509
      %v511 = vlaneseq
      %v512 = vshrl.u32 %v511, 7
      %v513 = vsub.s32 %v510, %v512
      %v514 = vrot.slane %v505, %v513
      %v516 = vunpack.c.l.s4 1983009808
      %v517 = vunpack.c.0.s8 %v516
      %v518 = vlaneseq
      %v519 = vshrl.u32 %v518, 7
      %v520 = vsub.s32 %v517, %v519
      %v521 = vrot.slane %v507, %v520
      %522 = vrot.lane.b32.xlu0 %v514, 102
      %v523 = vpop.permute.xlu0 %522
      %524 = vrot.lane.b32.xlu0 %v521, 102
      %v525 = vpop.permute.xlu0 %524
      %v526 = vrot.slane %v523, 4
      %v527 = vrot.slane %v525, 4
      %v528 = vsel %vm403, %v526, %v527
      %vm529 = vcmask 834560
      %v530 = vsel %vm529, %v523, %v528
      %v531 = vsel %vm529, %v525, %v527
      %534 = vst [vmem:[#allocation2 + $0x18] sm:$0x33] %v530
      %535 = vst [vmem:[#allocation2 + $0x20] sm:$0x3] %v531
      %v536 = vld [vmem:[%s354] sm:$0xff]
      %v538 = vcombine.low %v536, %v536
      %v540 = vunpack.c.l.s4 1983009808
      %v541 = vunpack.c.0.s8 %v540
      %v542 = vlaneseq
      %v543 = vshrl.u32 %v542, 7
      %v544 = vsub.s32 %v541, %v543
      %v545 = vrot.slane %v538, %v544
      %v547 = vunpack.c.l.s4 1983009808
      %v548 = vunpack.c.0.s8 %v547
      %v549 = vlaneseq
      %v550 = vshrl.u32 %v549, 7
      %v551 = vsub.s32 %v548, %v550
      %v552 = vrot.slane %v536, %v551
      %553 = vrot.lane.b32.xlu0 %v545, 82
      %v554 = vpop.permute.xlu0 %553
      %555 = vrot.lane.b32.xlu0 %v552, 82
      %v556 = vpop.permute.xlu0 %555
      %v557 = vrot.slane %v554, 4
      %v558 = vrot.slane %v556, 4
      %v559 = vsel %vm403, %v557, %v558
      %vm560 = vcmask 670720
      %v561 = vsel %vm560, %v554, %v559
      %v562 = vsel %vm560, %v556, %v558
      %565 = vst [vmem:[#allocation2 + $0x18] sm:$0xcc] %v561
      %566 = vst [vmem:[#allocation2 + $0x20] sm:$0xc] %v562
      %v567 = vld [vmem:[%s354] sm:$0xff]
      %v569 = vcombine.high %v567, %v567
      %v571 = vunpack.c.l.s4 1983009808
      %v572 = vunpack.c.0.s8 %v571
      %v573 = vlaneseq
      %v574 = vshrl.u32 %v573, 7
      %v575 = vsub.s32 %v572, %v574
      %v576 = vrot.slane %v567, %v575
      %v578 = vunpack.c.l.s4 1983009808
      %v579 = vunpack.c.0.s8 %v578
      %v580 = vlaneseq
      %v581 = vshrl.u32 %v580, 7
      %v582 = vsub.s32 %v579, %v581
      %v583 = vrot.slane %v569, %v582
      %584 = vrot.lane.b32.xlu0 %v576, 81
      %v585 = vpop.permute.xlu0 %584
      %586 = vrot.lane.b32.xlu0 %v583, 81
      %v587 = vpop.permute.xlu0 %586
      %v588 = vrot.slane %v585, 4
      %v589 = vrot.slane %v587, 4
      %v590 = vsel %vm403, %v588, %v589
      %vm591 = vcmask 662528
      %v592 = vsel %vm591, %v585, %v590
      %v593 = vsel %vm591, %v587, %v589
      %596 = vst [vmem:[#allocation2 + $0x24] sm:$0x33] %v592
      %597 = vst [vmem:[#allocation2 + $0x2c] sm:$0x3] %v593
      %v598 = vld [vmem:[%s354] sm:$0xff]
      %v600 = vcombine.low %v598, %v598
      %v602 = vunpack.c.l.s4 1983009808
      %v603 = vunpack.c.0.s8 %v602
      %v604 = vlaneseq
      %v605 = vshrl.u32 %v604, 7
      %v606 = vsub.s32 %v603, %v605
      %v607 = vrot.slane %v600, %v606
      %v609 = vunpack.c.l.s4 1983009808
      %v610 = vunpack.c.0.s8 %v609
      %v611 = vlaneseq
      %v612 = vshrl.u32 %v611, 7
      %v613 = vsub.s32 %v610, %v612
      %v614 = vrot.slane %v598, %v613
      %615 = vrot.lane.b32.xlu0 %v607, 80
      %v616 = vpop.permute.xlu0 %615
      %617 = vrot.lane.b32.xlu0 %v614, 80
      %v618 = vpop.permute.xlu0 %617
      %v619 = vrot.slane %v616, 4
      %v620 = vrot.slane %v618, 4
      %v621 = vsel %vm403, %v619, %v620
      %vm622 = vcmask 654336
      %v623 = vsel %vm622, %v616, %v621
      %v624 = vsel %vm622, %v618, %v620
      %627 = vst [vmem:[#allocation2 + $0x24] sm:$0xcc] %v623
      %628 = vst [vmem:[#allocation2 + $0x2c] sm:$0xc] %v624
      %v629 = vld [vmem:[%s354] sm:$0xff]
      %v631 = vcombine.high %v629, %v629
      %v633 = vunpack.c.l.s4 1983009808
      %v634 = vunpack.c.0.s8 %v633
      %v635 = vlaneseq
      %v636 = vshrl.u32 %v635, 7
      %v637 = vsub.s32 %v634, %v636
      %v638 = vrot.slane %v629, %v637
      %v640 = vunpack.c.l.s4 1983009808
      %v641 = vunpack.c.0.s8 %v640
      %v642 = vlaneseq
      %v643 = vshrl.u32 %v642, 7
      %v644 = vsub.s32 %v641, %v643
      %v645 = vrot.slane %v631, %v644
      %646 = vrot.lane.b32.xlu0 %v638, 79
      %v647 = vpop.permute.xlu0 %646
      %648 = vrot.lane.b32.xlu0 %v645, 79
      %v649 = vpop.permute.xlu0 %648
      %v650 = vrot.slane %v647, 4
      %v651 = vrot.slane %v649, 4
      %v652 = vsel %vm403, %v650, %v651
      %vm653 = vcmask 646144
      %v654 = vsel %vm653, %v647, %v652
      %v655 = vsel %vm653, %v649, %v651
      %658 = vst [vmem:[#allocation2 + $0x30] sm:$0x33] %v654
      %659 = vst [vmem:[#allocation2 + $0x38] sm:$0x3] %v655
      %v660 = vld [vmem:[%s354] sm:$0xff]
      %v662 = vcombine.low %v660, %v660
      %v664 = vunpack.c.l.s4 1983009808
      %v665 = vunpack.c.0.s8 %v664
      %v666 = vlaneseq
      %v667 = vshrl.u32 %v666, 7
      %v668 = vsub.s32 %v665, %v667
      %v669 = vrot.slane %v662, %v668
      %v671 = vunpack.c.l.s4 1983009808
      %v672 = vunpack.c.0.s8 %v671
      %v673 = vlaneseq
      %v674 = vshrl.u32 %v673, 7
      %v675 = vsub.s32 %v672, %v674
      %v676 = vrot.slane %v660, %v675
      %677 = vrot.lane.b32.xlu0 %v669, 78
      %v678 = vpop.permute.xlu0 %677
      %679 = vrot.lane.b32.xlu0 %v676, 78
      %v680 = vpop.permute.xlu0 %679
      %v681 = vrot.slane %v678, 4
      %v682 = vrot.slane %v680, 4
      %v683 = vsel %vm403, %v681, %v682
      %vm684 = vcmask 637952
      %v685 = vsel %vm684, %v678, %v683
      %v686 = vsel %vm684, %v680, %v682
      %689 = vst [vmem:[#allocation2 + $0x30] sm:$0xcc] %v685
      %690 = vst [vmem:[#allocation2 + $0x38] sm:$0xc] %v686
      %v691 = vld [vmem:[%s354] sm:$0xff]
      %v693 = vcombine.high %v691, %v691
      %v695 = vunpack.c.l.s4 1983009808
      %v696 = vunpack.c.0.s8 %v695
      %v697 = vlaneseq
      %v698 = vshrl.u32 %v697, 7
      %v699 = vsub.s32 %v696, %v698
      %v700 = vrot.slane %v691, %v699
      %v702 = vunpack.c.l.s4 1983009808
      %v703 = vunpack.c.0.s8 %v702
      %v704 = vlaneseq
      %v705 = vshrl.u32 %v704, 7
      %v706 = vsub.s32 %v703, %v705
      %v707 = vrot.slane %v693, %v706
      %708 = vrot.lane.b32.xlu0 %v700, 58
      %v709 = vpop.permute.xlu0 %708
      %710 = vrot.lane.b32.xlu0 %v707, 58
      %v711 = vpop.permute.xlu0 %710
      %v712 = vrot.slane %v709, 4
      %v713 = vrot.slane %v711, 4
      %v714 = vsel %vm403, %v712, %v713
      %vm715 = vcmask 474112
      %v716 = vsel %vm715, %v709, %v714
      %v717 = vsel %vm715, %v711, %v713
      %720 = vst [vmem:[#allocation2 + $0x3c] sm:$0x33] %v716
      %721 = vst [vmem:[#allocation2 + $0x44] sm:$0x3] %v717
      %v722 = vld [vmem:[%s354] sm:$0xff]
      %v724 = vcombine.low %v722, %v722
      %v726 = vunpack.c.l.s4 1983009808
      %v727 = vunpack.c.0.s8 %v726
      %v728 = vlaneseq
      %v729 = vshrl.u32 %v728, 7
      %v730 = vsub.s32 %v727, %v729
      %v731 = vrot.slane %v724, %v730
      %v733 = vunpack.c.l.s4 1983009808
      %v734 = vunpack.c.0.s8 %v733
      %v735 = vlaneseq
      %v736 = vshrl.u32 %v735, 7
      %v737 = vsub.s32 %v734, %v736
      %v738 = vrot.slane %v722, %v737
      %739 = vrot.lane.b32.xlu0 %v731, 57
      %v740 = vpop.permute.xlu0 %739
      %741 = vrot.lane.b32.xlu0 %v738, 57
      %v742 = vpop.permute.xlu0 %741
      %v743 = vrot.slane %v740, 4
      %v744 = vrot.slane %v742, 4
      %v745 = vsel %vm403, %v743, %v744
      %vm746 = vcmask 465920
      %v747 = vsel %vm746, %v740, %v745
      %v748 = vsel %vm746, %v742, %v744
      %751 = vst [vmem:[#allocation2 + $0x3c] sm:$0xcc] %v747
      %752 = vst [vmem:[#allocation2 + $0x44] sm:$0xc] %v748
      %v753 = vld [vmem:[%s354] sm:$0xff]
      %v755 = vcombine.high %v753, %v753
      %v757 = vunpack.c.l.s4 1983009808
      %v758 = vunpack.c.0.s8 %v757
      %v759 = vlaneseq
      %v760 = vshrl.u32 %v759, 7
      %v761 = vsub.s32 %v758, %v760
      %v762 = vrot.slane %v753, %v761
      %v764 = vunpack.c.l.s4 1983009808
      %v765 = vunpack.c.0.s8 %v764
      %v766 = vlaneseq
      %v767 = vshrl.u32 %v766, 7
      %v768 = vsub.s32 %v765, %v767
      %v769 = vrot.slane %v755, %v768
      %770 = vrot.lane.b32.xlu0 %v762, 56
      %v771 = vpop.permute.xlu0 %770
      %772 = vrot.lane.b32.xlu0 %v769, 56
      %v773 = vpop.permute.xlu0 %772
      %v774 = vrot.slane %v771, 4
      %v775 = vrot.slane %v773, 4
      %v776 = vsel %vm403, %v774, %v775
      %vm777 = vcmask 457728
      %v778 = vsel %vm777, %v771, %v776
      %v779 = vsel %vm777, %v773, %v775
      %782 = vst [vmem:[#allocation2 + $0x48] sm:$0x33] %v778
      %783 = vst [vmem:[#allocation2 + $0x50] sm:$0x3] %v779
      %v784 = vld [vmem:[%s354] sm:$0xff]
      %v786 = vcombine.low %v784, %v784
      %v788 = vunpack.c.l.s4 1983009808
      %v789 = vunpack.c.0.s8 %v788
      %v790 = vlaneseq
      %v791 = vshrl.u32 %v790, 7
      %v792 = vsub.s32 %v789, %v791
      %v793 = vrot.slane %v786, %v792
      %v795 = vunpack.c.l.s4 1983009808
      %v796 = vunpack.c.0.s8 %v795
      %v797 = vlaneseq
      %v798 = vshrl.u32 %v797, 7
      %v799 = vsub.s32 %v796, %v798
      %v800 = vrot.slane %v784, %v799
      %801 = vrot.lane.b32.xlu0 %v793, 55
      %v802 = vpop.permute.xlu0 %801
      %803 = vrot.lane.b32.xlu0 %v800, 55
      %v804 = vpop.permute.xlu0 %803
      %v805 = vrot.slane %v802, 4
      %v806 = vrot.slane %v804, 4
      %v807 = vsel %vm403, %v805, %v806
      %vm808 = vcmask 449536
      %v809 = vsel %vm808, %v802, %v807
      %v810 = vsel %vm808, %v804, %v806
      %813 = vst [vmem:[#allocation2 + $0x48] sm:$0xcc] %v809
      %814 = vst [vmem:[#allocation2 + $0x50] sm:$0xc] %v810
      %v815 = vld [vmem:[%s354] sm:$0xff]
      %v817 = vcombine.high %v815, %v815
      %v819 = vunpack.c.l.s4 1983009808
      %v820 = vunpack.c.0.s8 %v819
      %v821 = vlaneseq
      %v822 = vshrl.u32 %v821, 7
      %v823 = vsub.s32 %v820, %v822
      %v824 = vrot.slane %v815, %v823
      %v826 = vunpack.c.l.s4 1983009808
      %v827 = vunpack.c.0.s8 %v826
      %v828 = vlaneseq
      %v829 = vshrl.u32 %v828, 7
      %v830 = vsub.s32 %v827, %v829
      %v831 = vrot.slane %v817, %v830
      %832 = vrot.lane.b32.xlu0 %v824, 54
      %v833 = vpop.permute.xlu0 %832
      %834 = vrot.lane.b32.xlu0 %v831, 54
      %v835 = vpop.permute.xlu0 %834
      %v836 = vrot.slane %v833, 4
      %v837 = vrot.slane %v835, 4
      %v838 = vsel %vm403, %v836, %v837
      %vm839 = vcmask 441344
      %v840 = vsel %vm839, %v833, %v838
      %v841 = vsel %vm839, %v835, %v837
      %844 = vst [vmem:[#allocation2 + $0x54] sm:$0x33] %v840
      %845 = vst [vmem:[#allocation2 + $0x5c] sm:$0x3] %v841
      %v846 = vld [vmem:[%s354] sm:$0xff]
      %v848 = vcombine.low %v846, %v846
      %v850 = vunpack.c.l.s4 1983009808
      %v851 = vunpack.c.0.s8 %v850
      %v852 = vlaneseq
      %v853 = vshrl.u32 %v852, 7
      %v854 = vsub.s32 %v851, %v853
      %v855 = vrot.slane %v848, %v854
      %v857 = vunpack.c.l.s4 1983009808
      %v858 = vunpack.c.0.s8 %v857
      %v859 = vlaneseq
      %v860 = vshrl.u32 %v859, 7
      %v861 = vsub.s32 %v858, %v860
      %v862 = vrot.slane %v846, %v861
      %863 = vrot.lane.b32.xlu0 %v855, 34
      %v864 = vpop.permute.xlu0 %863
      %865 = vrot.lane.b32.xlu0 %v862, 34
      %v866 = vpop.permute.xlu0 %865
      %v867 = vrot.slane %v864, 4
      %v868 = vrot.slane %v866, 4
      %v869 = vsel %vm403, %v867, %v868
      %vm870 = vcmask 277504
      %v871 = vsel %vm870, %v864, %v869
      %v872 = vsel %vm870, %v866, %v868
      %875 = vst [vmem:[#allocation2 + $0x54] sm:$0xcc] %v871
      %876 = vst [vmem:[#allocation2 + $0x5c] sm:$0xc] %v872
      %v877 = vld [vmem:[%s354] sm:$0xff]
      %v879 = vcombine.high %v877, %v877
      %v881 = vunpack.c.l.s4 1983009808
      %v882 = vunpack.c.0.s8 %v881
      %v883 = vlaneseq
      %v884 = vshrl.u32 %v883, 7
      %v885 = vsub.s32 %v882, %v884
      %v886 = vrot.slane %v877, %v885
      %v888 = vunpack.c.l.s4 1983009808
      %v889 = vunpack.c.0.s8 %v888
      %v890 = vlaneseq
      %v891 = vshrl.u32 %v890, 7
      %v892 = vsub.s32 %v889, %v891
      %v893 = vrot.slane %v879, %v892
      %894 = vrot.lane.b32.xlu0 %v886, 33
      %v895 = vpop.permute.xlu0 %894
      %896 = vrot.lane.b32.xlu0 %v893, 33
      %v897 = vpop.permute.xlu0 %896
      %v898 = vrot.slane %v895, 4
      %v899 = vrot.slane %v897, 4
      %v900 = vsel %vm403, %v898, %v899
      %vm901 = vcmask 269312
      %v902 = vsel %vm901, %v895, %v900
      %v903 = vsel %vm901, %v897, %v899
      %906 = vst [vmem:[#allocation2 + $0x60] sm:$0x33] %v902
      %907 = vst [vmem:[#allocation2 + $0x68] sm:$0x3] %v903
      %v908 = vld [vmem:[%s354] sm:$0xff]
      %v910 = vcombine.low %v908, %v908
      %v912 = vunpack.c.l.s4 1983009808
      %v913 = vunpack.c.0.s8 %v912
      %v914 = vlaneseq
      %v915 = vshrl.u32 %v914, 7
      %v916 = vsub.s32 %v913, %v915
      %v917 = vrot.slane %v910, %v916
      %v919 = vunpack.c.l.s4 1983009808
      %v920 = vunpack.c.0.s8 %v919
      %v921 = vlaneseq
      %v922 = vshrl.u32 %v921, 7
      %v923 = vsub.s32 %v920, %v922
      %v924 = vrot.slane %v908, %v923
      %925 = vrot.lane.b32.xlu0 %v917, 32
      %v926 = vpop.permute.xlu0 %925
      %927 = vrot.lane.b32.xlu0 %v924, 32
      %v928 = vpop.permute.xlu0 %927
      %v929 = vrot.slane %v926, 4
      %v930 = vrot.slane %v928, 4
      %v931 = vsel %vm403, %v929, %v930
      %vm932 = vcmask 261120
      %v933 = vsel %vm932, %v926, %v931
      %v934 = vsel %vm932, %v928, %v930
      %937 = vst [vmem:[#allocation2 + $0x60] sm:$0xcc] %v933
      %938 = vst [vmem:[#allocation2 + $0x68] sm:$0xc] %v934
      %v939 = vld [vmem:[%s354] sm:$0xff]
      %v941 = vcombine.high %v939, %v939
      %v943 = vunpack.c.l.s4 1983009808
      %v944 = vunpack.c.0.s8 %v943
      %v945 = vlaneseq
      %v946 = vshrl.u32 %v945, 7
      %v947 = vsub.s32 %v944, %v946
      %v948 = vrot.slane %v939, %v947
      %v950 = vunpack.c.l.s4 1983009808
      %v951 = vunpack.c.0.s8 %v950
      %v952 = vlaneseq
      %v953 = vshrl.u32 %v952, 7
      %v954 = vsub.s32 %v951, %v953
      %v955 = vrot.slane %v941, %v954
      %956 = vrot.lane.b32.xlu0 %v948, 31
      %v957 = vpop.permute.xlu0 %956
      %958 = vrot.lane.b32.xlu0 %v955, 31
      %v959 = vpop.permute.xlu0 %958
      %v960 = vrot.slane %v957, 4
      %v961 = vrot.slane %v959, 4
      %v962 = vsel %vm403, %v960, %v961
      %vm963 = vcmask 252928
      %v964 = vsel %vm963, %v957, %v962
      %v965 = vsel %vm963, %v959, %v961
      %968 = vst [vmem:[#allocation2 + $0x6c] sm:$0x33] %v964
      %969 = vst [vmem:[#allocation2 + $0x74] sm:$0x3] %v965
      %v970 = vld [vmem:[%s354] sm:$0xff]
      %v972 = vcombine.low %v970, %v970
      %v974 = vunpack.c.l.s4 1983009808
      %v975 = vunpack.c.0.s8 %v974
      %v976 = vlaneseq
      %v977 = vshrl.u32 %v976, 7
      %v978 = vsub.s32 %v975, %v977
      %v979 = vrot.slane %v972, %v978
      %v981 = vunpack.c.l.s4 1983009808
      %v982 = vunpack.c.0.s8 %v981
      %v983 = vlaneseq
      %v984 = vshrl.u32 %v983, 7
      %v985 = vsub.s32 %v982, %v984
      %v986 = vrot.slane %v970, %v985
      %987 = vrot.lane.b32.xlu0 %v979, 30
      %v988 = vpop.permute.xlu0 %987
      %989 = vrot.lane.b32.xlu0 %v986, 30
      %v990 = vpop.permute.xlu0 %989
      %v991 = vrot.slane %v988, 4
      %v992 = vrot.slane %v990, 4
      %v993 = vsel %vm403, %v991, %v992
      %vm994 = vcmask 244736
      %v995 = vsel %vm994, %v988, %v993
      %v996 = vsel %vm994, %v990, %v992
      %999 = vst [vmem:[#allocation2 + $0x6c] sm:$0xcc] %v995
      %1000 = vst [vmem:[#allocation2 + $0x74] sm:$0xc] %v996
      %v1001 = vld [vmem:[%s354] sm:$0xff]
      %v1003 = vcombine.high %v1001, %v1001
      %v1005 = vunpack.c.l.s4 1983009808
      %v1006 = vunpack.c.0.s8 %v1005
      %v1007 = vlaneseq
      %v1008 = vshrl.u32 %v1007, 7
      %v1009 = vsub.s32 %v1006, %v1008
      %v1010 = vrot.slane %v1001, %v1009
      %v1012 = vunpack.c.l.s4 1983009808
      %v1013 = vunpack.c.0.s8 %v1012
      %v1014 = vlaneseq
      %v1015 = vshrl.u32 %v1014, 7
      %v1016 = vsub.s32 %v1013, %v1015
      %v1017 = vrot.slane %v1003, %v1016
      %1018 = vrot.lane.b32.xlu0 %v1010, 10
      %v1019 = vpop.permute.xlu0 %1018
      %1020 = vrot.lane.b32.xlu0 %v1017, 10
      %v1021 = vpop.permute.xlu0 %1020
      %v1022 = vrot.slane %v1019, 4
      %v1023 = vrot.slane %v1021, 4
      %v1024 = vsel %vm403, %v1022, %v1023
      %vm1025 = vcmask 80896
      %v1026 = vsel %vm1025, %v1019, %v1024
      %v1027 = vsel %vm1025, %v1021, %v1023
      %1030 = vst [vmem:[#allocation2 + $0x78] sm:$0x33] %v1026
      %1031 = vst [vmem:[#allocation2 + $0x80] sm:$0x3] %v1027
      %v1032 = vld [vmem:[%s354] sm:$0xff]
      %v1034 = vcombine.low %v1032, %v1032
      %v1036 = vunpack.c.l.s4 1983009808
      %v1037 = vunpack.c.0.s8 %v1036
      %v1038 = vlaneseq
      %v1039 = vshrl.u32 %v1038, 7
      %v1040 = vsub.s32 %v1037, %v1039
      %v1041 = vrot.slane %v1034, %v1040
      %v1043 = vunpack.c.l.s4 1983009808
      %v1044 = vunpack.c.0.s8 %v1043
      %v1045 = vlaneseq
      %v1046 = vshrl.u32 %v1045, 7
      %v1047 = vsub.s32 %v1044, %v1046
      %v1048 = vrot.slane %v1032, %v1047
      %1049 = vrot.lane.b32.xlu0 %v1041, 9
      %v1050 = vpop.permute.xlu0 %1049
      %1051 = vrot.lane.b32.xlu0 %v1048, 9
      %v1052 = vpop.permute.xlu0 %1051
      %v1053 = vrot.slane %v1050, 4
      %v1054 = vrot.slane %v1052, 4
      %v1055 = vsel %vm403, %v1053, %v1054
      %vm1056 = vcmask 72704
      %v1057 = vsel %vm1056, %v1050, %v1055
      %v1058 = vsel %vm1056, %v1052, %v1054
      %1061 = vst [vmem:[#allocation2 + $0x78] sm:$0xcc] %v1057
      %1062 = vst [vmem:[#allocation2 + $0x80] sm:$0xc] %v1058
      %v1063 = vld [vmem:[%s354] sm:$0xff]
      %v1065 = vcombine.high %v1063, %v1063
      %v1067 = vunpack.c.l.s4 1983009808
      %v1068 = vunpack.c.0.s8 %v1067
      %v1069 = vlaneseq
      %v1070 = vshrl.u32 %v1069, 7
      %v1071 = vsub.s32 %v1068, %v1070
      %v1072 = vrot.slane %v1063, %v1071
      %v1074 = vunpack.c.l.s4 1983009808
      %v1075 = vunpack.c.0.s8 %v1074
      %v1076 = vlaneseq
      %v1077 = vshrl.u32 %v1076, 7
      %v1078 = vsub.s32 %v1075, %v1077
      %v1079 = vrot.slane %v1065, %v1078
      %1080 = vrot.lane.b32.xlu0 %v1072, 8
      %v1081 = vpop.permute.xlu0 %1080
      %1082 = vrot.lane.b32.xlu0 %v1079, 8
      %v1083 = vpop.permute.xlu0 %1082
      %v1084 = vrot.slane %v1081, 4
      %v1085 = vrot.slane %v1083, 4
      %v1086 = vsel %vm403, %v1084, %v1085
      %vm1087 = vcmask 64512
      %v1088 = vsel %vm1087, %v1081, %v1086
      %v1089 = vsel %vm1087, %v1083, %v1085
      %1092 = vst [vmem:[#allocation2 + $0x84] sm:$0x33] %v1088
      %1093 = vst [vmem:[#allocation2 + $0x8c] sm:$0x3] %v1089
      %v1094 = vld [vmem:[%s354] sm:$0xff]
      %v1096 = vcombine.low %v1094, %v1094
      %v1098 = vunpack.c.l.s4 1983009808
      %v1099 = vunpack.c.0.s8 %v1098
      %v1100 = vlaneseq
      %v1101 = vshrl.u32 %v1100, 7
      %v1102 = vsub.s32 %v1099, %v1101
      %v1103 = vrot.slane %v1096, %v1102
      %v1105 = vunpack.c.l.s4 1983009808
      %v1106 = vunpack.c.0.s8 %v1105
      %v1107 = vlaneseq
      %v1108 = vshrl.u32 %v1107, 7
      %v1109 = vsub.s32 %v1106, %v1108
      %v1110 = vrot.slane %v1094, %v1109
      %1111 = vrot.lane.b32.xlu0 %v1103, 7
      %v1112 = vpop.permute.xlu0 %1111
      %1113 = vrot.lane.b32.xlu0 %v1110, 7
      %v1114 = vpop.permute.xlu0 %1113
      %v1115 = vrot.slane %v1112, 4
      %v1116 = vrot.slane %v1114, 4
      %v1117 = vsel %vm403, %v1115, %v1116
      %vm1118 = vcmask 56320
      %v1119 = vsel %vm1118, %v1112, %v1117
      %v1120 = vsel %vm1118, %v1114, %v1116
      %1123 = vst [vmem:[#allocation2 + $0x84] sm:$0xcc] %v1119
      %1124 = vst [vmem:[#allocation2 + $0x8c] sm:$0xc] %v1120
      %v1125 = vld [vmem:[%s354] sm:$0xff]
      %v1127 = vcombine.high %v1125, %v1125
      %v1129 = vunpack.c.l.s4 1983009808
      %v1130 = vunpack.c.0.s8 %v1129
      %v1131 = vlaneseq
      %v1132 = vshrl.u32 %v1131, 7
      %v1133 = vsub.s32 %v1130, %v1132
      %v1134 = vrot.slane %v1125, %v1133
      %v1136 = vunpack.c.l.s4 1983009808
      %v1137 = vunpack.c.0.s8 %v1136
      %v1138 = vlaneseq
      %v1139 = vshrl.u32 %v1138, 7
      %v1140 = vsub.s32 %v1137, %v1139
      %v1141 = vrot.slane %v1127, %v1140
      %1142 = vrot.lane.b32.xlu0 %v1134, 6
      %v1143 = vpop.permute.xlu0 %1142
      %1144 = vrot.lane.b32.xlu0 %v1141, 6
      %v1145 = vpop.permute.xlu0 %1144
      %v1146 = vrot.slane %v1143, 4
      %v1147 = vrot.slane %v1145, 4
      %v1148 = vsel %vm403, %v1146, %v1147
      %vm1149 = vcmask 48128
      %v1150 = vsel %vm1149, %v1143, %v1148
      %v1151 = vsel %vm1149, %v1145, %v1147
      %1154 = vst [vmem:[#allocation2 + $0x90] sm:$0x33] %v1150
      %1155 = vst [vmem:[#allocation2 + $0x98] sm:$0x3] %v1151
      %v1156 = vld [vmem:[%s1] sm:$0xf]
      %v1157 = vld [vmem:[#allocation2] sm:$0xff]
      %v1158 = vld [vmem:[#allocation2 + $0x8] sm:$0xf]
      %v1159 = vld [vmem:[#allocation2 + $0xc] sm:$0xff]
      %v1160 = vld [vmem:[#allocation2 + $0x14] sm:$0xf]
      %v1161 = vld [vmem:[#allocation2 + $0x18] sm:$0xff]
      %v1162 = vld [vmem:[#allocation2 + $0x20] sm:$0xf]
      %v1163 = vld [vmem:[#allocation2 + $0x24] sm:$0xff]
      %v1164 = vld [vmem:[#allocation2 + $0x2c] sm:$0xf]
      %v1165 = vld [vmem:[#allocation2 + $0x30] sm:$0xff]
      %v1166 = vld [vmem:[#allocation2 + $0x38] sm:$0xf]
      %v1167 = vld [vmem:[#allocation2 + $0x3c] sm:$0xff]
      %v1168 = vld [vmem:[#allocation2 + $0x44] sm:$0xf]
      %v1169 = vld [vmem:[#allocation2 + $0x48] sm:$0xff]
      %v1170 = vld [vmem:[#allocation2 + $0x50] sm:$0xf]
      %v1171 = vld [vmem:[#allocation2 + $0x54] sm:$0xff]
      %v1172 = vld [vmem:[#allocation2 + $0x5c] sm:$0xf]
      %v1173 = vld [vmem:[#allocation2 + $0x60] sm:$0xff]
      %v1174 = vld [vmem:[#allocation2 + $0x68] sm:$0xf]
      %v1175 = vld [vmem:[#allocation2 + $0x6c] sm:$0xff]
      %v1176 = vld [vmem:[#allocation2 + $0x74] sm:$0xf]
      %v1177 = vld [vmem:[#allocation2 + $0x78] sm:$0xff]
      %v1178 = vld [vmem:[#allocation2 + $0x80] sm:$0xf]
      %v1179 = vld [vmem:[#allocation2 + $0x84] sm:$0xff]
      %v1180 = vld [vmem:[#allocation2 + $0x8c] sm:$0xf]
      %v1181 = vld [vmem:[#allocation2 + $0x90] sm:$0x33]
      %v1182 = vld [vmem:[#allocation2 + $0x98] sm:$0x3]
      %v1183 = vld [vmem:[%s2] sm:$0xff]
      %1185 = vset.pattern.permute.xlu0 0
      %1186 = vperm.xlu0 %1185, %v1183
      %v1187 = vpop.permute.xlu0 %1186
      %v1215 = vunpack.c.l.b16 %v1157
      %v1216 = vunpack.c.h.b16 %v1157
      %v1217 = vunpack.c.l.b16 %v1158
      %v1218 = vunpack.c.l.b16 %v1159
      %v1219 = vunpack.c.h.b16 %v1159
      %v1220 = vunpack.c.l.b16 %v1160
      %v1221 = vunpack.c.l.b16 %v1161
      %v1222 = vunpack.c.h.b16 %v1161
      %v1223 = vunpack.c.l.b16 %v1162
      %v1224 = vunpack.c.l.b16 %v1163
      %v1225 = vunpack.c.h.b16 %v1163
      %v1226 = vunpack.c.l.b16 %v1164
      %v1227 = vunpack.c.l.b16 %v1165
      %v1228 = vunpack.c.h.b16 %v1165
      %v1229 = vunpack.c.l.b16 %v1166
      %v1230 = vunpack.c.l.b16 %v1167
      %v1231 = vunpack.c.h.b16 %v1167
      %v1232 = vunpack.c.l.b16 %v1168
      %v1233 = vunpack.c.l.b16 %v1169
      %v1234 = vunpack.c.h.b16 %v1169
      %v1235 = vunpack.c.l.b16 %v1170
      %v1236 = vunpack.c.l.b16 %v1171
      %v1237 = vunpack.c.h.b16 %v1171
      %v1238 = vunpack.c.l.b16 %v1172
      %v1239 = vunpack.c.l.b16 %v1173
      %v1240 = vunpack.c.h.b16 %v1173
      %v1241 = vunpack.c.l.b16 %v1174
      %v1242 = vunpack.c.l.b16 %v1175
      %v1243 = vunpack.c.h.b16 %v1175
      %v1244 = vunpack.c.l.b16 %v1176
      %v1245 = vunpack.c.l.b16 %v1177
      %v1246 = vunpack.c.h.b16 %v1177
      %v1247 = vunpack.c.l.b16 %v1178
      %v1248 = vunpack.c.l.b16 %v1179
      %v1249 = vunpack.c.h.b16 %v1179
      %v1250 = vunpack.c.l.b16 %v1180
      %v1251 = vunpack.c.l.b16 %v1181
      %v1252 = vunpack.c.h.b16 %v1181
      %v1253 = vunpack.c.l.b16 %v1182
      %v1254 = vpack.c.b16 %v1218, %v1215
      %v1255 = vpack.c.b16 %v1219, %v1216
      %v1256 = vpack.c.b16 %v1220, %v1217
      %v1257 = vpack.c.b16 %v1224, %v1221
      %v1258 = vpack.c.b16 %v1225, %v1222
      %v1259 = vpack.c.b16 %v1226, %v1223
      %v1260 = vpack.c.b16 %v1230, %v1227
      %v1261 = vpack.c.b16 %v1231, %v1228
      %v1262 = vpack.c.b16 %v1232, %v1229
      %v1263 = vpack.c.b16 %v1236, %v1233
      %v1264 = vpack.c.b16 %v1237, %v1234
      %v1265 = vpack.c.b16 %v1238, %v1235
      %v1266 = vpack.c.b16 %v1242, %v1239
      %v1267 = vpack.c.b16 %v1243, %v1240
      %v1268 = vpack.c.b16 %v1244, %v1241
      %v1269 = vpack.c.b16 %v1248, %v1245
      %v1270 = vpack.c.b16 %v1249, %v1246
      %v1271 = vpack.c.b16 %v1250, %v1247
      %v1272 = vpack.c.b16 %v1251, %v1251
      %v1273 = vpack.c.b16 %v1252, %v1252
      %v1274 = vpack.c.b16 %v1253, %v1253
      %vm1293 = vcmask 818176
      %v1295 = vsel %vm1293, %v1156, 0
      %vm1297 = vcmask 1041408
      %v1299 = vsel %vm1297, %v1272, 0
      %v1302 = vsel %vm1297, %v1273, 0
      %v1305 = vsel %vm1297, %v1274, 0
      %1307 = vmatprep.subr.bf16.mxu0 %v1255
      %1308 = vmatpush1.bf16.msra.mxu0 %v1254
      %1309 = vmatprep.subr.bf16.mxu0 %v1258
      %1310 = vmatpush1.bf16.msra.mxu0 %v1257
      %1311 = vmatprep.subr.bf16.mxu0 %v1261
      %1312 = vmatpush1.bf16.msra.mxu0 %v1260
      %1313 = vmatprep.subr.bf16.mxu0 %v1264
      %1314 = vmatpush1.bf16.msra.mxu0 %v1263
      %1315 = vmatprep.subr.bf16.mxu0 %v1267
      %1316 = vmatpush1.bf16.msra.mxu0 %v1266
      %1317 = vmatprep.subr.bf16.mxu0 %v1270
      %1318 = vmatpush1.bf16.msra.mxu0 %v1269
      %1319 = vmatprep.subr.bf16.mxu0 %v1302
      %1320 = vmatpush1.bf16.msra.mxu0 %v1299
      %1321 = vmatprep.subr.bf16.mxu0 0
      %1322 = vmatpush1.bf16.msra.mxu0 0
      %1323 = vmatprep.subr.bf16.mxu0 0
      %1324 = vmatpush1.bf16.msra.mxu0 0
      %1325 = vmatprep.subr.bf16.mxu0 0
      %1326 = vmatpush1.bf16.msra.mxu0 0
      %1327 = vmatprep.subr.bf16.mxu0 0
      %1328 = vmatpush1.bf16.msra.mxu0 0
      %1329 = vmatprep.subr.bf16.mxu0 0
      %1330 = vmatpush1.bf16.msra.mxu0 0
      %1331 = vmatprep.subr.bf16.mxu0 0
      %1332 = vmatpush1.bf16.msra.mxu0 0
      %1333 = vmatprep.subr.bf16.mxu0 0
      %1334 = vmatpush1.bf16.msra.mxu0 0
      %1335 = vmatprep.subr.bf16.mxu0 0
      %1336 = vmatpush1.bf16.msra.mxu0 0
      %1337 = vmatprep.subr.bf16.mxu0 0
      %1338 = vmatpush1.bf16.msra.mxu0 0
      %1339 = vmatprep.mubr.bf16.mxu0 0
      %1340 = vmatmul.mubr.bf16.gmra.mrb[0].mxu0 %v1295
      %v1341 = vpop.f32.mrb[0].mxu0
      %v1342 = vadd.f32 %v1187, %v1341
      %v1343 = vpop.f32.mrb[0].mxu0
      %v1344 = vadd.f32 %v1187, %v1343
      %v1345 = vpop.f32.mrb[0].mxu0
      %v1346 = vpop.f32.mrb[0].mxu0
      %1347 = vdwg.mxu0
      %1348 = vmatprep.subr.bf16.mxu0 0
      %1349 = vmatpush1.bf16.msra.mxu0 %v1256
      %1350 = vmatprep.subr.bf16.mxu0 0
      %1351 = vmatpush1.bf16.msra.mxu0 %v1259
      %1352 = vmatprep.subr.bf16.mxu0 0
      %1353 = vmatpush1.bf16.msra.mxu0 %v1262
      %1354 = vmatprep.subr.bf16.mxu0 0
      %1355 = vmatpush1.bf16.msra.mxu0 %v1265
      %1356 = vmatprep.subr.bf16.mxu0 0
      %1357 = vmatpush1.bf16.msra.mxu0 %v1268
      %1358 = vmatprep.subr.bf16.mxu0 0
      %1359 = vmatpush1.bf16.msra.mxu0 %v1271
      %1360 = vmatprep.subr.bf16.mxu0 0
      %1361 = vmatpush1.bf16.msra.mxu0 %v1305
      %1362 = vmatprep.subr.bf16.mxu0 0
      %1363 = vmatpush1.bf16.msra.mxu0 0
      %1364 = vmatprep.subr.bf16.mxu0 0
      %1365 = vmatpush1.bf16.msra.mxu0 0
      %1366 = vmatprep.subr.bf16.mxu0 0
      %1367 = vmatpush1.bf16.msra.mxu0 0
      %1368 = vmatprep.subr.bf16.mxu0 0
      %1369 = vmatpush1.bf16.msra.mxu0 0
      %1370 = vmatprep.subr.bf16.mxu0 0
      %1371 = vmatpush1.bf16.msra.mxu0 0
      %1372 = vmatprep.subr.bf16.mxu0 0
      %1373 = vmatpush1.bf16.msra.mxu0 0
      %1374 = vmatprep.subr.bf16.mxu0 0
      %1375 = vmatpush1.bf16.msra.mxu0 0
      %1376 = vmatprep.subr.bf16.mxu0 0
      %1377 = vmatpush1.bf16.msra.mxu0 0
      %1378 = vmatprep.subr.bf16.mxu0 0
      %1379 = vmatpush1.bf16.msra.mxu0 0
      %1380 = vmatprep.mubr.bf16.mxu0 0
      %1381 = vmatmul.mubr.bf16.gmra.mrb[0].mxu0 %v1295
      %v1382 = vpop.f32.mrb[0].mxu0
      %v1383 = vadd.f32 %v1187, %v1382
      %v1384 = vpop.f32.mrb[0].mxu0
      %v1385 = vpop.f32.mrb[0].mxu0
      %v1386 = vpop.f32.mrb[0].mxu0
      %1387 = vdwg.mxu0
      %v1388 = vmax.f32 %v1342, 0.0
      %v1389 = vmax.f32 %v1344, 0.0
      %v1390 = vmax.f32 %v1383, 0.0
      %v1392 = vlaneseq
      %v1393 = vshrl.u32 %v1392, 7
      %v1394 = vsub.s32 0, %v1393
      %v1395 = vrot.slane %v361, %v1394
      %v1396 = vlaneseq
      %v1397 = vshrl.u32 %v1396, 7
      %v1398 = vsub.s32 1, %v1397
      %v1399 = vrot.slane %v361, %v1398
      %v1400 = vlaneseq
      %v1401 = vshrl.u32 %v1400, 7
      %v1402 = vsub.s32 2, %v1401
      %v1403 = vrot.slane %v361, %v1402
      %v1407 = vmul.f32 %v1388, %v1395
      %v1408 = vmul.f32 %v1389, %v1399
      %v1409 = vmul.f32 %v1390, %v1403
      %v1410 = vpack.c.bf16 %v1407, %v1407
      %v1411 = vpack.c.bf16 %v1408, %v1408
      %v1412 = vpack.c.bf16 %v1409, %v1409
      %v1416 = vunpack.c.l.b16 %v1410
      %v1417 = vunpack.c.l.b16 %v1411
      %v1418 = vunpack.c.l.b16 %v1412
      %v1419 = vpack.c.b16 %v1417, %v1416
      %v1420 = vpack.c.b16 %v1418, %v1418
      %1421 = vrot.lane.b32.xlu0 %v1419, 72
      %v1422 = vpop.permute.xlu0 %1421
      %1423 = vrot.lane.b32.xlu0 %v1420, 72
      %v1424 = vpop.permute.xlu0 %1423
      %v1425 = vrot.slane %v1422, 4
      %v1426 = vrot.slane %v1424, 4
      %vm1427 = vcmask 588800
      %v1428 = vsel %vm1427, %v1425, %v1422
      %v1429 = vsel %vm403, %v1425, %v1426
      %v1430 = vsel %vm1427, %v1429, %v1424
      %vm1433 = vcmask 1047556
      %vm1434 = vmor %vm1433, %vm364
      %1435 = vst.msk [vmem:[#allocation6] sm:$0xff] %vm1434, %v1428
      %vm1436 = vcmask 1043456
      %vm1437 = vcmask 588804
      %vm1438 = vmor %vm1437, %vm1436
      %1439 = vst.msk [vmem:[#allocation6 + $0x8] sm:$0xff] %vm1438, %v1430
      %v1440 = vld [vmem:[#allocation6] sm:$0xff]
      %v1441 = vld [vmem:[#allocation6 + $0x8] sm:$0xff]
      %1444 = vrot.lane.b32.xlu0 %v1440, 81
      %v1445 = vpop.permute.xlu0 %1444
      %1446 = vrot.lane.b32.xlu0 %v1441, 81
      %v1447 = vpop.permute.xlu0 %1446
      %v1448 = vrot.slane %v1445, 4
      %v1449 = vrot.slane %v1447, 4
      %v1450 = vsel %vm403, %v1448, %v1449
      %v1451 = vsel %vm591, %v1445, %v1450
      %v1452 = vsel %vm591, %v1447, %v1449
      %1455 = vst [vmem:[#allocation3] sm:$0xff] %v1451
      %1456 = vst [vmem:[#allocation3 + $0x8] sm:$0xf] %v1452
      %v1457 = vld [vmem:[#allocation6] sm:$0xff]
      %v1458 = vld [vmem:[#allocation6 + $0x8] sm:$0xff]
      %1461 = vrot.lane.b32.xlu0 %v1457, 80
      %v1462 = vpop.permute.xlu0 %1461
      %1463 = vrot.lane.b32.xlu0 %v1458, 80
      %v1464 = vpop.permute.xlu0 %1463
      %v1465 = vrot.slane %v1462, 4
      %v1466 = vrot.slane %v1464, 4
      %v1467 = vsel %vm403, %v1465, %v1466
      %v1468 = vsel %vm622, %v1462, %v1467
      %v1469 = vsel %vm622, %v1464, %v1466
      %1472 = vst [vmem:[#allocation3 + $0xc] sm:$0xff] %v1468
      %1473 = vst [vmem:[#allocation3 + $0x14] sm:$0xf] %v1469
      %v1474 = vld [vmem:[#allocation6] sm:$0xff]
      %v1475 = vld [vmem:[#allocation6 + $0x8] sm:$0xff]
      %1478 = vrot.lane.b32.xlu0 %v1474, 79
      %v1479 = vpop.permute.xlu0 %1478
      %1480 = vrot.lane.b32.xlu0 %v1475, 79
      %v1481 = vpop.permute.xlu0 %1480
      %v1482 = vrot.slane %v1479, 4
      %v1483 = vrot.slane %v1481, 4
      %v1484 = vsel %vm403, %v1482, %v1483
      %v1485 = vsel %vm653, %v1479, %v1484
      %v1486 = vsel %vm653, %v1481, %v1483
      %1489 = vst [vmem:[#allocation3 + $0x18] sm:$0xff] %v1485
      %1490 = vst [vmem:[#allocation3 + $0x20] sm:$0xf] %v1486
      %v1491 = vld [vmem:[#allocation6] sm:$0xff]
      %v1492 = vld [vmem:[#allocation6 + $0x8] sm:$0xff]
      %1495 = vrot.lane.b32.xlu0 %v1491, 57
      %v1496 = vpop.permute.xlu0 %1495
      %1497 = vrot.lane.b32.xlu0 %v1492, 57
      %v1498 = vpop.permute.xlu0 %1497
      %v1499 = vrot.slane %v1496, 4
      %v1500 = vrot.slane %v1498, 4
      %v1501 = vsel %vm403, %v1499, %v1500
      %v1502 = vsel %vm746, %v1496, %v1501
      %v1503 = vsel %vm746, %v1498, %v1500
      %1506 = vst [vmem:[#allocation3 + $0x24] sm:$0xff] %v1502
      %1507 = vst [vmem:[#allocation3 + $0x2c] sm:$0xf] %v1503
      %v1508 = vld [vmem:[#allocation6] sm:$0xff]
      %v1509 = vld [vmem:[#allocation6 + $0x8] sm:$0xff]
      %1512 = vrot.lane.b32.xlu0 %v1508, 56
      %v1513 = vpop.permute.xlu0 %1512
      %1514 = vrot.lane.b32.xlu0 %v1509, 56
      %v1515 = vpop.permute.xlu0 %1514
      %v1516 = vrot.slane %v1513, 4
      %v1517 = vrot.slane %v1515, 4
      %v1518 = vsel %vm403, %v1516, %v1517
      %v1519 = vsel %vm777, %v1513, %v1518
      %v1520 = vsel %vm777, %v1515, %v1517
      %1523 = vst [vmem:[#allocation3 + $0x30] sm:$0xff] %v1519
      %1524 = vst [vmem:[#allocation3 + $0x38] sm:$0xf] %v1520
      %v1525 = vld [vmem:[#allocation6] sm:$0xff]
      %v1526 = vld [vmem:[#allocation6 + $0x8] sm:$0xff]
      %1529 = vrot.lane.b32.xlu0 %v1525, 55
      %v1530 = vpop.permute.xlu0 %1529
      %1531 = vrot.lane.b32.xlu0 %v1526, 55
      %v1532 = vpop.permute.xlu0 %1531
      %v1533 = vrot.slane %v1530, 4
      %v1534 = vrot.slane %v1532, 4
      %v1535 = vsel %vm403, %v1533, %v1534
      %v1536 = vsel %vm808, %v1530, %v1535
      %v1537 = vsel %vm808, %v1532, %v1534
      %1540 = vst [vmem:[#allocation3 + $0x3c] sm:$0xff] %v1536
      %1541 = vst [vmem:[#allocation3 + $0x44] sm:$0xf] %v1537
      %v1542 = vld [vmem:[#allocation6] sm:$0xff]
      %v1543 = vld [vmem:[#allocation6 + $0x8] sm:$0xff]
      %1546 = vrot.lane.b32.xlu0 %v1542, 33
      %v1547 = vpop.permute.xlu0 %1546
      %1548 = vrot.lane.b32.xlu0 %v1543, 33
      %v1549 = vpop.permute.xlu0 %1548
      %v1550 = vrot.slane %v1547, 4
      %v1551 = vrot.slane %v1549, 4
      %v1552 = vsel %vm403, %v1550, %v1551
      %v1553 = vsel %vm901, %v1547, %v1552
      %v1554 = vsel %vm901, %v1549, %v1551
      %1557 = vst [vmem:[#allocation3 + $0x48] sm:$0xff] %v1553
      %1558 = vst [vmem:[#allocation3 + $0x50] sm:$0xf] %v1554
      %v1559 = vld [vmem:[#allocation6] sm:$0xff]
      %v1560 = vld [vmem:[#allocation6 + $0x8] sm:$0xff]
      %1563 = vrot.lane.b32.xlu0 %v1559, 32
      %v1564 = vpop.permute.xlu0 %1563
      %1565 = vrot.lane.b32.xlu0 %v1560, 32
      %v1566 = vpop.permute.xlu0 %1565
      %v1567 = vrot.slane %v1564, 4
      %v1568 = vrot.slane %v1566, 4
      %v1569 = vsel %vm403, %v1567, %v1568
      %v1570 = vsel %vm932, %v1564, %v1569
      %v1571 = vsel %vm932, %v1566, %v1568
      %1574 = vst [vmem:[#allocation3 + $0x54] sm:$0xff] %v1570
      %1575 = vst [vmem:[#allocation3 + $0x5c] sm:$0xf] %v1571
      %v1576 = vld [vmem:[#allocation6] sm:$0xff]
      %v1577 = vld [vmem:[#allocation6 + $0x8] sm:$0xff]
      %1580 = vrot.lane.b32.xlu0 %v1576, 31
      %v1581 = vpop.permute.xlu0 %1580
      %1582 = vrot.lane.b32.xlu0 %v1577, 31
      %v1583 = vpop.permute.xlu0 %1582
      %v1584 = vrot.slane %v1581, 4
      %v1585 = vrot.slane %v1583, 4
      %v1586 = vsel %vm403, %v1584, %v1585
      %v1587 = vsel %vm963, %v1581, %v1586
      %v1588 = vsel %vm963, %v1583, %v1585
      %1591 = vst [vmem:[#allocation3 + $0x60] sm:$0xff] %v1587
      %1592 = vst [vmem:[#allocation3 + $0x68] sm:$0xf] %v1588
      %v1593 = vld [vmem:[%s3] sm:$0x3]
      %v1594 = vld [vmem:[#allocation3] sm:$0xff]
      %v1595 = vld [vmem:[#allocation3 + $0x8] sm:$0xf]
      %v1596 = vld [vmem:[#allocation3 + $0xc] sm:$0xff]
      %v1597 = vld [vmem:[#allocation3 + $0x14] sm:$0xf]
      %v1598 = vld [vmem:[#allocation3 + $0x18] sm:$0xff]
      %v1599 = vld [vmem:[#allocation3 + $0x20] sm:$0xf]
      %v1600 = vld [vmem:[#allocation3 + $0x24] sm:$0xff]
      %v1601 = vld [vmem:[#allocation3 + $0x2c] sm:$0xf]
      %v1602 = vld [vmem:[#allocation3 + $0x30] sm:$0xff]
      %v1603 = vld [vmem:[#allocation3 + $0x38] sm:$0xf]
      %v1604 = vld [vmem:[#allocation3 + $0x3c] sm:$0xff]
      %v1605 = vld [vmem:[#allocation3 + $0x44] sm:$0xf]
      %v1606 = vld [vmem:[#allocation3 + $0x48] sm:$0xff]
      %v1607 = vld [vmem:[#allocation3 + $0x50] sm:$0xf]
      %v1608 = vld [vmem:[#allocation3 + $0x54] sm:$0xff]
      %v1609 = vld [vmem:[#allocation3 + $0x5c] sm:$0xf]
      %v1610 = vld [vmem:[#allocation3 + $0x60] sm:$0xff]
      %v1611 = vld [vmem:[#allocation3 + $0x68] sm:$0xf]
      %v1612 = vld [vmem:[%s4] sm:$0xf]
      %1614 = vset.pattern.permute.xlu0 0
      %1615 = vperm.xlu0 %1614, %v1612
      %v1616 = vpop.permute.xlu0 %1615
      %v1636 = vunpack.c.l.b16 %v1594
      %v1637 = vunpack.c.h.b16 %v1594
      %v1638 = vunpack.c.l.b16 %v1595
      %v1639 = vunpack.c.l.b16 %v1596
      %v1640 = vunpack.c.h.b16 %v1596
      %v1641 = vunpack.c.l.b16 %v1597
      %v1642 = vunpack.c.l.b16 %v1598
      %v1643 = vunpack.c.h.b16 %v1598
      %v1644 = vunpack.c.l.b16 %v1599
      %v1645 = vunpack.c.l.b16 %v1600
      %v1646 = vunpack.c.h.b16 %v1600
      %v1647 = vunpack.c.l.b16 %v1601
      %v1648 = vunpack.c.l.b16 %v1602
      %v1649 = vunpack.c.h.b16 %v1602
      %v1650 = vunpack.c.l.b16 %v1603
      %v1651 = vunpack.c.l.b16 %v1604
      %v1652 = vunpack.c.h.b16 %v1604
      %v1653 = vunpack.c.l.b16 %v1605
      %v1654 = vunpack.c.l.b16 %v1606
      %v1655 = vunpack.c.h.b16 %v1606
      %v1656 = vunpack.c.l.b16 %v1607
      %v1657 = vunpack.c.l.b16 %v1608
      %v1658 = vunpack.c.h.b16 %v1608
      %v1659 = vunpack.c.l.b16 %v1609
      %v1660 = vunpack.c.l.b16 %v1610
      %v1661 = vunpack.c.h.b16 %v1610
      %v1662 = vunpack.c.l.b16 %v1611
      %v1663 = vpack.c.b16 %v1639, %v1636
      %v1664 = vpack.c.b16 %v1640, %v1637
      %v1665 = vpack.c.b16 %v1641, %v1638
      %v1666 = vpack.c.b16 %v1645, %v1642
      %v1667 = vpack.c.b16 %v1646, %v1643
      %v1668 = vpack.c.b16 %v1647, %v1644
      %v1669 = vpack.c.b16 %v1651, %v1648
      %v1670 = vpack.c.b16 %v1652, %v1649
      %v1671 = vpack.c.b16 %v1653, %v1650
      %v1672 = vpack.c.b16 %v1657, %v1654
      %v1673 = vpack.c.b16 %v1658, %v1655
      %v1674 = vpack.c.b16 %v1659, %v1656
      %v1675 = vpack.c.b16 %v1660, %v1660
      %v1676 = vpack.c.b16 %v1661, %v1661
      %v1677 = vpack.c.b16 %v1662, %v1662
      %v1691 = vsel %vm374, %v1593, 0
      %v1694 = vsel %vm1436, %v1675, 0
      %v1697 = vsel %vm1436, %v1676, 0
      %v1700 = vsel %vm1436, %v1677, 0
      %1702 = vmatprep.subr.bf16.mxu0 %v1664
      %1703 = vmatpush1.bf16.msra.mxu0 %v1663
      %1704 = vmatprep.subr.bf16.mxu0 %v1667
      %1705 = vmatpush1.bf16.msra.mxu0 %v1666
      %1706 = vmatprep.subr.bf16.mxu0 %v1670
      %1707 = vmatpush1.bf16.msra.mxu0 %v1669
      %1708 = vmatprep.subr.bf16.mxu0 %v1673
      %1709 = vmatpush1.bf16.msra.mxu0 %v1672
      %1710 = vmatprep.subr.bf16.mxu0 %v1697
      %1711 = vmatpush1.bf16.msra.mxu0 %v1694
      %1712 = vmatprep.subr.bf16.mxu0 0
      %1713 = vmatpush1.bf16.msra.mxu0 0
      %1714 = vmatprep.subr.bf16.mxu0 0
      %1715 = vmatpush1.bf16.msra.mxu0 0
      %1716 = vmatprep.subr.bf16.mxu0 0
      %1717 = vmatpush1.bf16.msra.mxu0 0
      %1718 = vmatprep.subr.bf16.mxu0 0
      %1719 = vmatpush1.bf16.msra.mxu0 0
      %1720 = vmatprep.subr.bf16.mxu0 0
      %1721 = vmatpush1.bf16.msra.mxu0 0
      %1722 = vmatprep.subr.bf16.mxu0 0
      %1723 = vmatpush1.bf16.msra.mxu0 0
      %1724 = vmatprep.subr.bf16.mxu0 0
      %1725 = vmatpush1.bf16.msra.mxu0 0
      %1726 = vmatprep.subr.bf16.mxu0 0
      %1727 = vmatpush1.bf16.msra.mxu0 0
      %1728 = vmatprep.subr.bf16.mxu0 0
      %1729 = vmatpush1.bf16.msra.mxu0 0
      %1730 = vmatprep.subr.bf16.mxu0 0
      %1731 = vmatpush1.bf16.msra.mxu0 0
      %1732 = vmatprep.subr.bf16.mxu0 0
      %1733 = vmatpush1.bf16.msra.mxu0 0
      %1734 = vmatprep.mubr.bf16.mxu0 0
      %1735 = vmatmul.mubr.bf16.gmra.mrb[0].mxu0 %v1691
      %v1736 = vpop.f32.mrb[0].mxu0
      %v1737 = vadd.f32 %v1616, %v1736
      %v1738 = vpop.f32.mrb[0].mxu0
      %v1739 = vadd.f32 %v1616, %v1738
      %v1740 = vpop.f32.mrb[0].mxu0
      %v1741 = vpop.f32.mrb[0].mxu0
      %1742 = vdwg.mxu0
      %1743 = vmatprep.subr.bf16.mxu0 0
      %1744 = vmatpush1.bf16.msra.mxu0 %v1665
      %1745 = vmatprep.subr.bf16.mxu0 0
      %1746 = vmatpush1.bf16.msra.mxu0 %v1668
      %1747 = vmatprep.subr.bf16.mxu0 0
      %1748 = vmatpush1.bf16.msra.mxu0 %v1671
      %1749 = vmatprep.subr.bf16.mxu0 0
      %1750 = vmatpush1.bf16.msra.mxu0 %v1674
      %1751 = vmatprep.subr.bf16.mxu0 0
      %1752 = vmatpush1.bf16.msra.mxu0 %v1700
      %1753 = vmatprep.subr.bf16.mxu0 0
      %1754 = vmatpush1.bf16.msra.mxu0 0
      %1755 = vmatprep.subr.bf16.mxu0 0
      %1756 = vmatpush1.bf16.msra.mxu0 0
      %1757 = vmatprep.subr.bf16.mxu0 0
      %1758 = vmatpush1.bf16.msra.mxu0 0
      %1759 = vmatprep.subr.bf16.mxu0 0
      %1760 = vmatpush1.bf16.msra.mxu0 0
      %1761 = vmatprep.subr.bf16.mxu0 0
      %1762 = vmatpush1.bf16.msra.mxu0 0
      %1763 = vmatprep.subr.bf16.mxu0 0
      %1764 = vmatpush1.bf16.msra.mxu0 0
      %1765 = vmatprep.subr.bf16.mxu0 0
      %1766 = vmatpush1.bf16.msra.mxu0 0
      %1767 = vmatprep.subr.bf16.mxu0 0
      %1768 = vmatpush1.bf16.msra.mxu0 0
      %1769 = vmatprep.subr.bf16.mxu0 0
      %1770 = vmatpush1.bf16.msra.mxu0 0
      %1771 = vmatprep.subr.bf16.mxu0 0
      %1772 = vmatpush1.bf16.msra.mxu0 0
      %1773 = vmatprep.subr.bf16.mxu0 0
      %1774 = vmatpush1.bf16.msra.mxu0 0
      %1775 = vmatprep.mubr.bf16.mxu0 0
      %1776 = vmatmul.mubr.bf16.gmra.mrb[0].mxu0 %v1691
      %v1777 = vpop.f32.mrb[0].mxu0
      %v1778 = vadd.f32 %v1616, %v1777
      %v1779 = vpop.f32.mrb[0].mxu0
      %v1780 = vpop.f32.mrb[0].mxu0
      %v1781 = vpop.f32.mrb[0].mxu0
      %1782 = vdwg.mxu0
      %v1783 = vmax.f32 %v1737, 0.0
      %v1784 = vmax.f32 %v1739, 0.0
      %v1785 = vmax.f32 %v1778, 0.0
      %v1786 = vmul.f32 %v1783, %v1395
      %v1787 = vmul.f32 %v1784, %v1399
      %v1788 = vmul.f32 %v1785, %v1403
      %v1789 = vpack.c.bf16 %v1786, %v1786
      %v1790 = vpack.c.bf16 %v1787, %v1787
      %v1791 = vpack.c.bf16 %v1788, %v1788
      %v1795 = vcombine.low %v1789, %v1790
      %v1797 = vunpack.c.l.s4 1983009808
      %v1798 = vunpack.c.0.s8 %v1797
      %v1799 = vlaneseq
      %v1800 = vshrl.u32 %v1799, 7
      %v1801 = vsub.s32 %v1798, %v1800
      %v1802 = vrot.slane %v1795, %v1801
      %v1804 = vunpack.c.l.s4 1983009808
      %v1805 = vunpack.c.0.s8 %v1804
      %v1806 = vlaneseq
      %v1807 = vshrl.u32 %v1806, 7
      %v1808 = vsub.s32 %v1805, %v1807
      %v1809 = vrot.slane %v1791, %v1808
      %v1810 = vcombine.low %v1802, %v1809
      %1811 = vrot.lane.b32.xlu0 %v1810, 72
      %v1812 = vpop.permute.xlu0 %1811
      %v1813 = vrot.slane %v1812, 6
      %v1814 = vsel %vm1427, %v1813, %v1812
      %vm1816 = vcmask 1043458
      %vm1817 = vmor %vm1816, %vm370
      %vm1818 = vcmask 1045508
      %vm1819 = vmor %vm1818, %vm1817
      %vm1820 = vcmask 588806
      %vm1821 = vmor %vm1820, %vm1819
      %1822 = vst.msk [vmem:[#allocation7] sm:$0xff] %vm1821, %v1814
      %v1823 = vld [vmem:[#allocation7] sm:$0xff]
      %v1825 = vcombine.high %v1823, %v1823
      %v1827 = vunpack.c.l.s4 1983009808
      %v1828 = vunpack.c.0.s8 %v1827
      %v1829 = vlaneseq
      %v1830 = vshrl.u32 %v1829, 7
      %v1831 = vsub.s32 %v1828, %v1830
      %v1832 = vrot.slane %v1823, %v1831
      %v1834 = vunpack.c.l.s4 1983009808
      %v1835 = vunpack.c.0.s8 %v1834
      %v1836 = vlaneseq
      %v1837 = vshrl.u32 %v1836, 7
      %v1838 = vsub.s32 %v1835, %v1837
      %v1839 = vrot.slane %v1825, %v1838
      %1840 = vrot.lane.b32.xlu0 %v1832, 81
      %v1841 = vpop.permute.xlu0 %1840
      %1842 = vrot.lane.b32.xlu0 %v1839, 81
      %v1843 = vpop.permute.xlu0 %1842
      %v1844 = vrot.slane %v1841, 4
      %v1845 = vrot.slane %v1843, 4
      %v1846 = vsel %vm403, %v1844, %v1845
      %v1847 = vsel %vm591, %v1841, %v1846
      %v1848 = vsel %vm591, %v1843, %v1845
      %1851 = vst [vmem:[#allocation4] sm:$0x33] %v1847
      %1852 = vst [vmem:[#allocation4 + $0x8] sm:$0x3] %v1848
      %v1853 = vld [vmem:[#allocation7] sm:$0xff]
      %v1855 = vcombine.low %v1853, %v1853
      %v1857 = vunpack.c.l.s4 1983009808
      %v1858 = vunpack.c.0.s8 %v1857
      %v1859 = vlaneseq
      %v1860 = vshrl.u32 %v1859, 7
      %v1861 = vsub.s32 %v1858, %v1860
      %v1862 = vrot.slane %v1855, %v1861
      %v1864 = vunpack.c.l.s4 1983009808
      %v1865 = vunpack.c.0.s8 %v1864
      %v1866 = vlaneseq
      %v1867 = vshrl.u32 %v1866, 7
      %v1868 = vsub.s32 %v1865, %v1867
      %v1869 = vrot.slane %v1853, %v1868
      %1870 = vrot.lane.b32.xlu0 %v1862, 80
      %v1871 = vpop.permute.xlu0 %1870
      %1872 = vrot.lane.b32.xlu0 %v1869, 80
      %v1873 = vpop.permute.xlu0 %1872
      %v1874 = vrot.slane %v1871, 4
      %v1875 = vrot.slane %v1873, 4
      %v1876 = vsel %vm403, %v1874, %v1875
      %v1877 = vsel %vm622, %v1871, %v1876
      %v1878 = vsel %vm622, %v1873, %v1875
      %1881 = vst [vmem:[#allocation4] sm:$0xcc] %v1877
      %1882 = vst [vmem:[#allocation4 + $0x8] sm:$0xc] %v1878
      %v1883 = vld [vmem:[#allocation7] sm:$0xff]
      %v1885 = vcombine.high %v1883, %v1883
      %v1887 = vunpack.c.l.s4 1983009808
      %v1888 = vunpack.c.0.s8 %v1887
      %v1889 = vlaneseq
      %v1890 = vshrl.u32 %v1889, 7
      %v1891 = vsub.s32 %v1888, %v1890
      %v1892 = vrot.slane %v1883, %v1891
      %v1894 = vunpack.c.l.s4 1983009808
      %v1895 = vunpack.c.0.s8 %v1894
      %v1896 = vlaneseq
      %v1897 = vshrl.u32 %v1896, 7
      %v1898 = vsub.s32 %v1895, %v1897
      %v1899 = vrot.slane %v1885, %v1898
      %1900 = vrot.lane.b32.xlu0 %v1892, 79
      %v1901 = vpop.permute.xlu0 %1900
      %1902 = vrot.lane.b32.xlu0 %v1899, 79
      %v1903 = vpop.permute.xlu0 %1902
      %v1904 = vrot.slane %v1901, 4
      %v1905 = vrot.slane %v1903, 4
      %v1906 = vsel %vm403, %v1904, %v1905
      %v1907 = vsel %vm653, %v1901, %v1906
      %v1908 = vsel %vm653, %v1903, %v1905
      %1911 = vst [vmem:[#allocation4 + $0xc] sm:$0x33] %v1907
      %1912 = vst [vmem:[#allocation4 + $0x14] sm:$0x3] %v1908
      %v1913 = vld [vmem:[#allocation7] sm:$0xff]
      %v1915 = vcombine.low %v1913, %v1913
      %v1917 = vunpack.c.l.s4 1983009808
      %v1918 = vunpack.c.0.s8 %v1917
      %v1919 = vlaneseq
      %v1920 = vshrl.u32 %v1919, 7
      %v1921 = vsub.s32 %v1918, %v1920
      %v1922 = vrot.slane %v1915, %v1921
      %v1924 = vunpack.c.l.s4 1983009808
      %v1925 = vunpack.c.0.s8 %v1924
      %v1926 = vlaneseq
      %v1927 = vshrl.u32 %v1926, 7
      %v1928 = vsub.s32 %v1925, %v1927
      %v1929 = vrot.slane %v1913, %v1928
      %1930 = vrot.lane.b32.xlu0 %v1922, 57
      %v1931 = vpop.permute.xlu0 %1930
      %1932 = vrot.lane.b32.xlu0 %v1929, 57
      %v1933 = vpop.permute.xlu0 %1932
      %v1934 = vrot.slane %v1931, 4
      %v1935 = vrot.slane %v1933, 4
      %v1936 = vsel %vm403, %v1934, %v1935
      %v1937 = vsel %vm746, %v1931, %v1936
      %v1938 = vsel %vm746, %v1933, %v1935
      %1941 = vst [vmem:[#allocation4 + $0xc] sm:$0xcc] %v1937
      %1942 = vst [vmem:[#allocation4 + $0x14] sm:$0xc] %v1938
      %v1943 = vld [vmem:[#allocation7] sm:$0xff]
      %v1945 = vcombine.high %v1943, %v1943
      %v1947 = vunpack.c.l.s4 1983009808
      %v1948 = vunpack.c.0.s8 %v1947
      %v1949 = vlaneseq
      %v1950 = vshrl.u32 %v1949, 7
      %v1951 = vsub.s32 %v1948, %v1950
      %v1952 = vrot.slane %v1943, %v1951
      %v1954 = vunpack.c.l.s4 1983009808
      %v1955 = vunpack.c.0.s8 %v1954
      %v1956 = vlaneseq
      %v1957 = vshrl.u32 %v1956, 7
      %v1958 = vsub.s32 %v1955, %v1957
      %v1959 = vrot.slane %v1945, %v1958
      %1960 = vrot.lane.b32.xlu0 %v1952, 56
      %v1961 = vpop.permute.xlu0 %1960
      %1962 = vrot.lane.b32.xlu0 %v1959, 56
      %v1963 = vpop.permute.xlu0 %1962
      %v1964 = vrot.slane %v1961, 4
      %v1965 = vrot.slane %v1963, 4
      %v1966 = vsel %vm403, %v1964, %v1965
      %v1967 = vsel %vm777, %v1961, %v1966
      %v1968 = vsel %vm777, %v1963, %v1965
      %1971 = vst [vmem:[#allocation4 + $0x18] sm:$0x33] %v1967
      %1972 = vst [vmem:[#allocation4 + $0x20] sm:$0x3] %v1968
      %v1973 = vld [vmem:[#allocation7] sm:$0xff]
      %v1975 = vcombine.low %v1973, %v1973
      %v1977 = vunpack.c.l.s4 1983009808
      %v1978 = vunpack.c.0.s8 %v1977
      %v1979 = vlaneseq
      %v1980 = vshrl.u32 %v1979, 7
      %v1981 = vsub.s32 %v1978, %v1980
      %v1982 = vrot.slane %v1975, %v1981
      %v1984 = vunpack.c.l.s4 1983009808
      %v1985 = vunpack.c.0.s8 %v1984
      %v1986 = vlaneseq
      %v1987 = vshrl.u32 %v1986, 7
      %v1988 = vsub.s32 %v1985, %v1987
      %v1989 = vrot.slane %v1973, %v1988
      %1990 = vrot.lane.b32.xlu0 %v1982, 55
      %v1991 = vpop.permute.xlu0 %1990
      %1992 = vrot.lane.b32.xlu0 %v1989, 55
      %v1993 = vpop.permute.xlu0 %1992
      %v1994 = vrot.slane %v1991, 4
      %v1995 = vrot.slane %v1993, 4
      %v1996 = vsel %vm403, %v1994, %v1995
      %v1997 = vsel %vm808, %v1991, %v1996
      %v1998 = vsel %vm808, %v1993, %v1995
      %2001 = vst [vmem:[#allocation4 + $0x18] sm:$0xcc] %v1997
      %2002 = vst [vmem:[#allocation4 + $0x20] sm:$0xc] %v1998
      %v2003 = vld [vmem:[#allocation7] sm:$0xff]
      %v2005 = vcombine.high %v2003, %v2003
      %v2007 = vunpack.c.l.s4 1983009808
      %v2008 = vunpack.c.0.s8 %v2007
      %v2009 = vlaneseq
      %v2010 = vshrl.u32 %v2009, 7
      %v2011 = vsub.s32 %v2008, %v2010
      %v2012 = vrot.slane %v2003, %v2011
      %v2014 = vunpack.c.l.s4 1983009808
      %v2015 = vunpack.c.0.s8 %v2014
      %v2016 = vlaneseq
      %v2017 = vshrl.u32 %v2016, 7
      %v2018 = vsub.s32 %v2015, %v2017
      %v2019 = vrot.slane %v2005, %v2018
      %2020 = vrot.lane.b32.xlu0 %v2012, 33
      %v2021 = vpop.permute.xlu0 %2020
      %2022 = vrot.lane.b32.xlu0 %v2019, 33
      %v2023 = vpop.permute.xlu0 %2022
      %v2024 = vrot.slane %v2021, 4
      %v2025 = vrot.slane %v2023, 4
      %v2026 = vsel %vm403, %v2024, %v2025
      %v2027 = vsel %vm901, %v2021, %v2026
      %v2028 = vsel %vm901, %v2023, %v2025
      %2031 = vst [vmem:[#allocation4 + $0x24] sm:$0x33] %v2027
      %2032 = vst [vmem:[#allocation4 + $0x2c] sm:$0x3] %v2028
      %v2033 = vld [vmem:[#allocation7] sm:$0xff]
      %v2035 = vcombine.low %v2033, %v2033
      %v2037 = vunpack.c.l.s4 1983009808
      %v2038 = vunpack.c.0.s8 %v2037
      %v2039 = vlaneseq
      %v2040 = vshrl.u32 %v2039, 7
      %v2041 = vsub.s32 %v2038, %v2040
      %v2042 = vrot.slane %v2035, %v2041
      %v2044 = vunpack.c.l.s4 1983009808
      %v2045 = vunpack.c.0.s8 %v2044
      %v2046 = vlaneseq
      %v2047 = vshrl.u32 %v2046, 7
      %v2048 = vsub.s32 %v2045, %v2047
      %v2049 = vrot.slane %v2033, %v2048
      %2050 = vrot.lane.b32.xlu0 %v2042, 32
      %v2051 = vpop.permute.xlu0 %2050
      %2052 = vrot.lane.b32.xlu0 %v2049, 32
      %v2053 = vpop.permute.xlu0 %2052
      %v2054 = vrot.slane %v2051, 4
      %v2055 = vrot.slane %v2053, 4
      %v2056 = vsel %vm403, %v2054, %v2055
      %v2057 = vsel %vm932, %v2051, %v2056
      %v2058 = vsel %vm932, %v2053, %v2055
      %2061 = vst [vmem:[#allocation4 + $0x24] sm:$0xcc] %v2057
      %2062 = vst [vmem:[#allocation4 + $0x2c] sm:$0xc] %v2058
      %v2063 = vld [vmem:[#allocation7] sm:$0xff]
      %v2065 = vcombine.high %v2063, %v2063
      %v2067 = vunpack.c.l.s4 1983009808
      %v2068 = vunpack.c.0.s8 %v2067
      %v2069 = vlaneseq
      %v2070 = vshrl.u32 %v2069, 7
      %v2071 = vsub.s32 %v2068, %v2070
      %v2072 = vrot.slane %v2063, %v2071
      %v2074 = vunpack.c.l.s4 1983009808
      %v2075 = vunpack.c.0.s8 %v2074
      %v2076 = vlaneseq
      %v2077 = vshrl.u32 %v2076, 7
      %v2078 = vsub.s32 %v2075, %v2077
      %v2079 = vrot.slane %v2065, %v2078
      %2080 = vrot.lane.b32.xlu0 %v2072, 31
      %v2081 = vpop.permute.xlu0 %2080
      %2082 = vrot.lane.b32.xlu0 %v2079, 31
      %v2083 = vpop.permute.xlu0 %2082
      %v2084 = vrot.slane %v2081, 4
      %v2085 = vrot.slane %v2083, 4
      %v2086 = vsel %vm403, %v2084, %v2085
      %v2087 = vsel %vm963, %v2081, %v2086
      %v2088 = vsel %vm963, %v2083, %v2085
      %2091 = vst [vmem:[#allocation4 + $0x30] sm:$0x33] %v2087
      %2092 = vst [vmem:[#allocation4 + $0x38] sm:$0x3] %v2088
      %v2093 = vld [vmem:[%s5] sm:$0xf]
      %v2094 = vld [vmem:[%s5 + $0x4] sm:$0xf]
      %v2095 = vld [vmem:[#allocation4] sm:$0xff]
      %v2096 = vld [vmem:[#allocation4 + $0x8] sm:$0xf]
      %v2097 = vld [vmem:[#allocation4 + $0xc] sm:$0xff]
      %v2098 = vld [vmem:[#allocation4 + $0x14] sm:$0xf]
      %v2099 = vld [vmem:[#allocation4 + $0x18] sm:$0xff]
      %v2100 = vld [vmem:[#allocation4 + $0x20] sm:$0xf]
      %v2101 = vld [vmem:[#allocation4 + $0x24] sm:$0xff]
      %v2102 = vld [vmem:[#allocation4 + $0x2c] sm:$0xf]
      %v2103 = vld [vmem:[#allocation4 + $0x30] sm:$0x33]
      %v2104 = vld [vmem:[#allocation4 + $0x38] sm:$0x3]
      %v2105 = vld [vmem:[%s6] sm:$0xff]
      %v2106 = vld [vmem:[%s6 + $0x8] sm:$0xff]
      %2108 = vset.pattern.permute.xlu0 0
      %2109 = vperm.xlu0 %2108, %v2105
      %v2110 = vpop.permute.xlu0 %2109
      %2113 = vset.pattern.permute.xlu0 0
      %2114 = vperm.xlu0 %2113, %v2106
      %v2115 = vpop.permute.xlu0 %2114
      %v2119 = vunpack.c.l.b16 %v2093
      %v2120 = vunpack.c.l.b16 %v2094
      %v2121 = vpack.c.b16 %v2120, %v2119
      %v2132 = vunpack.c.l.b16 %v2095
      %v2133 = vunpack.c.h.b16 %v2095
      %v2134 = vunpack.c.l.b16 %v2096
      %v2135 = vunpack.c.l.b16 %v2097
      %v2136 = vunpack.c.h.b16 %v2097
      %v2137 = vunpack.c.l.b16 %v2098
      %v2138 = vunpack.c.l.b16 %v2099
      %v2139 = vunpack.c.h.b16 %v2099
      %v2140 = vunpack.c.l.b16 %v2100
      %v2141 = vunpack.c.l.b16 %v2101
      %v2142 = vunpack.c.h.b16 %v2101
      %v2143 = vunpack.c.l.b16 %v2102
      %v2144 = vunpack.c.l.b16 %v2103
      %v2145 = vunpack.c.h.b16 %v2103
      %v2146 = vunpack.c.l.b16 %v2104
      %v2147 = vpack.c.b16 %v2135, %v2132
      %v2148 = vpack.c.b16 %v2136, %v2133
      %v2149 = vpack.c.b16 %v2137, %v2134
      %v2150 = vpack.c.b16 %v2141, %v2138
      %v2151 = vpack.c.b16 %v2142, %v2139
      %v2152 = vpack.c.b16 %v2143, %v2140
      %v2153 = vpack.c.b16 %v2144, %v2144
      %v2154 = vpack.c.b16 %v2145, %v2145
      %v2155 = vpack.c.b16 %v2146, %v2146
      %vm2162 = vcmask 293888
      %v2164 = vsel %vm2162, %v2121, 0
      %v2167 = vsel %vm1297, %v2153, 0
      %v2170 = vsel %vm1297, %v2154, 0
      %v2173 = vsel %vm1297, %v2155, 0
      %2175 = vmatprep.subr.bf16.mxu0 %v2148
      %2176 = vmatpush1.bf16.msra.mxu0 %v2147
      %2177 = vmatprep.subr.bf16.mxu0 %v2151
      %2178 = vmatpush1.bf16.msra.mxu0 %v2150
      %2179 = vmatprep.subr.bf16.mxu0 %v2170
      %2180 = vmatpush1.bf16.msra.mxu0 %v2167
      %2181 = vmatprep.subr.bf16.mxu0 0
      %2182 = vmatpush1.bf16.msra.mxu0 0
      %2183 = vmatprep.subr.bf16.mxu0 0
      %2184 = vmatpush1.bf16.msra.mxu0 0
      %2185 = vmatprep.subr.bf16.mxu0 0
      %2186 = vmatpush1.bf16.msra.mxu0 0
      %2187 = vmatprep.subr.bf16.mxu0 0
      %2188 = vmatpush1.bf16.msra.mxu0 0
      %2189 = vmatprep.subr.bf16.mxu0 0
      %2190 = vmatpush1.bf16.msra.mxu0 0
      %2191 = vmatprep.subr.bf16.mxu0 0
      %2192 = vmatpush1.bf16.msra.mxu0 0
      %2193 = vmatprep.subr.bf16.mxu0 0
      %2194 = vmatpush1.bf16.msra.mxu0 0
      %2195 = vmatprep.subr.bf16.mxu0 0
      %2196 = vmatpush1.bf16.msra.mxu0 0
      %2197 = vmatprep.subr.bf16.mxu0 0
      %2198 = vmatpush1.bf16.msra.mxu0 0
      %2199 = vmatprep.subr.bf16.mxu0 0
      %2200 = vmatpush1.bf16.msra.mxu0 0
      %2201 = vmatprep.subr.bf16.mxu0 0
      %2202 = vmatpush1.bf16.msra.mxu0 0
      %2203 = vmatprep.subr.bf16.mxu0 0
      %2204 = vmatpush1.bf16.msra.mxu0 0
      %2205 = vmatprep.subr.bf16.mxu0 0
      %2206 = vmatpush1.bf16.msra.mxu0 0
      %2207 = vmatprep.mubr.bf16.mxu0 0
      %2208 = vmatmul.mubr.bf16.gmra.mrb[0].mxu0 %v2164
      %v2209 = vpop.f32.mrb[0].mxu0
      %v2210 = vadd.f32 %v2110, %v2209
      %v2211 = vpop.f32.mrb[0].mxu0
      %v2212 = vadd.f32 %v2110, %v2211
      %v2213 = vpop.f32.mrb[0].mxu0
      %v2214 = vadd.f32 %v2115, %v2213
      %v2215 = vpop.f32.mrb[0].mxu0
      %v2216 = vadd.f32 %v2115, %v2215
      %2217 = vdwg.mxu0
      %2218 = vmatprep.subr.bf16.mxu0 0
      %2219 = vmatpush1.bf16.msra.mxu0 %v2149
      %2220 = vmatprep.subr.bf16.mxu0 0
      %2221 = vmatpush1.bf16.msra.mxu0 %v2152
      %2222 = vmatprep.subr.bf16.mxu0 0
      %2223 = vmatpush1.bf16.msra.mxu0 %v2173
      %2224 = vmatprep.subr.bf16.mxu0 0
      %2225 = vmatpush1.bf16.msra.mxu0 0
      %2226 = vmatprep.subr.bf16.mxu0 0
      %2227 = vmatpush1.bf16.msra.mxu0 0
      %2228 = vmatprep.subr.bf16.mxu0 0
      %2229 = vmatpush1.bf16.msra.mxu0 0
      %2230 = vmatprep.subr.bf16.mxu0 0
      %2231 = vmatpush1.bf16.msra.mxu0 0
      %2232 = vmatprep.subr.bf16.mxu0 0
      %2233 = vmatpush1.bf16.msra.mxu0 0
      %2234 = vmatprep.subr.bf16.mxu0 0
      %2235 = vmatpush1.bf16.msra.mxu0 0
      %2236 = vmatprep.subr.bf16.mxu0 0
      %2237 = vmatpush1.bf16.msra.mxu0 0
      %2238 = vmatprep.subr.bf16.mxu0 0
      %2239 = vmatpush1.bf16.msra.mxu0 0
      %2240 = vmatprep.subr.bf16.mxu0 0
      %2241 = vmatpush1.bf16.msra.mxu0 0
      %2242 = vmatprep.subr.bf16.mxu0 0
      %2243 = vmatpush1.bf16.msra.mxu0 0
      %2244 = vmatprep.subr.bf16.mxu0 0
      %2245 = vmatpush1.bf16.msra.mxu0 0
      %2246 = vmatprep.subr.bf16.mxu0 0
      %2247 = vmatpush1.bf16.msra.mxu0 0
      %2248 = vmatprep.subr.bf16.mxu0 0
      %2249 = vmatpush1.bf16.msra.mxu0 0
      %2250 = vmatprep.mubr.bf16.mxu0 0
      %2251 = vmatmul.mubr.bf16.gmra.mrb[0].mxu0 %v2164
      %v2252 = vpop.f32.mrb[0].mxu0
      %v2253 = vadd.f32 %v2110, %v2252
      %v2254 = vpop.f32.mrb[0].mxu0
      %v2255 = vpop.f32.mrb[0].mxu0
      %v2256 = vadd.f32 %v2115, %v2255
      %v2257 = vpop.f32.mrb[0].mxu0
      %2258 = vdwg.mxu0
      %v2259 = vmax.f32 %v2210, 0.0
      %v2260 = vmax.f32 %v2212, 0.0
      %v2261 = vmax.f32 %v2253, 0.0
      %v2262 = vmax.f32 %v2214, 0.0
      %v2263 = vmax.f32 %v2216, 0.0
      %v2264 = vmax.f32 %v2256, 0.0
      %v2265 = vmul.f32 %v2259, %v1395
      %v2266 = vmul.f32 %v2260, %v1399
      %v2267 = vmul.f32 %v2261, %v1403
      %v2268 = vmul.f32 %v2262, %v1395
      %v2269 = vmul.f32 %v2263, %v1399
      %v2270 = vmul.f32 %v2264, %v1403
      %v2271 = vpack.c.bf16 %v2268, %v2265
      %v2272 = vpack.c.bf16 %v2269, %v2266
      %v2273 = vpack.c.bf16 %v2270, %v2267
      %2277 = vrot.lane.b32.xlu0 %v2271, 72
      %v2278 = vpop.permute.xlu0 %2277
      %2279 = vrot.lane.b32.xlu0 %v2272, 72
      %v2280 = vpop.permute.xlu0 %2279
      %2281 = vrot.lane.b32.xlu0 %v2273, 72
      %v2282 = vpop.permute.xlu0 %2281
      %v2283 = vsel %vm1427, %v2278, %v2280
      %v2284 = vsel %vm1427, %v2280, %v2282
      %2289 = vst.msk [vmem:[#allocation8] sm:$0xff] %vm376, %v2278
      %2290 = vst [vmem:[#allocation8 + $0x8] sm:$0xff] %v2283
      %2291 = vst [vmem:[#allocation8 + $0x10] sm:$0xff] %v2284
      %2292 = vst.msk [vmem:[#allocation8 + $0x18] sm:$0xff] %vm374, %v2282
      %v2293 = vld [vmem:[#allocation8] sm:$0xff]
      %v2294 = vld [vmem:[#allocation8 + $0x8] sm:$0xff]
      %v2295 = vld [vmem:[#allocation8 + $0x10] sm:$0xff]
      %v2296 = vld [vmem:[#allocation8 + $0x18] sm:$0xff]
      %2301 = vrot.lane.b32.xlu0 %v2293, 81
      %v2302 = vpop.permute.xlu0 %2301
      %2303 = vrot.lane.b32.xlu0 %v2294, 81
      %v2304 = vpop.permute.xlu0 %2303
      %2305 = vrot.lane.b32.xlu0 %v2295, 81
      %v2306 = vpop.permute.xlu0 %2305
      %2307 = vrot.lane.b32.xlu0 %v2296, 81
      %v2308 = vpop.permute.xlu0 %2307
      %v2309 = vsel %vm591, %v2302, %v2304
      %v2310 = vsel %vm591, %v2304, %v2306
      %v2311 = vsel %vm591, %v2306, %v2308
      %2315 = vst [vmem:[#allocation5] sm:$0xff] %v2309
      %2316 = vst [vmem:[#allocation5 + $0x8] sm:$0xff] %v2310
      %2317 = vst [vmem:[#allocation5 + $0x10] sm:$0xff] %v2311
      %v2318 = vld [vmem:[#allocation8] sm:$0xff]
      %v2319 = vld [vmem:[#allocation8 + $0x8] sm:$0xff]
      %v2320 = vld [vmem:[#allocation8 + $0x10] sm:$0xff]
      %v2321 = vld [vmem:[#allocation8 + $0x18] sm:$0xff]
      %2326 = vrot.lane.b32.xlu0 %v2318, 80
      %v2327 = vpop.permute.xlu0 %2326
      %2328 = vrot.lane.b32.xlu0 %v2319, 80
      %v2329 = vpop.permute.xlu0 %2328
      %2330 = vrot.lane.b32.xlu0 %v2320, 80
      %v2331 = vpop.permute.xlu0 %2330
      %2332 = vrot.lane.b32.xlu0 %v2321, 80
      %v2333 = vpop.permute.xlu0 %2332
      %v2334 = vsel %vm622, %v2327, %v2329
      %v2335 = vsel %vm622, %v2329, %v2331
      %v2336 = vsel %vm622, %v2331, %v2333
      %2340 = vst [vmem:[#allocation5 + $0x18] sm:$0xff] %v2334
      %2341 = vst [vmem:[#allocation5 + $0x20] sm:$0xff] %v2335
      %2342 = vst [vmem:[#allocation5 + $0x28] sm:$0xff] %v2336
      %v2343 = vld [vmem:[#allocation8] sm:$0xff]
      %v2344 = vld [vmem:[#allocation8 + $0x8] sm:$0xff]
      %v2345 = vld [vmem:[#allocation8 + $0x10] sm:$0xff]
      %v2346 = vld [vmem:[#allocation8 + $0x18] sm:$0xff]
      %2351 = vrot.lane.b32.xlu0 %v2343, 79
      %v2352 = vpop.permute.xlu0 %2351
      %2353 = vrot.lane.b32.xlu0 %v2344, 79
      %v2354 = vpop.permute.xlu0 %2353
      %2355 = vrot.lane.b32.xlu0 %v2345, 79
      %v2356 = vpop.permute.xlu0 %2355
      %2357 = vrot.lane.b32.xlu0 %v2346, 79
      %v2358 = vpop.permute.xlu0 %2357
      %v2359 = vsel %vm653, %v2352, %v2354
      %v2360 = vsel %vm653, %v2354, %v2356
      %v2361 = vsel %vm653, %v2356, %v2358
      %2365 = vst [vmem:[#allocation5 + $0x30] sm:$0xff] %v2359
      %2366 = vst [vmem:[#allocation5 + $0x38] sm:$0xff] %v2360
      %2367 = vst [vmem:[#allocation5 + $0x40] sm:$0xff] %v2361
      %v2368 = vld [vmem:[#allocation8] sm:$0xff]
      %v2369 = vld [vmem:[#allocation8 + $0x8] sm:$0xff]
      %v2370 = vld [vmem:[#allocation8 + $0x10] sm:$0xff]
      %v2371 = vld [vmem:[#allocation8 + $0x18] sm:$0xff]
      %2376 = vrot.lane.b32.xlu0 %v2368, 57
      %v2377 = vpop.permute.xlu0 %2376
      %2378 = vrot.lane.b32.xlu0 %v2369, 57
      %v2379 = vpop.permute.xlu0 %2378
      %2380 = vrot.lane.b32.xlu0 %v2370, 57
      %v2381 = vpop.permute.xlu0 %2380
      %2382 = vrot.lane.b32.xlu0 %v2371, 57
      %v2383 = vpop.permute.xlu0 %2382
      %v2384 = vsel %vm746, %v2377, %v2379
      %v2385 = vsel %vm746, %v2379, %v2381
      %v2386 = vsel %vm746, %v2381, %v2383
      %2390 = vst [vmem:[#allocation5 + $0x48] sm:$0xff] %v2384
      %2391 = vst [vmem:[#allocation5 + $0x50] sm:$0xff] %v2385
      %2392 = vst [vmem:[#allocation5 + $0x58] sm:$0xff] %v2386
      %v2393 = vld [vmem:[#allocation8] sm:$0xff]
      %v2394 = vld [vmem:[#allocation8 + $0x8] sm:$0xff]
      %v2395 = vld [vmem:[#allocation8 + $0x10] sm:$0xff]
      %v2396 = vld [vmem:[#allocation8 + $0x18] sm:$0xff]
      %2401 = vrot.lane.b32.xlu0 %v2393, 56
      %v2402 = vpop.permute.xlu0 %2401
      %2403 = vrot.lane.b32.xlu0 %v2394, 56
      %v2404 = vpop.permute.xlu0 %2403
      %2405 = vrot.lane.b32.xlu0 %v2395, 56
      %v2406 = vpop.permute.xlu0 %2405
      %2407 = vrot.lane.b32.xlu0 %v2396, 56
      %v2408 = vpop.permute.xlu0 %2407
      %v2409 = vsel %vm777, %v2402, %v2404
      %v2410 = vsel %vm777, %v2404, %v2406
      %v2411 = vsel %vm777, %v2406, %v2408
      %2415 = vst [vmem:[#allocation5 + $0x60] sm:$0xff] %v2409
      %2416 = vst [vmem:[#allocation5 + $0x68] sm:$0xff] %v2410
      %2417 = vst [vmem:[#allocation5 + $0x70] sm:$0xff] %v2411
      %v2418 = vld [vmem:[#allocation8] sm:$0xff]
      %v2419 = vld [vmem:[#allocation8 + $0x8] sm:$0xff]
      %v2420 = vld [vmem:[#allocation8 + $0x10] sm:$0xff]
      %v2421 = vld [vmem:[#allocation8 + $0x18] sm:$0xff]
      %2426 = vrot.lane.b32.xlu0 %v2418, 55
      %v2427 = vpop.permute.xlu0 %2426
      %2428 = vrot.lane.b32.xlu0 %v2419, 55
      %v2429 = vpop.permute.xlu0 %2428
      %2430 = vrot.lane.b32.xlu0 %v2420, 55
      %v2431 = vpop.permute.xlu0 %2430
      %2432 = vrot.lane.b32.xlu0 %v2421, 55
      %v2433 = vpop.permute.xlu0 %2432
      %v2434 = vsel %vm808, %v2427, %v2429
      %v2435 = vsel %vm808, %v2429, %v2431
      %v2436 = vsel %vm808, %v2431, %v2433
      %2440 = vst [vmem:[#allocation5 + $0x78] sm:$0xff] %v2434
      %2441 = vst [vmem:[#allocation5 + $0x80] sm:$0xff] %v2435
      %2442 = vst [vmem:[#allocation5 + $0x88] sm:$0xff] %v2436
      %v2443 = vld [vmem:[#allocation8] sm:$0xff]
      %v2444 = vld [vmem:[#allocation8 + $0x8] sm:$0xff]
      %v2445 = vld [vmem:[#allocation8 + $0x10] sm:$0xff]
      %v2446 = vld [vmem:[#allocation8 + $0x18] sm:$0xff]
      %2451 = vrot.lane.b32.xlu0 %v2443, 33
      %v2452 = vpop.permute.xlu0 %2451
      %2453 = vrot.lane.b32.xlu0 %v2444, 33
      %v2454 = vpop.permute.xlu0 %2453
      %2455 = vrot.lane.b32.xlu0 %v2445, 33
      %v2456 = vpop.permute.xlu0 %2455
      %2457 = vrot.lane.b32.xlu0 %v2446, 33
      %v2458 = vpop.permute.xlu0 %2457
      %v2459 = vsel %vm901, %v2452, %v2454
      %v2460 = vsel %vm901, %v2454, %v2456
      %v2461 = vsel %vm901, %v2456, %v2458
      %2465 = vst [vmem:[#allocation5 + $0x90] sm:$0xff] %v2459
      %2466 = vst [vmem:[#allocation5 + $0x98] sm:$0xff] %v2460
      %2467 = vst [vmem:[#allocation5 + $0xa0] sm:$0xff] %v2461
      %v2468 = vld [vmem:[#allocation8] sm:$0xff]
      %v2469 = vld [vmem:[#allocation8 + $0x8] sm:$0xff]
      %v2470 = vld [vmem:[#allocation8 + $0x10] sm:$0xff]
      %v2471 = vld [vmem:[#allocation8 + $0x18] sm:$0xff]
      %2476 = vrot.lane.b32.xlu0 %v2468, 32
      %v2477 = vpop.permute.xlu0 %2476
      %2478 = vrot.lane.b32.xlu0 %v2469, 32
      %v2479 = vpop.permute.xlu0 %2478
      %2480 = vrot.lane.b32.xlu0 %v2470, 32
      %v2481 = vpop.permute.xlu0 %2480
      %2482 = vrot.lane.b32.xlu0 %v2471, 32
      %v2483 = vpop.permute.xlu0 %2482
      %v2484 = vsel %vm932, %v2477, %v2479
      %v2485 = vsel %vm932, %v2479, %v2481
      %v2486 = vsel %vm932, %v2481, %v2483
      %2490 = vst [vmem:[#allocation5 + $0xa8] sm:$0xff] %v2484
      %2491 = vst [vmem:[#allocation5 + $0xb0] sm:$0xff] %v2485
      %2492 = vst [vmem:[#allocation5 + $0xb8] sm:$0xff] %v2486
      %v2493 = vld [vmem:[#allocation8] sm:$0xff]
      %v2494 = vld [vmem:[#allocation8 + $0x8] sm:$0xff]
      %v2495 = vld [vmem:[#allocation8 + $0x10] sm:$0xff]
      %v2496 = vld [vmem:[#allocation8 + $0x18] sm:$0xff]
      %2501 = vrot.lane.b32.xlu0 %v2493, 31
      %v2502 = vpop.permute.xlu0 %2501
      %2503 = vrot.lane.b32.xlu0 %v2494, 31
      %v2504 = vpop.permute.xlu0 %2503
      %2505 = vrot.lane.b32.xlu0 %v2495, 31
      %v2506 = vpop.permute.xlu0 %2505
      %2507 = vrot.lane.b32.xlu0 %v2496, 31
      %v2508 = vpop.permute.xlu0 %2507
      %v2509 = vsel %vm963, %v2502, %v2504
      %v2510 = vsel %vm963, %v2504, %v2506
      %v2511 = vsel %vm963, %v2506, %v2508
      %2515 = vst [vmem:[#allocation5 + $0xc0] sm:$0xff] %v2509
      %2516 = vst [vmem:[#allocation5 + $0xc8] sm:$0xff] %v2510
      %2517 = vst [vmem:[#allocation5 + $0xd0] sm:$0xff] %v2511
      %v2518 = vld [vmem:[%s7] sm:$0xff]
      %v2519 = vld [vmem:[%s7 + $0x8] sm:$0xff]
      %v2520 = vld [vmem:[#allocation5] sm:$0xff]
      %v2521 = vld [vmem:[#allocation5 + $0x8] sm:$0xff]
      %v2522 = vld [vmem:[#allocation5 + $0x10] sm:$0xff]
      %v2523 = vld [vmem:[#allocation5 + $0x18] sm:$0xff]
      %v2524 = vld [vmem:[#allocation5 + $0x20] sm:$0xff]
      %v2525 = vld [vmem:[#allocation5 + $0x28] sm:$0xff]
      %v2526 = vld [vmem:[#allocation5 + $0x30] sm:$0xff]
      %v2527 = vld [vmem:[#allocation5 + $0x38] sm:$0xff]
      %v2528 = vld [vmem:[#allocation5 + $0x40] sm:$0xff]
      %v2529 = vld [vmem:[#allocation5 + $0x48] sm:$0xff]
      %v2530 = vld [vmem:[#allocation5 + $0x50] sm:$0xff]
      %v2531 = vld [vmem:[#allocation5 + $0x58] sm:$0xff]
      %v2532 = vld [vmem:[#allocation5 + $0x60] sm:$0xff]
      %v2533 = vld [vmem:[#allocation5 + $0x68] sm:$0xff]
      %v2534 = vld [vmem:[#allocation5 + $0x70] sm:$0xff]
      %v2535 = vld [vmem:[#allocation5 + $0x78] sm:$0xff]
      %v2536 = vld [vmem:[#allocation5 + $0x80] sm:$0xff]
      %v2537 = vld [vmem:[#allocation5 + $0x88] sm:$0xff]
      %v2538 = vld [vmem:[#allocation5 + $0x90] sm:$0xff]
      %v2539 = vld [vmem:[#allocation5 + $0x98] sm:$0xff]
      %v2540 = vld [vmem:[#allocation5 + $0xa0] sm:$0xff]
      %v2541 = vld [vmem:[#allocation5 + $0xa8] sm:$0xff]
      %v2542 = vld [vmem:[#allocation5 + $0xb0] sm:$0xff]
      %v2543 = vld [vmem:[#allocation5 + $0xb8] sm:$0xff]
      %v2544 = vld [vmem:[#allocation5 + $0xc0] sm:$0xff]
      %v2545 = vld [vmem:[#allocation5 + $0xc8] sm:$0xff]
      %v2546 = vld [vmem:[#allocation5 + $0xd0] sm:$0xff]
      %v2547 = vld [vmem:[%s8] sm:$0xff]
      %v2548 = vld [vmem:[%s8 + $0x8] sm:$0xff]
      %2550 = vset.pattern.permute.xlu0 0
      %2551 = vperm.xlu0 %2550, %v2547
      %v2552 = vpop.permute.xlu0 %2551
      %2555 = vset.pattern.permute.xlu0 0
      %2556 = vperm.xlu0 %2555, %v2548
      %v2557 = vpop.permute.xlu0 %2556
      %v2561 = vunpack.c.l.b16 %v2518
      %v2562 = vunpack.c.h.b16 %v2518
      %v2563 = vunpack.c.l.b16 %v2519
      %v2564 = vunpack.c.h.b16 %v2519
      %v2565 = vpack.c.b16 %v2563, %v2561
      %v2566 = vpack.c.b16 %v2564, %v2562
      %v2569 = vsel %vm378, %v2566, 0
      %2571 = vmatprep.subr.bf16.mxu0 %v2521
      %2572 = vmatpush1.bf16.msra.mxu0 %v2520
      %2573 = vmatprep.subr.bf16.mxu0 %v2524
      %2574 = vmatpush1.bf16.msra.mxu0 %v2523
      %2575 = vmatprep.subr.bf16.mxu0 %v2527
      %2576 = vmatpush1.bf16.msra.mxu0 %v2526
      %2577 = vmatprep.subr.bf16.mxu0 %v2530
      %2578 = vmatpush1.bf16.msra.mxu0 %v2529
      %2579 = vmatprep.subr.bf16.mxu0 %v2533
      %2580 = vmatpush1.bf16.msra.mxu0 %v2532
      %2581 = vmatprep.subr.bf16.mxu0 %v2536
      %2582 = vmatpush1.bf16.msra.mxu0 %v2535
      %2583 = vmatprep.subr.bf16.mxu0 %v2539
      %2584 = vmatpush1.bf16.msra.mxu0 %v2538
      %2585 = vmatprep.subr.bf16.mxu0 %v2542
      %2586 = vmatpush1.bf16.msra.mxu0 %v2541
      %2587 = vmatprep.subr.bf16.mxu0 %v2545
      %2588 = vmatpush1.bf16.msra.mxu0 %v2544
      %2589 = vmatprep.subr.bf16.mxu0 0
      %2590 = vmatpush1.bf16.msra.mxu0 0
      %2591 = vmatprep.subr.bf16.mxu0 0
      %2592 = vmatpush1.bf16.msra.mxu0 0
      %2593 = vmatprep.subr.bf16.mxu0 0
      %2594 = vmatpush1.bf16.msra.mxu0 0
      %2595 = vmatprep.subr.bf16.mxu0 0
      %2596 = vmatpush1.bf16.msra.mxu0 0
      %2597 = vmatprep.subr.bf16.mxu0 0
      %2598 = vmatpush1.bf16.msra.mxu0 0
      %2599 = vmatprep.subr.bf16.mxu0 0
      %2600 = vmatpush1.bf16.msra.mxu0 0
      %2601 = vmatprep.subr.bf16.mxu0 0
      %2602 = vmatpush1.bf16.msra.mxu0 0
      %2603 = vmatprep.mubr.bf16.mxu0 %v2569
      %2604 = vmatmul.mubr.bf16.gmra.mrb[0].mxu0 %v2565
      %v2605 = vpop.f32.mrb[0].mxu0
      %v2606 = vadd.f32 %v2552, %v2605
      %v2607 = vpop.f32.mrb[0].mxu0
      %v2608 = vadd.f32 %v2552, %v2607
      %v2609 = vpop.f32.mrb[0].mxu0
      %v2610 = vadd.f32 %v2557, %v2609
      %v2611 = vpop.f32.mrb[0].mxu0
      %v2612 = vadd.f32 %v2557, %v2611
      %2613 = vdwg.mxu0
      %2614 = vmatprep.subr.bf16.mxu0 0
      %2615 = vmatpush1.bf16.msra.mxu0 %v2522
      %2616 = vmatprep.subr.bf16.mxu0 0
      %2617 = vmatpush1.bf16.msra.mxu0 %v2525
      %2618 = vmatprep.subr.bf16.mxu0 0
      %2619 = vmatpush1.bf16.msra.mxu0 %v2528
      %2620 = vmatprep.subr.bf16.mxu0 0
      %2621 = vmatpush1.bf16.msra.mxu0 %v2531
      %2622 = vmatprep.subr.bf16.mxu0 0
      %2623 = vmatpush1.bf16.msra.mxu0 %v2534
      %2624 = vmatprep.subr.bf16.mxu0 0
      %2625 = vmatpush1.bf16.msra.mxu0 %v2537
      %2626 = vmatprep.subr.bf16.mxu0 0
      %2627 = vmatpush1.bf16.msra.mxu0 %v2540
      %2628 = vmatprep.subr.bf16.mxu0 0
      %2629 = vmatpush1.bf16.msra.mxu0 %v2543
      %2630 = vmatprep.subr.bf16.mxu0 0
      %2631 = vmatpush1.bf16.msra.mxu0 %v2546
      %2632 = vmatprep.subr.bf16.mxu0 0
      %2633 = vmatpush1.bf16.msra.mxu0 0
      %2634 = vmatprep.subr.bf16.mxu0 0
      %2635 = vmatpush1.bf16.msra.mxu0 0
      %2636 = vmatprep.subr.bf16.mxu0 0
      %2637 = vmatpush1.bf16.msra.mxu0 0
      %2638 = vmatprep.subr.bf16.mxu0 0
      %2639 = vmatpush1.bf16.msra.mxu0 0
      %2640 = vmatprep.subr.bf16.mxu0 0
      %2641 = vmatpush1.bf16.msra.mxu0 0
      %2642 = vmatprep.subr.bf16.mxu0 0
      %2643 = vmatpush1.bf16.msra.mxu0 0
      %2644 = vmatprep.subr.bf16.mxu0 0
      %2645 = vmatpush1.bf16.msra.mxu0 0
      %2646 = vmatprep.mubr.bf16.mxu0 %v2569
      %2647 = vmatmul.mubr.bf16.gmra.mrb[0].mxu0 %v2565
      %v2648 = vpop.f32.mrb[0].mxu0
      %v2649 = vadd.f32 %v2552, %v2648
      %v2650 = vpop.f32.mrb[0].mxu0
      %v2651 = vpop.f32.mrb[0].mxu0
      %v2652 = vadd.f32 %v2557, %v2651
      %v2653 = vpop.f32.mrb[0].mxu0
      %2654 = vdwg.mxu0
      %v2655 = vmax.f32 %v2606, 0.0
      %v2656 = vmax.f32 %v2608, 0.0
      %v2657 = vmax.f32 %v2649, 0.0
      %v2658 = vmax.f32 %v2610, 0.0
      %v2659 = vmax.f32 %v2612, 0.0
      %v2660 = vmax.f32 %v2652, 0.0
      %2661 = vst [vmem:[%s359] sm:$0xff] %v2655
      %2662 = vst [vmem:[%s359 + $0x8] sm:$0xff] %v2656
      %2663 = vst [vmem:[%s359 + $0x10] sm:$0xff] %v2657
      %2664 = vst [vmem:[%s359 + $0x18] sm:$0xff] %v2658
      %2665 = vst [vmem:[%s359 + $0x20] sm:$0xff] %v2659
      %2666 = vst [vmem:[%s359 + $0x28] sm:$0xff] %v2660
      %p2667 = scmp.lt.s32.totalorder %s21, 1
      %s2668 = scalar_select %p2667, %s21, 1
      %s2669 = smul.addr %s2668, 6
      %s2670 = smul.addr %s2669, 8
      %s2671 = scalar_lea.vmem %s10, %s2670
      // Predicated region
      $region61: #{_lambda_.1} parent=59 // pred_check
        %p2672 = pneg %p254
      $region62: #{_lambda_.1} parent=59 // pred_check_branch
        %2674 = sbr.rel (%p2672) target = $region64
      $region63: #{_lambda_.1} parent=59 // pred_region
        _
      $region64: #{_lambda_.1} parent=59 // pred_fallthru
        _
    $region60: #{_lambda_.1} parent=5 // pred_fallthru
      _
    %p2675 = scmp.le.s32.totalorder 2, %s16
    // Predicated region
    $region65: #{_lambda_.1} parent=5 // pred_check
      %p2676 = pneg %p2675
    $region66: #{_lambda_.1} parent=5 // pred_check_branch
      %2678 = sbr.rel (%p2676) target = $region68
    $region67: #{_lambda_.1} parent=5 // pred_region
      %s2679 = ssub.s32 %s16, 2
      // Predicated region
      $region69: #{_lambda_.1} parent=67 // pred_check
        %p2680 = pneg %p260
      $region70: #{_lambda_.1} parent=67 // pred_check_branch
        %2682 = sbr.rel (%p2680) target = $region72
      $region71: #{_lambda_.1} parent=67 // pred_region
        %p2683 = scmp.lt.s32.totalorder %s22, 1
        %s2684 = scalar_select %p2683, %s22, 1
        %s2685 = smul.addr %s2684, 6
        %s2686 = smul.addr %s2685, 8
        %s2687 = scalar_lea.vmem %s10, %s2686
      $region72: #{_lambda_.1} parent=67 // pred_fallthru
        _
    $region68: #{_lambda_.1} parent=5 // pred_fallthru
      _
  $region6: #{_lambda_.1} parent=0 // loop_footer
    %s20 = sadd.s32 1, %s16
  $region7: #{_lambda_.1} parent=0 // loop_footer_branch
    %15 = sbr.rel target = $region3
  $region8: #{_lambda_.1} parent=0 // loop_exit
    _

</llo_original>
